<compile_context>
chip_gen: v7x
topology: tpu7x:2x2x1
jax: 0.10.0
libtpu: 0.0.40
codegen_flags: <defaults>
</compile_context>

<pallas_src>
import functools

import numpy as np

import jax
import jax.numpy as jnp
from jax import lax
from jax.experimental import pallas as pl
from jax.experimental.pallas import tpu as pltpu


def _round_up(x, m):
    return (x + m - 1) // m * m


# ---------------------------------------------------------------------------
# Fused Pallas kernel: [conv3x3(pad=1,no bias) + folded BN + ReLU] x 2
# ---------------------------------------------------------------------------
def _double_conv_kernel(x_ref, xh_ref, w1_ref, s1_ref, b1_ref,
                        w2_ref, s2_ref, b2_ref, mask_ref,
                        o_ref, xbuf_ref, ibuf_ref, *, th, wq):
    """One (batch, row-tile) grid step.

    x_ref:    (1, th*wq, Cin)      non-overlapping main rows, flattened, bf16
    xh_ref:   (1, 1, 4*wq, Cin)    4-row halo below the main block, bf16
    w1_ref:   (9, Cin, Cmid)       conv1 taps, bf16 (resident: constant index map)
    s1/b1:    (1, Cmid)            folded BN scale/bias, f32
    w2_ref:   (9, Cmid, Cout)      conv2 taps, bf16
    s2/b2:    (1, Cout)            folded BN scale/bias, f32
    mask_ref: (1, rows1, 1)        conv2 zero-padding mask on the intermediate, f32
    o_ref:    (1, 1, th*wq, Cout)  output, bf16
    xbuf_ref: ((th+4)*wq + 8, Cin) VMEM scratch: assembled input window
    ibuf_ref: (rows1 + 8, Cmid)    VMEM scratch: masked conv1 intermediate
    """
    cin = xbuf_ref.shape[-1]
    cmid = ibuf_ref.shape[-1]
    rows2 = th * wq                 # conv2 output positions (W valid cols + wrap)
    rows1 = (th + 2) * wq           # conv1 output positions (= conv2 input rows)

    # --- assemble the contiguous (th+4)-row input window: main + halo -----------
    xbuf_ref[0:rows2, :] = x_ref[0]
    xbuf_ref[rows2:rows2 + 4 * wq, :] = xh_ref[0, 0]
    xbuf_ref[rows2 + 4 * wq:rows2 + 4 * wq + 8, :] = jnp.zeros((8, cin),
                                                               xbuf_ref.dtype)

    # --- conv1: 9 taps as contiguous flat-row slices, register accumulation -----
    acc = None
    for kh in range(3):
        for kw in range(3):
            off = kh * wq + kw
            patch = xbuf_ref[off:off + rows1, :]                 # (rows1, Cin) bf16
            d = jnp.dot(patch, w1_ref[kh * 3 + kw],
                        preferred_element_type=jnp.float32)
            acc = d if acc is None else acc + d
    inter = jnp.maximum(acc * s1_ref[...] + b1_ref[...], 0.0)
    # mask realizes conv2's zero padding (left/right columns, top/bottom rows and
    # the H-alignment tail of the last row tile) on the conv1 output.
    inter = inter * mask_ref[0]
    ibuf_ref[0:rows1, :] = inter.astype(ibuf_ref.dtype)
    ibuf_ref[rows1:rows1 + 8, :] = jnp.zeros((8, cmid), ibuf_ref.dtype)

    # --- conv2: same flat-row tap trick on the VMEM-resident intermediate -------
    acc = None
    for kh in range(3):
        for kw in range(3):
            off = kh * wq + kw
            patch = ibuf_ref[off:off + rows2, :]                 # (rows2, Cmid) bf16
            d = jnp.dot(patch, w2_ref[kh * 3 + kw],
                        preferred_element_type=jnp.float32)
            acc = d if acc is None else acc + d
    y = jnp.maximum(acc * s2_ref[...] + b2_ref[...], 0.0)
    o_ref[0, 0] = y.astype(o_ref.dtype)


# ---------------------------------------------------------------------------
# VMEM sizing (generation aware)
# ---------------------------------------------------------------------------
def _vmem_capacity_bytes():
    try:
        return int(pltpu.get_tpu_info().vmem_capacity_bytes)
    except Exception:
        return 64 << 20            # conservative fallback: v7x per-TensorCore VMEM


def _pad_tile_bytes(r, c, itemsize):
    return _round_up(max(int(r), 1), 16) * _round_up(max(int(c), 1), 128) * itemsize


def _estimate_vmem(th, wq, cin, cmid, cout, out_bytes):
    rows1 = (th + 2) * wq
    rows2 = th * wq
    lbuf = (th + 4) * wq + 8
    est = 0
    est += 2 * _pad_tile_bytes(rows2, cin, 2)             # main block (double buf)
    est += 2 * _pad_tile_bytes(4 * wq, cin, 2)            # halo block
    est += 2 * 9 * _pad_tile_bytes(cin, cmid, 2)          # w1 (resident)
    est += 2 * 9 * _pad_tile_bytes(cmid, cout, 2)         # w2 (resident)
    est += 8 * _pad_tile_bytes(1, max(cmid, cout), 4)     # scales / biases
    est += 2 * _pad_tile_bytes(rows1, 1, 4)               # mask
    est += 2 * _pad_tile_bytes(rows2, cout, out_bytes)    # output block
    est += _pad_tile_bytes(lbuf, cin, 2)                  # xbuf scratch
    est += _pad_tile_bytes(rows1 + 8, cmid, 2)            # ibuf scratch
    # live accumulators + a couple of tap operands (spill headroom)
    est += _pad_tile_bytes(rows1, cmid, 4) + _pad_tile_bytes(rows2, cout, 4)
    est += 2 * _pad_tile_bytes(rows1, cin, 2) + 2 * _pad_tile_bytes(rows2, cmid, 2)
    return est


def _choose_row_tile(H, wq, cin, cmid, cout, out_bytes, budget):
    th = H
    if H >= 16:
        th = -(-H // 2)            # >=2 row tiles so both v7x cores get work at N=1
    while th > 1 and _estimate_vmem(th, wq, cin, cmid, cout, out_bytes) > budget:
        th = -(-th // 2)
    return max(th, 1)


# ---------------------------------------------------------------------------
# DoubleConv wrapper (NHWC in / NHWC out)
# ---------------------------------------------------------------------------
def double_conv3x3_bn_relu(x_nhwc, params, *, eps=1e-5, row_tile=None,
                           out_dtype=jnp.bfloat16, compute_dtype=jnp.bfloat16):
    N, H, W, cin = x_nhwc.shape
    cmid = params['w1'].shape[-1]
    cout = params['w2'].shape[-1]
    out_bytes = jnp.dtype(out_dtype).itemsize

    # ---- generation-aware VMEM sizing -------------------------------------------
    cap = _vmem_capacity_bytes()
    vmem_limit = max(32 << 20, min(cap - (12 << 20), 100 << 20))
    budget = vmem_limit - (8 << 20)

    # ---- row / flat-row tiling ---------------------------------------------------
    wq = _round_up(W + 4, 8)                 # flat conv-row width (sublane aligned)
    if row_tile is None:
        th = _choose_row_tile(H, wq, cin, cmid, cout, out_bytes, budget)
    else:
        th = max(1, min(int(row_tile), H))
    n_ht = -(-H // th)
    hp = n_ht * th
    rows1 = (th + 2) * wq
    rows2 = th * wq
    lbuf = (th + 4) * wq + 8

    est = _estimate_vmem(th, wq, cin, cmid, cout, out_bytes)
    if est + (8 << 20) > vmem_limit:
        vmem_limit = int(min(cap - (8 << 20), est + (8 << 20)))

    # ---- fold BN (inference) into per-channel scale / bias -----------------------
    s1 = (params['g1'] / jnp.sqrt(params['v1'] + eps)).astype(jnp.float32)
    b1 = (params['b1'] - params['m1'] * s1).astype(jnp.float32)
    s2 = (params['g2'] / jnp.sqrt(params['v2'] + eps)).astype(jnp.float32)
    b2 = (params['b2'] - params['m2'] * s2).astype(jnp.float32)
    s1 = s1.reshape(1, cmid)
    b1 = b1.reshape(1, cmid)
    s2 = s2.reshape(1, cout)
    b2 = b2.reshape(1, cout)

    # ---- weights: (3,3,ci,co) -> (9,ci,co) bf16 ----------------------------------
    w1p = params['w1'].astype(compute_dtype).reshape(9, cin, cmid)
    w2p = params['w2'].astype(compute_dtype).reshape(9, cmid, cout)

    # ---- input: zero pad by 2 in H and W (conv1 pad + conv2 halo), flatten -------
    xp = jnp.pad(x_nhwc.astype(compute_dtype),
                 ((0, 0), (2, hp + 2 - H), (2, wq - W - 2), (0, 0)))
    xp_flat = xp.reshape(N, (hp + 4) * wq, cin)
    # 4-row halo per row tile (tiny copy: ~4/th of the input)
    xh = jnp.stack(
        [xp_flat[:, (h + 1) * th * wq:((h + 1) * th + 4) * wq, :]
         for h in range(n_ht)], axis=1)

    # ---- mask realizing conv2's zero padding on the conv1 intermediate -----------
    jj = np.arange(th + 2)[None, :, None]
    cc = np.arange(wq)[None, None, :]
    hh = np.arange(n_ht)[:, None, None]
    gg = hh * th - 1 + jj
    m = ((gg >= 0) & (gg < H) & (cc >= 1) & (cc <= W)).astype(np.float32)
    mask = jnp.asarray(m.reshape(n_ht, rows1, 1))

    kernel = functools.partial(_double_conv_kernel, th=th, wq=wq)

    out = pl.pallas_call(
        kernel,
        out_shape=jax.ShapeDtypeStruct((N, n_ht, rows2, cout), out_dtype),
        grid_spec=pltpu.PrefetchScalarGridSpec(
            num_scalar_prefetch=0,
            grid=(N, n_ht),
            in_specs=[
                pl.BlockSpec((1, rows2, cin), lambda n, h: (n, h, 0)),
                pl.BlockSpec((1, 1, 4 * wq, cin), lambda n, h: (n, h, 0, 0)),
                pl.BlockSpec((9, cin, cmid), lambda n, h: (0, 0, 0)),
                pl.BlockSpec((1, cmid), lambda n, h: (0, 0)),
                pl.BlockSpec((1, cmid), lambda n, h: (0, 0)),
                pl.BlockSpec((9, cmid, cout), lambda n, h: (0, 0, 0)),
                pl.BlockSpec((1, cout), lambda n, h: (0, 0)),
                pl.BlockSpec((1, cout), lambda n, h: (0, 0)),
                pl.BlockSpec((1, rows1, 1), lambda n, h: (h, 0, 0)),
            ],
            out_specs=pl.BlockSpec((1, 1, rows2, cout), lambda n, h: (n, h, 0, 0)),
            scratch_shapes=[pltpu.VMEM((lbuf, cin), compute_dtype),
                            pltpu.VMEM((rows1 + 8, cmid), compute_dtype)],
        ),
        compiler_params=pltpu.CompilerParams(
            dimension_semantics=("parallel", "parallel"),
            vmem_limit_bytes=int(vmem_limit)),
    )(xp_flat, xh, w1p, s1, b1, w2p, s2, b2, mask)

    # (N, n_ht, th*wq, Cout) -> (N, hp, wq, Cout) -> valid NHWC region
    out = out.reshape(N, hp, wq, cout)[:, :H, :W, :]
    return out


# ---------------------------------------------------------------------------
# Up.forward (bilinear=True path)
# ---------------------------------------------------------------------------
def _bilinear_matrix(n_in, n_out):
    """Interpolation matrix of nn.Upsample(mode='bilinear', align_corners=True)."""
    if n_in == 1:
        return jnp.ones((n_out, 1), jnp.float32)
    pos = jnp.arange(n_out, dtype=jnp.float32) * (n_in - 1) / (n_out - 1)
    lo = jnp.floor(pos).astype(jnp.int32)
    hi = jnp.minimum(lo + 1, n_in - 1)
    frac = pos - lo.astype(jnp.float32)
    r = jnp.arange(n_out)
    m = jnp.zeros((n_out, n_in), jnp.float32)
    m = m.at[r, lo].add(1.0 - frac)
    m = m.at[r, hi].add(frac)
    return m


def upsample_bilinear_x2(x_nchw):
    N, C, H, W = x_nchw.shape
    ah = _bilinear_matrix(H, 2 * H)
    aw = _bilinear_matrix(W, 2 * W)
    return jnp.einsum('ih,jw,nchw->ncij', ah, aw, x_nchw)


def up_forward(x1, x2, params, *, eps=1e-5, row_tile=None):
    """Pallas Up.forward: bilinear upsample + pad + concat + fused DoubleConv."""
    x1u = upsample_bilinear_x2(x1)
    dy = x2.shape[2] - x1u.shape[2]
    dx = x2.shape[3] - x1u.shape[3]
    x1u = jnp.pad(x1u, ((0, 0), (0, 0),
                        (dy // 2, dy - dy // 2), (dx // 2, dx - dx // 2)))
    x = jnp.concatenate([x2, x1u], axis=1)                     # (N, Cin, H, W)
    x_nhwc = jnp.transpose(x, (0, 2, 3, 1))
    y = double_conv3x3_bn_relu(x_nhwc, params, eps=eps, row_tile=row_tile)
    return jnp.transpose(y, (0, 3, 1, 2)).astype(jnp.float32)  # back to NCHW f32


# ---------------------------------------------------------------------------
# Pure-JAX reference (lax conv) with matching bf16 casts, for correctness check
# ---------------------------------------------------------------------------
def _ref_conv_bn_relu(x_nchw, w_hwio, gamma, beta, mean, var, eps=1e-5):
    xb = x_nchw.astype(jnp.bfloat16).astype(jnp.float32)
    wb = w_hwio.astype(jnp.bfloat16).astype(jnp.float32)
    w_oihw = jnp.transpose(wb, (3, 2, 0, 1))
    y = lax.conv_general_dilated(xb, w_oihw, window_strides=(1, 1),
                                 padding=((1, 1), (1, 1)),
                                 dimension_numbers=("NCHW", "OIHW", "NCHW"))
    s = gamma / jnp.sqrt(var + eps)
    b = beta - mean * s
    return jnp.maximum(y * s.reshape(1, -1, 1, 1) + b.reshape(1, -1, 1, 1), 0.0)


def _ref_up_forward(x1, x2, params, eps=1e-5):
    x1u = upsample_bilinear_x2(x1)
    dy = x2.shape[2] - x1u.shape[2]
    dx = x2.shape[3] - x1u.shape[3]
    x1u = jnp.pad(x1u, ((0, 0), (0, 0),
                        (dy // 2, dy - dy // 2), (dx // 2, dx - dx // 2)))
    x = jnp.concatenate([x2, x1u], axis=1)
    h = _ref_conv_bn_relu(x, params['w1'], params['g1'], params['b1'],
                          params['m1'], params['v1'], eps)
    h = h.astype(jnp.bfloat16).astype(jnp.float32)   # match Pallas bf16 intermediate
    return _ref_conv_bn_relu(h, params['w2'], params['g2'], params['b2'],
                             params['m2'], params['v2'], eps)


if __name__ == "__main__":
    # Up(in_channels=8, out_channels=8, bilinear=True):
    #   x1: (2, 4, 8, 8) -> upsampled to 16x16; x2: (2, 4, 16, 16)
    #   concat -> 8 channels; DoubleConv(8 -> mid=4 -> 8).
    N = 2
    C1, C2 = 4, 4
    H1, W1 = 8, 8
    H2, W2 = 16, 16
    in_ch = C1 + C2
    mid_ch = in_ch // 2
    out_ch = 8

    key = jax.random.PRNGKey(0)
    ks = jax.random.split(key, 12)

    x1 = jax.random.normal(ks[0], (N, C1, H1, W1), dtype=jnp.float32)
    x2 = jax.random.normal(ks[1], (N, C2, H2, W2), dtype=jnp.float32)

    params = dict(
        w1=0.1 * jax.random.normal(ks[2], (3, 3, in_ch, mid_ch), jnp.float32),
        g1=1.0 + 0.1 * jax.random.normal(ks[3], (mid_ch,), jnp.float32),
        b1=0.1 * jax.random.normal(ks[4], (mid_ch,), jnp.float32),
        m1=0.1 * jax.random.normal(ks[5], (mid_ch,), jnp.float32),
        v1=jnp.abs(1.0 + 0.1 * jax.random.normal(ks[6], (mid_ch,), jnp.float32)),
        w2=0.1 * jax.random.normal(ks[7], (3, 3, mid_ch, out_ch), jnp.float32),
        g2=1.0 + 0.1 * jax.random.normal(ks[8], (out_ch,), jnp.float32),
        b2=0.1 * jax.random.normal(ks[9], (out_ch,), jnp.float32),
        m2=0.1 * jax.random.normal(ks[10], (out_ch,), jnp.float32),
        v2=jnp.abs(1.0 + 0.1 * jax.random.normal(ks[11], (out_ch,), jnp.float32)),
    )

    ref = _ref_up_forward(x1, x2, params)

    # auto tiling (2 row tiles), uneven H tiling (tail masking), single tile
    for rt in (None, 6, 16):
        out = jax.block_until_ready(up_forward(x1, x2, params, row_tile=rt))
        assert out.shape == (N, out_ch, H2, W2), out.shape
        err = float(jnp.max(jnp.abs(out - ref)))
        assert jnp.allclose(out, ref, atol=2e-2, rtol=2e-2), \
            f"row_tile={rt}: mismatch vs reference, max err {err}"

    print("KERNEL_OK")
</pallas_src>

<mosaic_0001>
module attributes {stable_mosaic.version = 11 : i64} {
  func.func @_double_conv_kernel(%arg0: i32, %arg1: i32, %arg2: memref<1x192x8xbf16, #tpu.memory_space<vmem>>, %arg3: memref<1x1x96x8xbf16, #tpu.memory_space<vmem>>, %arg4: memref<9x8x4xbf16, #tpu.memory_space<vmem>>, %arg5: memref<1x4xf32, #tpu.memory_space<vmem>>, %arg6: memref<1x4xf32, #tpu.memory_space<vmem>>, %arg7: memref<9x4x8xbf16, #tpu.memory_space<vmem>>, %arg8: memref<1x8xf32, #tpu.memory_space<vmem>>, %arg9: memref<1x8xf32, #tpu.memory_space<vmem>>, %arg10: memref<1x240x1xf32, #tpu.memory_space<vmem>>, %arg11: memref<1x1x192x8xbf16, #tpu.memory_space<vmem>>, %arg12: memref<296x8xbf16, #tpu.memory_space<vmem>>, %arg13: memref<248x4xbf16, #tpu.memory_space<vmem>>) attributes {dimension_semantics = [#tpu.dimension_semantics<parallel>, #tpu.dimension_semantics<parallel>], iteration_bounds = array<i64: 2, 2>, scalar_prefetch = 0 : i64, scratch_operands = 2 : i64, tpu.core_type = #tpu.core_type<tc>, window_params = [{transform_indices = @transform_0, window_bounds = array<i64: 1, 192, 8>}, {transform_indices = @transform_1, window_bounds = array<i64: 1, 1, 96, 8>}, {pipeline_mode = #tpu.pipeline_mode<synchronous>, transform_indices = @transform_2, window_bounds = array<i64: 9, 8, 4>}, {pipeline_mode = #tpu.pipeline_mode<synchronous>, transform_indices = @transform_3, window_bounds = array<i64: 1, 4>}, {pipeline_mode = #tpu.pipeline_mode<synchronous>, transform_indices = @transform_4, window_bounds = array<i64: 1, 4>}, {pipeline_mode = #tpu.pipeline_mode<synchronous>, transform_indices = @transform_5, window_bounds = array<i64: 9, 4, 8>}, {pipeline_mode = #tpu.pipeline_mode<synchronous>, transform_indices = @transform_6, window_bounds = array<i64: 1, 8>}, {pipeline_mode = #tpu.pipeline_mode<synchronous>, transform_indices = @transform_7, window_bounds = array<i64: 1, 8>}, {transform_indices = @transform_8, window_bounds = array<i64: 1, 240, 1>}, {transform_indices = @transform_9, window_bounds = array<i64: 1, 1, 192, 8>}]} {
    %c0 = arith.constant 0 : index
    %c0_0 = arith.constant 0 : index
    %c0_1 = arith.constant 0 : index
    %0 = vector.load %arg2[%c0, %c0_0, %c0_1] : memref<1x192x8xbf16, #tpu.memory_space<vmem>>, vector<1x192x8xbf16>
    %1 = vector.shape_cast %0 : vector<1x192x8xbf16> to vector<192x8xbf16>
    %c0_2 = arith.constant 0 : index
    %c0_3 = arith.constant 0 : index
    %2 = vector.load %arg12[%c0_2, %c0_3] : memref<296x8xbf16, #tpu.memory_space<vmem>>, vector<192x8xbf16>
    tpu.vector_store %arg12[%c0_2, %c0_3], %1 {strides = array<i32>} : memref<296x8xbf16, #tpu.memory_space<vmem>>, vector<192x8xbf16>,
    %c0_4 = arith.constant 0 : index
    %c0_5 = arith.constant 0 : index
    %c0_6 = arith.constant 0 : index
    %c0_7 = arith.constant 0 : index
    %3 = vector.load %arg3[%c0_4, %c0_5, %c0_6, %c0_7] : memref<1x1x96x8xbf16, #tpu.memory_space<vmem>>, vector<1x1x96x8xbf16>
    %4 = vector.shape_cast %3 : vector<1x1x96x8xbf16> to vector<96x8xbf16>
    %c192 = arith.constant 192 : index
    %c0_8 = arith.constant 0 : index
    %5 = vector.load %arg12[%c192, %c0_8] : memref<296x8xbf16, #tpu.memory_space<vmem>>, vector<96x8xbf16>
    tpu.vector_store %arg12[%c192, %c0_8], %4 {strides = array<i32>} : memref<296x8xbf16, #tpu.memory_space<vmem>>, vector<96x8xbf16>,
    %cst = arith.constant 0.000000e+00 : bf16
    %6 = vector.broadcast %cst : bf16 to vector<8x8xbf16>
    %c288 = arith.constant 288 : index
    %c0_9 = arith.constant 0 : index
    %7 = vector.load %arg12[%c288, %c0_9] : memref<296x8xbf16, #tpu.memory_space<vmem>>, vector<8x8xbf16>
    tpu.vector_store %arg12[%c288, %c0_9], %6 {strides = array<i32>} : memref<296x8xbf16, #tpu.memory_space<vmem>>, vector<8x8xbf16>,
    %c0_10 = arith.constant 0 : index
    %c0_11 = arith.constant 0 : index
    %8 = vector.load %arg12[%c0_10, %c0_11] : memref<296x8xbf16, #tpu.memory_space<vmem>>, vector<240x8xbf16>
    %c0_12 = arith.constant 0 : index
    %c0_13 = arith.constant 0 : index
    %c0_14 = arith.constant 0 : index
    %9 = vector.load %arg4[%c0_12, %c0_13, %c0_14] : memref<9x8x4xbf16, #tpu.memory_space<vmem>>, vector<1x8x4xbf16>
    %10 = vector.shape_cast %9 : vector<1x8x4xbf16> to vector<8x4xbf16>
    %cst_15 = arith.constant dense<0.000000e+00> : vector<240x4xf32>
    %11 = tpu.matmul %8, %10, %cst_15 {dimension_numbers = #tpu.dot_dimension_numbers<[1], [0], [0], [1], [0, 0, 1, 1], [], []>} : vector<240x8xbf16>, vector<8x4xbf16>, vector<240x4xf32> -> vector<240x4xf32>
    %c1 = arith.constant 1 : index
    %c0_16 = arith.constant 0 : index
    %12 = vector.load %arg12[%c1, %c0_16] : memref<296x8xbf16, #tpu.memory_space<vmem>>, vector<240x8xbf16>
    %c1_17 = arith.constant 1 : index
    %c0_18 = arith.constant 0 : index
    %c0_19 = arith.constant 0 : index
    %13 = vector.load %arg4[%c1_17, %c0_18, %c0_19] : memref<9x8x4xbf16, #tpu.memory_space<vmem>>, vector<1x8x4xbf16>
    %14 = vector.shape_cast %13 : vector<1x8x4xbf16> to vector<8x4xbf16>
    %cst_20 = arith.constant dense<0.000000e+00> : vector<240x4xf32>
    %15 = tpu.matmul %12, %14, %cst_20 {dimension_numbers = #tpu.dot_dimension_numbers<[1], [0], [0], [1], [0, 0, 1, 1], [], []>} : vector<240x8xbf16>, vector<8x4xbf16>, vector<240x4xf32> -> vector<240x4xf32>
    %16 = arith.addf %11, %15 : vector<240x4xf32>
    %c2 = arith.constant 2 : index
    %c0_21 = arith.constant 0 : index
    %17 = vector.load %arg12[%c2, %c0_21] : memref<296x8xbf16, #tpu.memory_space<vmem>>, vector<240x8xbf16>
    %c2_22 = arith.constant 2 : index
    %c0_23 = arith.constant 0 : index
    %c0_24 = arith.constant 0 : index
    %18 = vector.load %arg4[%c2_22, %c0_23, %c0_24] : memref<9x8x4xbf16, #tpu.memory_space<vmem>>, vector<1x8x4xbf16>
    %19 = vector.shape_cast %18 : vector<1x8x4xbf16> to vector<8x4xbf16>
    %cst_25 = arith.constant dense<0.000000e+00> : vector<240x4xf32>
    %20 = tpu.matmul %17, %19, %cst_25 {dimension_numbers = #tpu.dot_dimension_numbers<[1], [0], [0], [1], [0, 0, 1, 1], [], []>} : vector<240x8xbf16>, vector<8x4xbf16>, vector<240x4xf32> -> vector<240x4xf32>
    %21 = arith.addf %16, %20 : vector<240x4xf32>
    %c24 = arith.constant 24 : index
    %c0_26 = arith.constant 0 : index
    %22 = vector.load %arg12[%c24, %c0_26] : memref<296x8xbf16, #tpu.memory_space<vmem>>, vector<240x8xbf16>
    %c3 = arith.constant 3 : index
    %c0_27 = arith.constant 0 : index
    %c0_28 = arith.constant 0 : index
    %23 = vector.load %arg4[%c3, %c0_27, %c0_28] : memref<9x8x4xbf16, #tpu.memory_space<vmem>>, vector<1x8x4xbf16>
    %24 = vector.shape_cast %23 : vector<1x8x4xbf16> to vector<8x4xbf16>
    %cst_29 = arith.constant dense<0.000000e+00> : vector<240x4xf32>
    %25 = tpu.matmul %22, %24, %cst_29 {dimension_numbers = #tpu.dot_dimension_numbers<[1], [0], [0], [1], [0, 0, 1, 1], [], []>} : vector<240x8xbf16>, vector<8x4xbf16>, vector<240x4xf32> -> vector<240x4xf32>
    %26 = arith.addf %21, %25 : vector<240x4xf32>
    %c25 = arith.constant 25 : index
    %c0_30 = arith.constant 0 : index
    %27 = vector.load %arg12[%c25, %c0_30] : memref<296x8xbf16, #tpu.memory_space<vmem>>, vector<240x8xbf16>
    %c4 = arith.constant 4 : index
    %c0_31 = arith.constant 0 : index
    %c0_32 = arith.constant 0 : index
    %28 = vector.load %arg4[%c4, %c0_31, %c0_32] : memref<9x8x4xbf16, #tpu.memory_space<vmem>>, vector<1x8x4xbf16>
    %29 = vector.shape_cast %28 : vector<1x8x4xbf16> to vector<8x4xbf16>
    %cst_33 = arith.constant dense<0.000000e+00> : vector<240x4xf32>
    %30 = tpu.matmul %27, %29, %cst_33 {dimension_numbers = #tpu.dot_dimension_numbers<[1], [0], [0], [1], [0, 0, 1, 1], [], []>} : vector<240x8xbf16>, vector<8x4xbf16>, vector<240x4xf32> -> vector<240x4xf32>
    %31 = arith.addf %26, %30 : vector<240x4xf32>
    %c26 = arith.constant 26 : index
    %c0_34 = arith.constant 0 : index
    %32 = vector.load %arg12[%c26, %c0_34] : memref<296x8xbf16, #tpu.memory_space<vmem>>, vector<240x8xbf16>
    %c5 = arith.constant 5 : index
    %c0_35 = arith.constant 0 : index
    %c0_36 = arith.constant 0 : index
    %33 = vector.load %arg4[%c5, %c0_35, %c0_36] : memref<9x8x4xbf16, #tpu.memory_space<vmem>>, vector<1x8x4xbf16>
    %34 = vector.shape_cast %33 : vector<1x8x4xbf16> to vector<8x4xbf16>
    %cst_37 = arith.constant dense<0.000000e+00> : vector<240x4xf32>
    %35 = tpu.matmul %32, %34, %cst_37 {dimension_numbers = #tpu.dot_dimension_numbers<[1], [0], [0], [1], [0, 0, 1, 1], [], []>} : vector<240x8xbf16>, vector<8x4xbf16>, vector<240x4xf32> -> vector<240x4xf32>
    %36 = arith.addf %31, %35 : vector<240x4xf32>
    %c48 = arith.constant 48 : index
    %c0_38 = arith.constant 0 : index
    %37 = vector.load %arg12[%c48, %c0_38] : memref<296x8xbf16, #tpu.memory_space<vmem>>, vector<240x8xbf16>
    %c6 = arith.constant 6 : index
    %c0_39 = arith.constant 0 : index
    %c0_40 = arith.constant 0 : index
    %38 = vector.load %arg4[%c6, %c0_39, %c0_40] : memref<9x8x4xbf16, #tpu.memory_space<vmem>>, vector<1x8x4xbf16>
    %39 = vector.shape_cast %38 : vector<1x8x4xbf16> to vector<8x4xbf16>
    %cst_41 = arith.constant dense<0.000000e+00> : vector<240x4xf32>
    %40 = tpu.matmul %37, %39, %cst_41 {dimension_numbers = #tpu.dot_dimension_numbers<[1], [0], [0], [1], [0, 0, 1, 1], [], []>} : vector<240x8xbf16>, vector<8x4xbf16>, vector<240x4xf32> -> vector<240x4xf32>
    %41 = arith.addf %36, %40 : vector<240x4xf32>
    %c49 = arith.constant 49 : index
    %c0_42 = arith.constant 0 : index
    %42 = vector.load %arg12[%c49, %c0_42] : memref<296x8xbf16, #tpu.memory_space<vmem>>, vector<240x8xbf16>
    %c7 = arith.constant 7 : index
    %c0_43 = arith.constant 0 : index
    %c0_44 = arith.constant 0 : index
    %43 = vector.load %arg4[%c7, %c0_43, %c0_44] : memref<9x8x4xbf16, #tpu.memory_space<vmem>>, vector<1x8x4xbf16>
    %44 = vector.shape_cast %43 : vector<1x8x4xbf16> to vector<8x4xbf16>
    %cst_45 = arith.constant dense<0.000000e+00> : vector<240x4xf32>
    %45 = tpu.matmul %42, %44, %cst_45 {dimension_numbers = #tpu.dot_dimension_numbers<[1], [0], [0], [1], [0, 0, 1, 1], [], []>} : vector<240x8xbf16>, vector<8x4xbf16>, vector<240x4xf32> -> vector<240x4xf32>
    %46 = arith.addf %41, %45 : vector<240x4xf32>
    %c50 = arith.constant 50 : index
    %c0_46 = arith.constant 0 : index
    %47 = vector.load %arg12[%c50, %c0_46] : memref<296x8xbf16, #tpu.memory_space<vmem>>, vector<240x8xbf16>
    %c8 = arith.constant 8 : index
    %c0_47 = arith.constant 0 : index
    %c0_48 = arith.constant 0 : index
    %48 = vector.load %arg4[%c8, %c0_47, %c0_48] : memref<9x8x4xbf16, #tpu.memory_space<vmem>>, vector<1x8x4xbf16>
    %49 = vector.shape_cast %48 : vector<1x8x4xbf16> to vector<8x4xbf16>
    %cst_49 = arith.constant dense<0.000000e+00> : vector<240x4xf32>
    %50 = tpu.matmul %47, %49, %cst_49 {dimension_numbers = #tpu.dot_dimension_numbers<[1], [0], [0], [1], [0, 0, 1, 1], [], []>} : vector<240x8xbf16>, vector<8x4xbf16>, vector<240x4xf32> -> vector<240x4xf32>
    %51 = arith.addf %46, %50 : vector<240x4xf32>
    %c0_50 = arith.constant 0 : index
    %c0_51 = arith.constant 0 : index
    %52 = vector.load %arg5[%c0_50, %c0_51] : memref<1x4xf32, #tpu.memory_space<vmem>>, vector<1x4xf32>
    %53 = vector.broadcast %52 : vector<1x4xf32> to vector<240x4xf32>
    %54 = arith.mulf %51, %53 : vector<240x4xf32>
    %c0_52 = arith.constant 0 : index
    %c0_53 = arith.constant 0 : index
    %55 = vector.load %arg6[%c0_52, %c0_53] : memref<1x4xf32, #tpu.memory_space<vmem>>, vector<1x4xf32>
    %56 = vector.broadcast %55 : vector<1x4xf32> to vector<240x4xf32>
    %57 = arith.addf %54, %56 : vector<240x4xf32>
    %cst_54 = arith.constant 0.000000e+00 : f32
    %58 = vector.broadcast %cst_54 : f32 to vector<240x4xf32>
    %59 = arith.maximumf %57, %58 : vector<240x4xf32>
    %c0_55 = arith.constant 0 : index
    %c0_56 = arith.constant 0 : index
    %c0_57 = arith.constant 0 : index
    %60 = vector.load %arg10[%c0_55, %c0_56, %c0_57] : memref<1x240x1xf32, #tpu.memory_space<vmem>>, vector<1x240x1xf32>
    %61 = vector.shape_cast %60 : vector<1x240x1xf32> to vector<240x1xf32>
    %62 = vector.broadcast %61 : vector<240x1xf32> to vector<240x4xf32>
    %63 = arith.mulf %59, %62 : vector<240x4xf32>
    %64 = arith.truncf %63 : vector<240x4xf32> to vector<240x4xbf16>
    %c0_58 = arith.constant 0 : index
    %c0_59 = arith.constant 0 : index
    %65 = vector.load %arg13[%c0_58, %c0_59] : memref<248x4xbf16, #tpu.memory_space<vmem>>, vector<240x4xbf16>
    tpu.vector_store %arg13[%c0_58, %c0_59], %64 {strides = array<i32>} : memref<248x4xbf16, #tpu.memory_space<vmem>>, vector<240x4xbf16>,
    %cst_60 = arith.constant 0.000000e+00 : bf16
    %66 = vector.broadcast %cst_60 : bf16 to vector<8x4xbf16>
    %c240 = arith.constant 240 : index
    %c0_61 = arith.constant 0 : index
    %67 = vector.load %arg13[%c240, %c0_61] : memref<248x4xbf16, #tpu.memory_space<vmem>>, vector<8x4xbf16>
    tpu.vector_store %arg13[%c240, %c0_61], %66 {strides = array<i32>} : memref<248x4xbf16, #tpu.memory_space<vmem>>, vector<8x4xbf16>,
    %c0_62 = arith.constant 0 : index
    %c0_63 = arith.constant 0 : index
    %68 = vector.load %arg13[%c0_62, %c0_63] : memref<248x4xbf16, #tpu.memory_space<vmem>>, vector<192x4xbf16>
    %c0_64 = arith.constant 0 : index
    %c0_65 = arith.constant 0 : index
    %c0_66 = arith.constant 0 : index
    %69 = vector.load %arg7[%c0_64, %c0_65, %c0_66] : memref<9x4x8xbf16, #tpu.memory_space<vmem>>, vector<1x4x8xbf16>
    %70 = vector.shape_cast %69 : vector<1x4x8xbf16> to vector<4x8xbf16>
    %cst_67 = arith.constant dense<0.000000e+00> : vector<192x8xf32>
    %71 = tpu.matmul %68, %70, %cst_67 {dimension_numbers = #tpu.dot_dimension_numbers<[1], [0], [0], [1], [0, 0, 1, 1], [], []>} : vector<192x4xbf16>, vector<4x8xbf16>, vector<192x8xf32> -> vector<192x8xf32>
    %c1_68 = arith.constant 1 : index
    %c0_69 = arith.constant 0 : index
    %72 = vector.load %arg13[%c1_68, %c0_69] : memref<248x4xbf16, #tpu.memory_space<vmem>>, vector<192x4xbf16>
    %c1_70 = arith.constant 1 : index
    %c0_71 = arith.constant 0 : index
    %c0_72 = arith.constant 0 : index
    %73 = vector.load %arg7[%c1_70, %c0_71, %c0_72] : memref<9x4x8xbf16, #tpu.memory_space<vmem>>, vector<1x4x8xbf16>
    %74 = vector.shape_cast %73 : vector<1x4x8xbf16> to vector<4x8xbf16>
    %cst_73 = arith.constant dense<0.000000e+00> : vector<192x8xf32>
    %75 = tpu.matmul %72, %74, %cst_73 {dimension_numbers = #tpu.dot_dimension_numbers<[1], [0], [0], [1], [0, 0, 1, 1], [], []>} : vector<192x4xbf16>, vector<4x8xbf16>, vector<192x8xf32> -> vector<192x8xf32>
    %76 = arith.addf %71, %75 : vector<192x8xf32>
    %c2_74 = arith.constant 2 : index
    %c0_75 = arith.constant 0 : index
    %77 = vector.load %arg13[%c2_74, %c0_75] : memref<248x4xbf16, #tpu.memory_space<vmem>>, vector<192x4xbf16>
    %c2_76 = arith.constant 2 : index
    %c0_77 = arith.constant 0 : index
    %c0_78 = arith.constant 0 : index
    %78 = vector.load %arg7[%c2_76, %c0_77, %c0_78] : memref<9x4x8xbf16, #tpu.memory_space<vmem>>, vector<1x4x8xbf16>
    %79 = vector.shape_cast %78 : vector<1x4x8xbf16> to vector<4x8xbf16>
    %cst_79 = arith.constant dense<0.000000e+00> : vector<192x8xf32>
    %80 = tpu.matmul %77, %79, %cst_79 {dimension_numbers = #tpu.dot_dimension_numbers<[1], [0], [0], [1], [0, 0, 1, 1], [], []>} : vector<192x4xbf16>, vector<4x8xbf16>, vector<192x8xf32> -> vector<192x8xf32>
    %81 = arith.addf %76, %80 : vector<192x8xf32>
    %c24_80 = arith.constant 24 : index
    %c0_81 = arith.constant 0 : index
    %82 = vector.load %arg13[%c24_80, %c0_81] : memref<248x4xbf16, #tpu.memory_space<vmem>>, vector<192x4xbf16>
    %c3_82 = arith.constant 3 : index
    %c0_83 = arith.constant 0 : index
    %c0_84 = arith.constant 0 : index
    %83 = vector.load %arg7[%c3_82, %c0_83, %c0_84] : memref<9x4x8xbf16, #tpu.memory_space<vmem>>, vector<1x4x8xbf16>
    %84 = vector.shape_cast %83 : vector<1x4x8xbf16> to vector<4x8xbf16>
    %cst_85 = arith.constant dense<0.000000e+00> : vector<192x8xf32>
    %85 = tpu.matmul %82, %84, %cst_85 {dimension_numbers = #tpu.dot_dimension_numbers<[1], [0], [0], [1], [0, 0, 1, 1], [], []>} : vector<192x4xbf16>, vector<4x8xbf16>, vector<192x8xf32> -> vector<192x8xf32>
    %86 = arith.addf %81, %85 : vector<192x8xf32>
    %c25_86 = arith.constant 25 : index
    %c0_87 = arith.constant 0 : index
    %87 = vector.load %arg13[%c25_86, %c0_87] : memref<248x4xbf16, #tpu.memory_space<vmem>>, vector<192x4xbf16>
    %c4_88 = arith.constant 4 : index
    %c0_89 = arith.constant 0 : index
    %c0_90 = arith.constant 0 : index
    %88 = vector.load %arg7[%c4_88, %c0_89, %c0_90] : memref<9x4x8xbf16, #tpu.memory_space<vmem>>, vector<1x4x8xbf16>
    %89 = vector.shape_cast %88 : vector<1x4x8xbf16> to vector<4x8xbf16>
    %cst_91 = arith.constant dense<0.000000e+00> : vector<192x8xf32>
    %90 = tpu.matmul %87, %89, %cst_91 {dimension_numbers = #tpu.dot_dimension_numbers<[1], [0], [0], [1], [0, 0, 1, 1], [], []>} : vector<192x4xbf16>, vector<4x8xbf16>, vector<192x8xf32> -> vector<192x8xf32>
    %91 = arith.addf %86, %90 : vector<192x8xf32>
    %c26_92 = arith.constant 26 : index
    %c0_93 = arith.constant 0 : index
    %92 = vector.load %arg13[%c26_92, %c0_93] : memref<248x4xbf16, #tpu.memory_space<vmem>>, vector<192x4xbf16>
    %c5_94 = arith.constant 5 : index
    %c0_95 = arith.constant 0 : index
    %c0_96 = arith.constant 0 : index
    %93 = vector.load %arg7[%c5_94, %c0_95, %c0_96] : memref<9x4x8xbf16, #tpu.memory_space<vmem>>, vector<1x4x8xbf16>
    %94 = vector.shape_cast %93 : vector<1x4x8xbf16> to vector<4x8xbf16>
    %cst_97 = arith.constant dense<0.000000e+00> : vector<192x8xf32>
    %95 = tpu.matmul %92, %94, %cst_97 {dimension_numbers = #tpu.dot_dimension_numbers<[1], [0], [0], [1], [0, 0, 1, 1], [], []>} : vector<192x4xbf16>, vector<4x8xbf16>, vector<192x8xf32> -> vector<192x8xf32>
    %96 = arith.addf %91, %95 : vector<192x8xf32>
    %c48_98 = arith.constant 48 : index
    %c0_99 = arith.constant 0 : index
    %97 = vector.load %arg13[%c48_98, %c0_99] : memref<248x4xbf16, #tpu.memory_space<vmem>>, vector<192x4xbf16>
    %c6_100 = arith.constant 6 : index
    %c0_101 = arith.constant 0 : index
    %c0_102 = arith.constant 0 : index
    %98 = vector.load %arg7[%c6_100, %c0_101, %c0_102] : memref<9x4x8xbf16, #tpu.memory_space<vmem>>, vector<1x4x8xbf16>
    %99 = vector.shape_cast %98 : vector<1x4x8xbf16> to vector<4x8xbf16>
    %cst_103 = arith.constant dense<0.000000e+00> : vector<192x8xf32>
    %100 = tpu.matmul %97, %99, %cst_103 {dimension_numbers = #tpu.dot_dimension_numbers<[1], [0], [0], [1], [0, 0, 1, 1], [], []>} : vector<192x4xbf16>, vector<4x8xbf16>, vector<192x8xf32> -> vector<192x8xf32>
    %101 = arith.addf %96, %100 : vector<192x8xf32>
    %c49_104 = arith.constant 49 : index
    %c0_105 = arith.constant 0 : index
    %102 = vector.load %arg13[%c49_104, %c0_105] : memref<248x4xbf16, #tpu.memory_space<vmem>>, vector<192x4xbf16>
    %c7_106 = arith.constant 7 : index
    %c0_107 = arith.constant 0 : index
    %c0_108 = arith.constant 0 : index
    %103 = vector.load %arg7[%c7_106, %c0_107, %c0_108] : memref<9x4x8xbf16, #tpu.memory_space<vmem>>, vector<1x4x8xbf16>
    %104 = vector.shape_cast %103 : vector<1x4x8xbf16> to vector<4x8xbf16>
    %cst_109 = arith.constant dense<0.000000e+00> : vector<192x8xf32>
    %105 = tpu.matmul %102, %104, %cst_109 {dimension_numbers = #tpu.dot_dimension_numbers<[1], [0], [0], [1], [0, 0, 1, 1], [], []>} : vector<192x4xbf16>, vector<4x8xbf16>, vector<192x8xf32> -> vector<192x8xf32>
    %106 = arith.addf %101, %105 : vector<192x8xf32>
    %c50_110 = arith.constant 50 : index
    %c0_111 = arith.constant 0 : index
    %107 = vector.load %arg13[%c50_110, %c0_111] : memref<248x4xbf16, #tpu.memory_space<vmem>>, vector<192x4xbf16>
    %c8_112 = arith.constant 8 : index
    %c0_113 = arith.constant 0 : index
    %c0_114 = arith.constant 0 : index
    %108 = vector.load %arg7[%c8_112, %c0_113, %c0_114] : memref<9x4x8xbf16, #tpu.memory_space<vmem>>, vector<1x4x8xbf16>
    %109 = vector.shape_cast %108 : vector<1x4x8xbf16> to vector<4x8xbf16>
    %cst_115 = arith.constant dense<0.000000e+00> : vector<192x8xf32>
    %110 = tpu.matmul %107, %109, %cst_115 {dimension_numbers = #tpu.dot_dimension_numbers<[1], [0], [0], [1], [0, 0, 1, 1], [], []>} : vector<192x4xbf16>, vector<4x8xbf16>, vector<192x8xf32> -> vector<192x8xf32>
    %111 = arith.addf %106, %110 : vector<192x8xf32>
    %c0_116 = arith.constant 0 : index
    %c0_117 = arith.constant 0 : index
    %112 = vector.load %arg8[%c0_116, %c0_117] : memref<1x8xf32, #tpu.memory_space<vmem>>, vector<1x8xf32>
    %113 = vector.broadcast %112 : vector<1x8xf32> to vector<192x8xf32>
    %114 = arith.mulf %111, %113 : vector<192x8xf32>
    %c0_118 = arith.constant 0 : index
    %c0_119 = arith.constant 0 : index
    %115 = vector.load %arg9[%c0_118, %c0_119] : memref<1x8xf32, #tpu.memory_space<vmem>>, vector<1x8xf32>
    %116 = vector.broadcast %115 : vector<1x8xf32> to vector<192x8xf32>
    %117 = arith.addf %114, %116 : vector<192x8xf32>
    %cst_120 = arith.constant 0.000000e+00 : f32
    %118 = vector.broadcast %cst_120 : f32 to vector<192x8xf32>
    %119 = arith.maximumf %117, %118 : vector<192x8xf32>
    %120 = arith.truncf %119 : vector<192x8xf32> to vector<192x8xbf16>
    %c0_121 = arith.constant 0 : index
    %c0_122 = arith.constant 0 : index
    %c0_123 = arith.constant 0 : index
    %c0_124 = arith.constant 0 : index
    %121 = vector.load %arg11[%c0_121, %c0_122, %c0_123, %c0_124] : memref<1x1x192x8xbf16, #tpu.memory_space<vmem>>, vector<1x1x192x8xbf16>
    %122 = vector.shape_cast %121 : vector<1x1x192x8xbf16> to vector<192x8xbf16>
    %123 = vector.shape_cast %120 : vector<192x8xbf16> to vector<1x1x192x8xbf16>
    tpu.vector_store %arg11[%c0_121, %c0_122, %c0_123, %c0_124], %123 {strides = array<i32>} : memref<1x1x192x8xbf16, #tpu.memory_space<vmem>>, vector<1x1x192x8xbf16>,
    return
  }
  func.func @transform_0(%arg0: i32, %arg1: i32) -> (i32, i32, i32) {
    %c0_i32 = arith.constant 0 : i32
    %c0_i32_0 = arith.constant 0 : i32
    return %arg0, %arg1, %c0_i32 : i32, i32, i32
  }
  func.func @transform_1(%arg0: i32, %arg1: i32) -> (i32, i32, i32, i32) {
    %c0_i32 = arith.constant 0 : i32
    %c0_i32_0 = arith.constant 0 : i32
    %c0_i32_1 = arith.constant 0 : i32
    return %arg0, %arg1, %c0_i32, %c0_i32_0 : i32, i32, i32, i32
  }
  func.func @transform_2(%arg0: i32, %arg1: i32) -> (i32, i32, i32) {
    %c0_i32 = arith.constant 0 : i32
    %c0_i32_0 = arith.constant 0 : i32
    %c0_i32_1 = arith.constant 0 : i32
    %c0_i32_2 = arith.constant 0 : i32
    return %c0_i32, %c0_i32_0, %c0_i32_1 : i32, i32, i32
  }
  func.func @transform_3(%arg0: i32, %arg1: i32) -> (i32, i32) {
    %c0_i32 = arith.constant 0 : i32
    %c0_i32_0 = arith.constant 0 : i32
    %c0_i32_1 = arith.constant 0 : i32
    return %c0_i32, %c0_i32_0 : i32, i32
  }
  func.func @transform_4(%arg0: i32, %arg1: i32) -> (i32, i32) {
    %c0_i32 = arith.constant 0 : i32
    %c0_i32_0 = arith.constant 0 : i32
    %c0_i32_1 = arith.constant 0 : i32
    return %c0_i32, %c0_i32_0 : i32, i32
  }
  func.func @transform_5(%arg0: i32, %arg1: i32) -> (i32, i32, i32) {
    %c0_i32 = arith.constant 0 : i32
    %c0_i32_0 = arith.constant 0 : i32
    %c0_i32_1 = arith.constant 0 : i32
    %c0_i32_2 = arith.constant 0 : i32
    return %c0_i32, %c0_i32_0, %c0_i32_1 : i32, i32, i32
  }
  func.func @transform_6(%arg0: i32, %arg1: i32) -> (i32, i32) {
    %c0_i32 = arith.constant 0 : i32
    %c0_i32_0 = arith.constant 0 : i32
    %c0_i32_1 = arith.constant 0 : i32
    return %c0_i32, %c0_i32_0 : i32, i32
  }
  func.func @transform_7(%arg0: i32, %arg1: i32) -> (i32, i32) {
    %c0_i32 = arith.constant 0 : i32
    %c0_i32_0 = arith.constant 0 : i32
    %c0_i32_1 = arith.constant 0 : i32
    return %c0_i32, %c0_i32_0 : i32, i32
  }
  func.func @transform_8(%arg0: i32, %arg1: i32) -> (i32, i32, i32) {
    %c0_i32 = arith.constant 0 : i32
    %c0_i32_0 = arith.constant 0 : i32
    %c0_i32_1 = arith.constant 0 : i32
    return %arg1, %c0_i32, %c0_i32_0 : i32, i32, i32
  }
  func.func @transform_9(%arg0: i32, %arg1: i32) -> (i32, i32, i32, i32) {
    %c0_i32 = arith.constant 0 : i32
    %c0_i32_0 = arith.constant 0 : i32
    %c0_i32_1 = arith.constant 0 : i32
    return %arg0, %arg1, %c0_i32, %c0_i32_0 : i32, i32, i32, i32
  }
}

</mosaic_0001>

<llo_original>
// kernel: tpu_custom_call.1
$region0: #{tpu_custom_call.1}
  #allocation0 [shape = 'u32[]', space=smem, size = 0x4, offset = 0x4, fixed_abs, tag = 'smem constant byte address 0x4 - core index']
  #allocation1 [shape = 'u32[144,128]{1,0:T(1,128)}', space=vmem, size = 0x12000, scoped, tag = 'internal scratch']
  #allocation2 [shape = 'bf16[296,8]{1,0:T(8,128)(2,1)}', space=vmem, size = 0x12800, scoped, tag = 'scratch operand']
  #allocation3 [shape = 'bf16[248,4]{1,0:T(8,128)(2,1)}', space=vmem, size = 0xf800, scoped, tag = 'scratch operand']
  %s0 = inlined_call_operand.vmem [shape: bf16[2,480,8], index: 0, kind: input, shape index: {}]
  %s1 = inlined_call_operand.vmem [shape: bf16[2,2,96,8], index: 1, kind: input, shape index: {}]
  %s2 = inlined_call_operand.vmem [shape: bf16[9,8,4], index: 2, kind: input, shape index: {}]
  %s3 = inlined_call_operand.vmem [shape: f32[1,4], index: 3, kind: input, shape index: {}]
  %s4 = inlined_call_operand.vmem [shape: f32[1,4], index: 4, kind: input, shape index: {}]
  %s5 = inlined_call_operand.vmem [shape: bf16[9,4,8], index: 5, kind: input, shape index: {}]
  %s6 = inlined_call_operand.vmem [shape: f32[1,8], index: 6, kind: input, shape index: {}]
  %s7 = inlined_call_operand.vmem [shape: f32[1,8], index: 7, kind: input, shape index: {}]
  %s8 = inlined_call_operand.vmem [shape: f32[2,240,1], index: 8, kind: input, shape index: {}]
  %s9 = inlined_call_operand.vmem [shape: bf16[2,2,192,8], index: 9, kind: output, shape index: {}]
  %s10 = sld [smem:[#allocation0]]
  $region69: #{tpu_custom_call.1} parent=0
    _
  %s12 = ssub.s32 1, %s10
  %s13 = scalar_select 0, %s12, %s10
  loop: start=0, step=1, limit=6
  $region2: #{tpu_custom_call.1} parent=0 // loop_pre_header
    _
  $region3: #{tpu_custom_call.1} parent=0 // loop_header
    %s15 = sphi 0, %s19
    %p16 = scmp.ge.s32.totalorder %s15, 6
    %s22 = sphi 0, %s34
    %s23 = sphi 0, %s30
    %s24 = sphi 0, %s22
    %s25 = sphi 0, %s23
    %s26 = sphi 0, %s24
    %s27 = sphi 0, %s25
    %s39 = sphi 0, %s41
    %s42 = sphi 0, %s39
    %s43 = sphi 0, %s42
    %s59 = sphi 0, %s43
    %s67 = sphi 0, %s69
    %s70 = sphi 0, %s67
    %s71 = sphi 0, %s70
    %s87 = sphi 0, %s71
    %s91 = sphi 0, %s91
    %s93 = sphi 0, %s91
    %s94 = sphi 0, %s93
    %s108 = sphi 0, %s94
    %s112 = sphi 0, %s112
    %s114 = sphi 0, %s112
    %s115 = sphi 0, %s114
    %s129 = sphi 0, %s115
    %s133 = sphi 0, %s133
    %s135 = sphi 0, %s133
    %s136 = sphi 0, %s135
    %s150 = sphi 0, %s136
    %s154 = sphi 0, %s154
    %s156 = sphi 0, %s154
    %s157 = sphi 0, %s156
    %s171 = sphi 0, %s157
    %s175 = sphi 0, %s175
    %s177 = sphi 0, %s175
    %s178 = sphi 0, %s177
    %s192 = sphi 0, %s178
    %s196 = sphi 0, %s196
    %s198 = sphi 0, %s196
    %s199 = sphi 0, %s198
    %s213 = sphi 0, %s199
    %s219 = sphi 0, %s221
    %s222 = sphi 0, %s219
    %s223 = sphi 0, %s222
    %s239 = sphi 0, %s223
    %s247 = sphi 0, %s249
    %s250 = sphi 0, %s247
    %s251 = sphi 0, %s250
    %s267 = sphi 0, %s251
  $region4: #{tpu_custom_call.1} parent=0 // loop_header_branch
    %18 = sbr.rel (%p16) target = $region8
  $region5: #{tpu_custom_call.1} parent=0 // loop_body
    %s20 = ssub.s32 %s15, 1
    %s21 = ssub.s32 %s15, 2
    %s28 = sadd.s32 1, %s23
    %p29 = scmp.ge.s32.totalorder %s28, 2
    %s30 = scalar_select %p29, 0, %s28
    %s31 = sadd.s32 1, %s22
    %s32 = scalar_select %p29, %s31, %s22
    %p33 = scmp.ge.s32.totalorder %s32, 2
    %s34 = scalar_select %p33, 0, %s32
    %s35 = ssub.s32 %s22, %s34
    %s36 = ssub.s32 %s23, %s30
    %s37 = sor.u32 %s35, %s36
    %p38 = scmp.eq.s32.totalorder %s37, 0
    %s40 = sadd.s32 %s39, 1
    %s41 = scalar_select %p38, %s39, %s40
    %p44 = pneg %p38
    %p45 = scmp.eq.s32.totalorder %s15, 3
    %p46 = por %p44, %p45
    %p47 = scmp.ne.s32.totalorder %s39, %s42
    %p48 = scmp.eq.s32.totalorder %s15, 0
    %p49 = por %p47, %p48
    %p50 = scmp.ne.s32.totalorder %s39, %s42
    %p51 = scmp.eq.s32.totalorder %s20, 3
    %p52 = por %p50, %p51
    %p53 = scmp.ne.s32.totalorder %s42, %s43
    %p54 = scmp.eq.s32.totalorder %s20, 0
    %p55 = por %p53, %p54
    %p56 = scmp.ne.s32.totalorder %s42, %s43
    %p57 = scmp.eq.s32.totalorder %s21, 3
    %p58 = por %p56, %p57
    %p60 = scmp.ne.s32.totalorder %s43, %s59
    %p61 = scmp.eq.s32.totalorder %s21, 0
    %p62 = por %p60, %p61
    %s63 = ssub.s32 %s22, %s34
    %s64 = ssub.s32 %s23, %s30
    %s65 = sor.u32 %s63, %s64
    %p66 = scmp.eq.s32.totalorder %s65, 0
    %s68 = sadd.s32 %s67, 1
    %s69 = scalar_select %p66, %s67, %s68
    %p72 = pneg %p66
    %p73 = scmp.eq.s32.totalorder %s15, 3
    %p74 = por %p72, %p73
    %p75 = scmp.ne.s32.totalorder %s67, %s70
    %p76 = scmp.eq.s32.totalorder %s15, 0
    %p77 = por %p75, %p76
    %p78 = scmp.ne.s32.totalorder %s67, %s70
    %p79 = scmp.eq.s32.totalorder %s20, 3
    %p80 = por %p78, %p79
    %p81 = scmp.ne.s32.totalorder %s70, %s71
    %p82 = scmp.eq.s32.totalorder %s20, 0
    %p83 = por %p81, %p82
    %p84 = scmp.ne.s32.totalorder %s70, %s71
    %p85 = scmp.eq.s32.totalorder %s21, 3
    %p86 = por %p84, %p85
    %p88 = scmp.ne.s32.totalorder %s71, %s87
    %p89 = scmp.eq.s32.totalorder %s21, 0
    %p90 = por %p88, %p89
    %s92 = sadd.s32 %s91, 1
    %p95 = scmp.eq.s32.totalorder %s15, 3
    %p96 = scmp.ne.s32.totalorder %s91, %s93
    %p97 = scmp.eq.s32.totalorder %s15, 0
    %p98 = por %p96, %p97
    %p99 = scmp.ne.s32.totalorder %s91, %s93
    %p100 = scmp.eq.s32.totalorder %s20, 3
    %p101 = por %p99, %p100
    %p102 = scmp.ne.s32.totalorder %s93, %s94
    %p103 = scmp.eq.s32.totalorder %s20, 0
    %p104 = por %p102, %p103
    %p105 = scmp.ne.s32.totalorder %s93, %s94
    %p106 = scmp.eq.s32.totalorder %s21, 3
    %p107 = por %p105, %p106
    %p109 = scmp.ne.s32.totalorder %s94, %s108
    %p110 = scmp.eq.s32.totalorder %s21, 0
    %p111 = por %p109, %p110
    %s113 = sadd.s32 %s112, 1
    %p116 = scmp.eq.s32.totalorder %s15, 3
    %p117 = scmp.ne.s32.totalorder %s112, %s114
    %p118 = scmp.eq.s32.totalorder %s15, 0
    %p119 = por %p117, %p118
    %p120 = scmp.ne.s32.totalorder %s112, %s114
    %p121 = scmp.eq.s32.totalorder %s20, 3
    %p122 = por %p120, %p121
    %p123 = scmp.ne.s32.totalorder %s114, %s115
    %p124 = scmp.eq.s32.totalorder %s20, 0
    %p125 = por %p123, %p124
    %p126 = scmp.ne.s32.totalorder %s114, %s115
    %p127 = scmp.eq.s32.totalorder %s21, 3
    %p128 = por %p126, %p127
    %p130 = scmp.ne.s32.totalorder %s115, %s129
    %p131 = scmp.eq.s32.totalorder %s21, 0
    %p132 = por %p130, %p131
    %s134 = sadd.s32 %s133, 1
    %p137 = scmp.eq.s32.totalorder %s15, 3
    %p138 = scmp.ne.s32.totalorder %s133, %s135
    %p139 = scmp.eq.s32.totalorder %s15, 0
    %p140 = por %p138, %p139
    %p141 = scmp.ne.s32.totalorder %s133, %s135
    %p142 = scmp.eq.s32.totalorder %s20, 3
    %p143 = por %p141, %p142
    %p144 = scmp.ne.s32.totalorder %s135, %s136
    %p145 = scmp.eq.s32.totalorder %s20, 0
    %p146 = por %p144, %p145
    %p147 = scmp.ne.s32.totalorder %s135, %s136
    %p148 = scmp.eq.s32.totalorder %s21, 3
    %p149 = por %p147, %p148
    %p151 = scmp.ne.s32.totalorder %s136, %s150
    %p152 = scmp.eq.s32.totalorder %s21, 0
    %p153 = por %p151, %p152
    %s155 = sadd.s32 %s154, 1
    %p158 = scmp.eq.s32.totalorder %s15, 3
    %p159 = scmp.ne.s32.totalorder %s154, %s156
    %p160 = scmp.eq.s32.totalorder %s15, 0
    %p161 = por %p159, %p160
    %p162 = scmp.ne.s32.totalorder %s154, %s156
    %p163 = scmp.eq.s32.totalorder %s20, 3
    %p164 = por %p162, %p163
    %p165 = scmp.ne.s32.totalorder %s156, %s157
    %p166 = scmp.eq.s32.totalorder %s20, 0
    %p167 = por %p165, %p166
    %p168 = scmp.ne.s32.totalorder %s156, %s157
    %p169 = scmp.eq.s32.totalorder %s21, 3
    %p170 = por %p168, %p169
    %p172 = scmp.ne.s32.totalorder %s157, %s171
    %p173 = scmp.eq.s32.totalorder %s21, 0
    %p174 = por %p172, %p173
    %s176 = sadd.s32 %s175, 1
    %p179 = scmp.eq.s32.totalorder %s15, 3
    %p180 = scmp.ne.s32.totalorder %s175, %s177
    %p181 = scmp.eq.s32.totalorder %s15, 0
    %p182 = por %p180, %p181
    %p183 = scmp.ne.s32.totalorder %s175, %s177
    %p184 = scmp.eq.s32.totalorder %s20, 3
    %p185 = por %p183, %p184
    %p186 = scmp.ne.s32.totalorder %s177, %s178
    %p187 = scmp.eq.s32.totalorder %s20, 0
    %p188 = por %p186, %p187
    %p189 = scmp.ne.s32.totalorder %s177, %s178
    %p190 = scmp.eq.s32.totalorder %s21, 3
    %p191 = por %p189, %p190
    %p193 = scmp.ne.s32.totalorder %s178, %s192
    %p194 = scmp.eq.s32.totalorder %s21, 0
    %p195 = por %p193, %p194
    %s197 = sadd.s32 %s196, 1
    %p200 = scmp.eq.s32.totalorder %s15, 3
    %p201 = scmp.ne.s32.totalorder %s196, %s198
    %p202 = scmp.eq.s32.totalorder %s15, 0
    %p203 = por %p201, %p202
    %p204 = scmp.ne.s32.totalorder %s196, %s198
    %p205 = scmp.eq.s32.totalorder %s20, 3
    %p206 = por %p204, %p205
    %p207 = scmp.ne.s32.totalorder %s198, %s199
    %p208 = scmp.eq.s32.totalorder %s20, 0
    %p209 = por %p207, %p208
    %p210 = scmp.ne.s32.totalorder %s198, %s199
    %p211 = scmp.eq.s32.totalorder %s21, 3
    %p212 = por %p210, %p211
    %p214 = scmp.ne.s32.totalorder %s199, %s213
    %p215 = scmp.eq.s32.totalorder %s21, 0
    %p216 = por %p214, %p215
    %s217 = ssub.s32 %s23, %s30
    %p218 = scmp.eq.s32.totalorder %s217, 0
    %s220 = sadd.s32 %s219, 1
    %s221 = scalar_select %p218, %s219, %s220
    %p224 = pneg %p218
    %p225 = scmp.eq.s32.totalorder %s15, 3
    %p226 = por %p224, %p225
    %p227 = scmp.ne.s32.totalorder %s219, %s222
    %p228 = scmp.eq.s32.totalorder %s15, 0
    %p229 = por %p227, %p228
    %p230 = scmp.ne.s32.totalorder %s219, %s222
    %p231 = scmp.eq.s32.totalorder %s20, 3
    %p232 = por %p230, %p231
    %p233 = scmp.ne.s32.totalorder %s222, %s223
    %p234 = scmp.eq.s32.totalorder %s20, 0
    %p235 = por %p233, %p234
    %p236 = scmp.ne.s32.totalorder %s222, %s223
    %p237 = scmp.eq.s32.totalorder %s21, 3
    %p238 = por %p236, %p237
    %p240 = scmp.ne.s32.totalorder %s223, %s239
    %p241 = scmp.eq.s32.totalorder %s21, 0
    %p242 = por %p240, %p241
    %s243 = ssub.s32 %s22, %s34
    %s244 = ssub.s32 %s23, %s30
    %s245 = sor.u32 %s243, %s244
    %p246 = scmp.eq.s32.totalorder %s245, 0
    %s248 = sadd.s32 %s247, 1
    %s249 = scalar_select %p246, %s247, %s248
    %p252 = pneg %p246
    %p253 = scmp.eq.s32.totalorder %s15, 3
    %p254 = por %p252, %p253
    %p255 = scmp.ne.s32.totalorder %s247, %s250
    %p256 = scmp.eq.s32.totalorder %s15, 0
    %p257 = por %p255, %p256
    %p258 = scmp.ne.s32.totalorder %s247, %s250
    %p259 = scmp.eq.s32.totalorder %s20, 3
    %p260 = por %p258, %p259
    %p261 = scmp.ne.s32.totalorder %s250, %s251
    %p262 = scmp.eq.s32.totalorder %s20, 0
    %p263 = por %p261, %p262
    %p264 = scmp.ne.s32.totalorder %s250, %s251
    %p265 = scmp.eq.s32.totalorder %s21, 3
    %p266 = por %p264, %p265
    %p268 = scmp.ne.s32.totalorder %s251, %s267
    %p269 = scmp.eq.s32.totalorder %s21, 0
    %p270 = por %p268, %p269
    %p271 = scmp.le.s32.totalorder 1, %s15
    %p272 = scmp.lt.s32.totalorder %s15, 5
    %p273 = pnand %p271, %p272
    %p274 = pneg %p273
    // Predicated region
    $region9: #{tpu_custom_call.1} parent=5 // pred_check
      _
    $region10: #{tpu_custom_call.1} parent=5 // pred_check_branch
      %276 = sbr.rel (%p273) target = $region12
    $region11: #{tpu_custom_call.1} parent=5 // pred_region
      %s277 = ssub.s32 %s15, 1
      // Predicated region
      $region13: #{tpu_custom_call.1} parent=11 // pred_check
        %p278 = pneg %p104
      $region14: #{tpu_custom_call.1} parent=11 // pred_check_branch
        %280 = sbr.rel (%p278) target = $region16
      $region15: #{tpu_custom_call.1} parent=11 // pred_region
        _
      $region16: #{tpu_custom_call.1} parent=11 // pred_fallthru
        _
      // Predicated region
      $region17: #{tpu_custom_call.1} parent=11 // pred_check
        %p281 = pneg %p125
      $region18: #{tpu_custom_call.1} parent=11 // pred_check_branch
        %283 = sbr.rel (%p281) target = $region20
      $region19: #{tpu_custom_call.1} parent=11 // pred_region
        _
      $region20: #{tpu_custom_call.1} parent=11 // pred_fallthru
        _
      // Predicated region
      $region21: #{tpu_custom_call.1} parent=11 // pred_check
        %p284 = pneg %p146
      $region22: #{tpu_custom_call.1} parent=11 // pred_check_branch
        %286 = sbr.rel (%p284) target = $region24
      $region23: #{tpu_custom_call.1} parent=11 // pred_region
        _
      $region24: #{tpu_custom_call.1} parent=11 // pred_fallthru
        _
      // Predicated region
      $region25: #{tpu_custom_call.1} parent=11 // pred_check
        %p287 = pneg %p167
      $region26: #{tpu_custom_call.1} parent=11 // pred_check_branch
        %289 = sbr.rel (%p287) target = $region28
      $region27: #{tpu_custom_call.1} parent=11 // pred_region
        _
      $region28: #{tpu_custom_call.1} parent=11 // pred_fallthru
        _
      // Predicated region
      $region29: #{tpu_custom_call.1} parent=11 // pred_check
        %p290 = pneg %p188
      $region30: #{tpu_custom_call.1} parent=11 // pred_check_branch
        %292 = sbr.rel (%p290) target = $region32
      $region31: #{tpu_custom_call.1} parent=11 // pred_region
        _
      $region32: #{tpu_custom_call.1} parent=11 // pred_fallthru
        _
      // Predicated region
      $region33: #{tpu_custom_call.1} parent=11 // pred_check
        %p293 = pneg %p209
      $region34: #{tpu_custom_call.1} parent=11 // pred_check_branch
        %295 = sbr.rel (%p293) target = $region36
      $region35: #{tpu_custom_call.1} parent=11 // pred_region
        _
      $region36: #{tpu_custom_call.1} parent=11 // pred_fallthru
        _
    $region12: #{tpu_custom_call.1} parent=5 // pred_fallthru
      _
    %p296 = scmp.lt.s32.totalorder %s15, 4
    // Predicated region
    $region37: #{tpu_custom_call.1} parent=5 // pred_check
      %p297 = pneg %p296
    $region38: #{tpu_custom_call.1} parent=5 // pred_check_branch
      %299 = sbr.rel (%p297) target = $region40
    $region39: #{tpu_custom_call.1} parent=5 // pred_region
      // Predicated region
      $region41: #{tpu_custom_call.1} parent=39 // pred_check
        %p300 = pneg %p49
      $region42: #{tpu_custom_call.1} parent=39 // pred_check_branch
        %302 = sbr.rel (%p300) target = $region44
      $region43: #{tpu_custom_call.1} parent=39 // pred_region
        %s303 = smul.u32 24, %s23
        %s304 = ssub.s32 60, %s303
        %p305 = scmp.lt.s32.totalorder %s304, 24
        %s306 = scalar_select %p305, %s304, 24
        %s307 = smul.u32 64, %s306
        %p308 = scmp.lt.s32.totalorder %s22, 1
        %s309 = scalar_select %p308, %s22, 1
        %p310 = scmp.lt.s32.totalorder %s303, 59
        %s311 = scalar_select %p310, %s303, 59
        %s312 = smul.addr %s309, 60
        %s313 = sadd.s32 %s311, %s312
        %s314 = smul.addr %s313, 4
        %s315 = scalar_lea.vmem %s0, %s314
        %s316 = smul.u32 24, %s23
        %s317 = ssub.s32 60, %s316
        %p318 = scmp.lt.s32.totalorder %s317, 24
        %s319 = scalar_select %p318, %s317, 24
        %s320 = smul.u32 64, %s319
      $region44: #{tpu_custom_call.1} parent=39 // pred_fallthru
        _
      // Predicated region
      $region45: #{tpu_custom_call.1} parent=39 // pred_check
        %p321 = pneg %p77
      $region46: #{tpu_custom_call.1} parent=39 // pred_check_branch
        %323 = sbr.rel (%p321) target = $region48
      $region47: #{tpu_custom_call.1} parent=39 // pred_region
        %p324 = scmp.lt.s32.totalorder %s22, 1
        %s325 = scalar_select %p324, %s22, 1
        %p326 = scmp.lt.s32.totalorder %s23, 1
        %s327 = scalar_select %p326, %s23, 1
        %s328 = smul.addr %s327, 12
        %s329 = smul.addr %s325, 24
        %s330 = sadd.s32 %s328, %s329
        %s331 = smul.addr %s330, 4
        %s332 = scalar_lea.vmem %s1, %s331
      $region48: #{tpu_custom_call.1} parent=39 // pred_fallthru
        _
      // Predicated region
      $region49: #{tpu_custom_call.1} parent=39 // pred_check
        %p333 = pneg %p229
      $region50: #{tpu_custom_call.1} parent=39 // pred_check_branch
        %335 = sbr.rel (%p333) target = $region52
      $region51: #{tpu_custom_call.1} parent=39 // pred_region
        %p336 = scmp.lt.s32.totalorder %s23, 1
        %s337 = scalar_select %p336, %s23, 1
        %s338 = smul.addr %s337, 30
        %s339 = smul.addr %s338, 8
        %s340 = scalar_lea.vmem %s8, %s339
      $region52: #{tpu_custom_call.1} parent=39 // pred_fallthru
        _
    $region40: #{tpu_custom_call.1} parent=5 // pred_fallthru
      _
    %p341 = scmp.le.s32.totalorder 1, %s15
    %p342 = scmp.lt.s32.totalorder %s15, 5
    %p343 = pnand %p341, %p342
    %p344 = pneg %p343
    // Predicated region
    $region53: #{tpu_custom_call.1} parent=5 // pred_check
      _
    $region54: #{tpu_custom_call.1} parent=5 // pred_check_branch
      %346 = sbr.rel (%p343) target = $region56
    $region55: #{tpu_custom_call.1} parent=5 // pred_region
      %s347 = ssub.s32 %s15, 1
      %s348 = smul.u32 24, %s25
      %s349 = ssub.s32 60, %s348
      %p350 = scmp.lt.s32.totalorder %s349, 24
      %s351 = scalar_select %p350, %s349, 24
      %s352 = smul.u32 64, %s351
      %p353 = scmp.lt.s32.totalorder %s24, 1
      %s354 = scalar_select %p353, %s24, 1
      %p355 = scmp.lt.s32.totalorder %s348, 59
      %s356 = scalar_select %p355, %s348, 59
      %s357 = smul.addr %s354, 60
      %s358 = sadd.s32 %s356, %s357
      %s359 = smul.addr %s358, 4
      %s360 = scalar_lea.vmem %s0, %s359
      %p361 = pneg %p55
      %p362 = pneg %p52
      %p363 = scmp.lt.s32.totalorder %s24, 1
      %s364 = scalar_select %p363, %s24, 1
      %p365 = scmp.lt.s32.totalorder %s25, 1
      %s366 = scalar_select %p365, %s25, 1
      %s367 = smul.addr %s366, 12
      %s368 = smul.addr %s364, 24
      %s369 = sadd.s32 %s367, %s368
      %s370 = smul.addr %s369, 4
      %s371 = scalar_lea.vmem %s1, %s370
      %p372 = pneg %p83
      %p373 = pneg %p80
      %p374 = pneg %p104
      %p375 = pneg %p101
      %p376 = pneg %p125
      %p377 = pneg %p122
      %p378 = pneg %p146
      %p379 = pneg %p143
      %p380 = pneg %p167
      %p381 = pneg %p164
      %p382 = pneg %p188
      %p383 = pneg %p185
      %p384 = pneg %p209
      %p385 = pneg %p206
      %p386 = scmp.lt.s32.totalorder %s25, 1
      %s387 = scalar_select %p386, %s25, 1
      %s388 = smul.addr %s387, 30
      %s389 = smul.addr %s388, 8
      %s390 = scalar_lea.vmem %s8, %s389
      %p391 = pneg %p235
      %p392 = pneg %p232
      %p393 = pneg %p263
      %p394 = pneg %p260
      %p395 = scmp.lt.s32.totalorder %s24, 1
      %s396 = scalar_select %p395, %s24, 1
      %p397 = scmp.lt.s32.totalorder %s25, 1
      %s398 = scalar_select %p397, %s25, 1
      %s399 = smul.addr %s398, 24
      %s400 = smul.addr %s396, 48
      %s401 = sadd.s32 %s399, %s400
      %s402 = smul.addr %s401, 4
      %s403 = scalar_lea.vmem %s9, %s402
      %s404 = smul.u32 24, %s25
      %s405 = ssub.s32 60, %s404
      %p406 = scmp.lt.s32.totalorder %s405, 24
      %s407 = scalar_select %p406, %s405, 24
      %s408 = smul.u32 64, %s407
      %p409 = scmp.lt.s32.totalorder %s24, 1
      %s410 = scalar_select %p409, %s24, 1
      %p411 = scmp.lt.s32.totalorder %s404, 59
      %s412 = scalar_select %p411, %s404, 59
      %s413 = smul.addr %s410, 60
      %s414 = sadd.s32 %s412, %s413
      %s415 = smul.addr %s414, 4
      %s416 = scalar_lea.vmem %s0, %s415
      %s417 = smul.u32 24, %s25
      %s418 = ssub.s32 60, %s417
      %p419 = scmp.lt.s32.totalorder %s418, 24
      %s420 = scalar_select %p419, %s418, 24
      %s421 = smul.u32 64, %s420
      %p422 = scmp.lt.s32.totalorder %s24, 1
      %s423 = scalar_select %p422, %s24, 1
      %p424 = scmp.lt.s32.totalorder %s25, 1
      %s425 = scalar_select %p424, %s25, 1
      %s426 = smul.addr %s425, 12
      %s427 = smul.addr %s423, 24
      %s428 = sadd.s32 %s426, %s427
      %s429 = smul.addr %s428, 4
      %s430 = scalar_lea.vmem %s1, %s429
      %p431 = scmp.lt.s32.totalorder %s25, 1
      %s432 = scalar_select %p431, %s25, 1
      %s433 = smul.addr %s432, 30
      %s434 = smul.addr %s433, 8
      %s435 = scalar_lea.vmem %s8, %s434
      %p436 = scmp.lt.s32.totalorder %s24, 1
      %s437 = scalar_select %p436, %s24, 1
      %p438 = scmp.lt.s32.totalorder %s25, 1
      %s439 = scalar_select %p438, %s25, 1
      %s440 = smul.addr %s439, 24
      %s441 = smul.addr %s437, 48
      %s442 = sadd.s32 %s440, %s441
      %s443 = smul.addr %s442, 4
      %s444 = scalar_lea.vmem %s9, %s443
      %v446 = vld [vmem:[%s416] sm:$0xf]
      %v447 = vld [vmem:[%s416 + $0x4] sm:$0xf]
      %v448 = vld [vmem:[%s416 + $0x8] sm:$0xf]
      %v449 = vld [vmem:[%s416 + $0xc] sm:$0xf]
      %v450 = vld [vmem:[%s416 + $0x10] sm:$0xf]
      %v451 = vld [vmem:[%s416 + $0x14] sm:$0xf]
      %v452 = vld [vmem:[%s416 + $0x18] sm:$0xf]
      %v453 = vld [vmem:[%s416 + $0x1c] sm:$0xf]
      %v454 = vld [vmem:[%s416 + $0x20] sm:$0xf]
      %v455 = vld [vmem:[%s416 + $0x24] sm:$0xf]
      %v456 = vld [vmem:[%s416 + $0x28] sm:$0xf]
      %v457 = vld [vmem:[%s416 + $0x2c] sm:$0xf]
      %v458 = vld [vmem:[%s416 + $0x30] sm:$0xf]
      %v459 = vld [vmem:[%s416 + $0x34] sm:$0xf]
      %v460 = vld [vmem:[%s416 + $0x38] sm:$0xf]
      %v461 = vld [vmem:[%s416 + $0x3c] sm:$0xf]
      %v462 = vld [vmem:[%s416 + $0x40] sm:$0xf]
      %v463 = vld [vmem:[%s416 + $0x44] sm:$0xf]
      %v464 = vld [vmem:[%s416 + $0x48] sm:$0xf]
      %v465 = vld [vmem:[%s416 + $0x4c] sm:$0xf]
      %v466 = vld [vmem:[%s416 + $0x50] sm:$0xf]
      %v467 = vld [vmem:[%s416 + $0x54] sm:$0xf]
      %v468 = vld [vmem:[%s416 + $0x58] sm:$0xf]
      %v469 = vld [vmem:[%s416 + $0x5c] sm:$0xf]
      %vm470 = vcmask 60416
      %471 = vst.msk [vmem:[#allocation2] sm:$0xf] %vm470, %v446
      %472 = vst.msk [vmem:[#allocation2 + $0x4] sm:$0xf] %vm470, %v447
      %473 = vst.msk [vmem:[#allocation2 + $0x8] sm:$0xf] %vm470, %v448
      %474 = vst.msk [vmem:[#allocation2 + $0xc] sm:$0xf] %vm470, %v449
      %475 = vst.msk [vmem:[#allocation2 + $0x10] sm:$0xf] %vm470, %v450
      %476 = vst.msk [vmem:[#allocation2 + $0x14] sm:$0xf] %vm470, %v451
      %477 = vst.msk [vmem:[#allocation2 + $0x18] sm:$0xf] %vm470, %v452
      %478 = vst.msk [vmem:[#allocation2 + $0x1c] sm:$0xf] %vm470, %v453
      %479 = vst.msk [vmem:[#allocation2 + $0x20] sm:$0xf] %vm470, %v454
      %480 = vst.msk [vmem:[#allocation2 + $0x24] sm:$0xf] %vm470, %v455
      %481 = vst.msk [vmem:[#allocation2 + $0x28] sm:$0xf] %vm470, %v456
      %482 = vst.msk [vmem:[#allocation2 + $0x2c] sm:$0xf] %vm470, %v457
      %483 = vst.msk [vmem:[#allocation2 + $0x30] sm:$0xf] %vm470, %v458
      %484 = vst.msk [vmem:[#allocation2 + $0x34] sm:$0xf] %vm470, %v459
      %485 = vst.msk [vmem:[#allocation2 + $0x38] sm:$0xf] %vm470, %v460
      %486 = vst.msk [vmem:[#allocation2 + $0x3c] sm:$0xf] %vm470, %v461
      %487 = vst.msk [vmem:[#allocation2 + $0x40] sm:$0xf] %vm470, %v462
      %488 = vst.msk [vmem:[#allocation2 + $0x44] sm:$0xf] %vm470, %v463
      %489 = vst.msk [vmem:[#allocation2 + $0x48] sm:$0xf] %vm470, %v464
      %490 = vst.msk [vmem:[#allocation2 + $0x4c] sm:$0xf] %vm470, %v465
      %491 = vst.msk [vmem:[#allocation2 + $0x50] sm:$0xf] %vm470, %v466
      %492 = vst.msk [vmem:[#allocation2 + $0x54] sm:$0xf] %vm470, %v467
      %493 = vst.msk [vmem:[#allocation2 + $0x58] sm:$0xf] %vm470, %v468
      %494 = vst.msk [vmem:[#allocation2 + $0x5c] sm:$0xf] %vm470, %v469
      %v495 = vld [vmem:[%s430] sm:$0xf]
      %v496 = vld [vmem:[%s430 + $0x4] sm:$0xf]
      %v497 = vld [vmem:[%s430 + $0x8] sm:$0xf]
      %v498 = vld [vmem:[%s430 + $0xc] sm:$0xf]
      %v499 = vld [vmem:[%s430 + $0x10] sm:$0xf]
      %v500 = vld [vmem:[%s430 + $0x14] sm:$0xf]
      %v501 = vld [vmem:[%s430 + $0x18] sm:$0xf]
      %v502 = vld [vmem:[%s430 + $0x1c] sm:$0xf]
      %v503 = vld [vmem:[%s430 + $0x20] sm:$0xf]
      %v504 = vld [vmem:[%s430 + $0x24] sm:$0xf]
      %v505 = vld [vmem:[%s430 + $0x28] sm:$0xf]
      %v506 = vld [vmem:[%s430 + $0x2c] sm:$0xf]
      %507 = vst.msk [vmem:[#allocation2 + $0x60] sm:$0xf] %vm470, %v495
      %508 = vst.msk [vmem:[#allocation2 + $0x64] sm:$0xf] %vm470, %v496
      %509 = vst.msk [vmem:[#allocation2 + $0x68] sm:$0xf] %vm470, %v497
      %510 = vst.msk [vmem:[#allocation2 + $0x6c] sm:$0xf] %vm470, %v498
      %511 = vst.msk [vmem:[#allocation2 + $0x70] sm:$0xf] %vm470, %v499
      %512 = vst.msk [vmem:[#allocation2 + $0x74] sm:$0xf] %vm470, %v500
      %513 = vst.msk [vmem:[#allocation2 + $0x78] sm:$0xf] %vm470, %v501
      %514 = vst.msk [vmem:[#allocation2 + $0x7c] sm:$0xf] %vm470, %v502
      %515 = vst.msk [vmem:[#allocation2 + $0x80] sm:$0xf] %vm470, %v503
      %516 = vst.msk [vmem:[#allocation2 + $0x84] sm:$0xf] %vm470, %v504
      %517 = vst.msk [vmem:[#allocation2 + $0x88] sm:$0xf] %vm470, %v505
      %518 = vst.msk [vmem:[#allocation2 + $0x8c] sm:$0xf] %vm470, %v506
      %519 = vst.msk [vmem:[#allocation2 + $0x90] sm:$0xf] %vm470, 0
      %v520 = vld [vmem:[#allocation2] sm:$0xf]
      %v521 = vld [vmem:[#allocation2 + $0x4] sm:$0xf]
      %v522 = vld [vmem:[#allocation2 + $0x8] sm:$0xf]
      %v523 = vld [vmem:[#allocation2 + $0xc] sm:$0xf]
      %v524 = vld [vmem:[#allocation2 + $0x10] sm:$0xf]
      %v525 = vld [vmem:[#allocation2 + $0x14] sm:$0xf]
      %v526 = vld [vmem:[#allocation2 + $0x18] sm:$0xf]
      %v527 = vld [vmem:[#allocation2 + $0x1c] sm:$0xf]
      %v528 = vld [vmem:[#allocation2 + $0x20] sm:$0xf]
      %v529 = vld [vmem:[#allocation2 + $0x24] sm:$0xf]
      %v530 = vld [vmem:[#allocation2 + $0x28] sm:$0xf]
      %v531 = vld [vmem:[#allocation2 + $0x2c] sm:$0xf]
      %v532 = vld [vmem:[#allocation2 + $0x30] sm:$0xf]
      %v533 = vld [vmem:[#allocation2 + $0x34] sm:$0xf]
      %v534 = vld [vmem:[#allocation2 + $0x38] sm:$0xf]
      %v535 = vld [vmem:[#allocation2 + $0x3c] sm:$0xf]
      %v536 = vld [vmem:[#allocation2 + $0x40] sm:$0xf]
      %v537 = vld [vmem:[#allocation2 + $0x44] sm:$0xf]
      %v538 = vld [vmem:[#allocation2 + $0x48] sm:$0xf]
      %v539 = vld [vmem:[#allocation2 + $0x4c] sm:$0xf]
      %v540 = vld [vmem:[#allocation2 + $0x50] sm:$0xf]
      %v541 = vld [vmem:[#allocation2 + $0x54] sm:$0xf]
      %v542 = vld [vmem:[#allocation2 + $0x58] sm:$0xf]
      %v543 = vld [vmem:[#allocation2 + $0x5c] sm:$0xf]
      %v544 = vld [vmem:[#allocation2 + $0x60] sm:$0xf]
      %v545 = vld [vmem:[#allocation2 + $0x64] sm:$0xf]
      %v546 = vld [vmem:[#allocation2 + $0x68] sm:$0xf]
      %v547 = vld [vmem:[#allocation2 + $0x6c] sm:$0xf]
      %v548 = vld [vmem:[#allocation2 + $0x70] sm:$0xf]
      %v549 = vld [vmem:[#allocation2 + $0x74] sm:$0xf]
      %v550 = vld [vmem:[%s2] sm:$0xf]
      %v551 = vld [vmem:[#allocation2 + $0x78] sm:$0x1]
      %s552 = scalar_lea.vmem %s2, 4
      %v553 = vld [vmem:[%s552] sm:$0xf]
      %v585 = vunpack.c.l.b16 %v520
      %v586 = vunpack.c.l.b16 %v521
      %v587 = vunpack.c.l.b16 %v522
      %v588 = vunpack.c.l.b16 %v523
      %v589 = vunpack.c.l.b16 %v524
      %v590 = vunpack.c.l.b16 %v525
      %v591 = vunpack.c.l.b16 %v526
      %v592 = vunpack.c.l.b16 %v527
      %v593 = vunpack.c.l.b16 %v528
      %v594 = vunpack.c.l.b16 %v529
      %v595 = vunpack.c.l.b16 %v530
      %v596 = vunpack.c.l.b16 %v531
      %v597 = vunpack.c.l.b16 %v532
      %v598 = vunpack.c.l.b16 %v533
      %v599 = vunpack.c.l.b16 %v534
      %v600 = vunpack.c.l.b16 %v535
      %v601 = vunpack.c.l.b16 %v536
      %v602 = vunpack.c.l.b16 %v537
      %v603 = vunpack.c.l.b16 %v538
      %v604 = vunpack.c.l.b16 %v539
      %v605 = vunpack.c.l.b16 %v540
      %v606 = vunpack.c.l.b16 %v541
      %v607 = vunpack.c.l.b16 %v542
      %v608 = vunpack.c.l.b16 %v543
      %v609 = vunpack.c.l.b16 %v544
      %v610 = vunpack.c.l.b16 %v545
      %v611 = vunpack.c.l.b16 %v546
      %v612 = vunpack.c.l.b16 %v547
      %v613 = vunpack.c.l.b16 %v548
      %v614 = vunpack.c.l.b16 %v549
      %v615 = vunpack.c.l.b16 %v551
      %v616 = vpack.c.b16 %v586, %v585
      %v617 = vpack.c.b16 %v588, %v587
      %v618 = vpack.c.b16 %v590, %v589
      %v619 = vpack.c.b16 %v592, %v591
      %v620 = vpack.c.b16 %v594, %v593
      %v621 = vpack.c.b16 %v596, %v595
      %v622 = vpack.c.b16 %v598, %v597
      %v623 = vpack.c.b16 %v600, %v599
      %v624 = vpack.c.b16 %v602, %v601
      %v625 = vpack.c.b16 %v604, %v603
      %v626 = vpack.c.b16 %v606, %v605
      %v627 = vpack.c.b16 %v608, %v607
      %v628 = vpack.c.b16 %v610, %v609
      %v629 = vpack.c.b16 %v612, %v611
      %v630 = vpack.c.b16 %v614, %v613
      %v631 = vpack.c.b16 %v615, %v615
      %vm632 = vsmask.f32 7424
      %v634 = vshrl.u32 %v616, 16
      %v636 = vshll.u32 %v616, 16
      %v638 = vrot.slane %v636, 1
      %v639 = vor.u32 %v634, %v638
      %v641 = vshll.u32 %v617, 16
      %v643 = vrot.slane %v641, 1
      %v644 = vsel %vm632, %v639, %v643
      %v645 = vshrl.u32 %v617, 16
      %v647 = vor.u32 %v645, %v643
      %v649 = vshll.u32 %v618, 16
      %v651 = vrot.slane %v649, 1
      %v652 = vsel %vm632, %v647, %v651
      %v653 = vshrl.u32 %v618, 16
      %v655 = vor.u32 %v653, %v651
      %v657 = vshll.u32 %v619, 16
      %v659 = vrot.slane %v657, 1
      %v660 = vsel %vm632, %v655, %v659
      %v661 = vshrl.u32 %v619, 16
      %v663 = vor.u32 %v661, %v659
      %v665 = vshll.u32 %v620, 16
      %v667 = vrot.slane %v665, 1
      %v668 = vsel %vm632, %v663, %v667
      %v669 = vshrl.u32 %v620, 16
      %v671 = vor.u32 %v669, %v667
      %v673 = vshll.u32 %v621, 16
      %v675 = vrot.slane %v673, 1
      %v676 = vsel %vm632, %v671, %v675
      %v677 = vshrl.u32 %v621, 16
      %v679 = vor.u32 %v677, %v675
      %v681 = vshll.u32 %v622, 16
      %v683 = vrot.slane %v681, 1
      %v684 = vsel %vm632, %v679, %v683
      %v685 = vshrl.u32 %v622, 16
      %v687 = vor.u32 %v685, %v683
      %v689 = vshll.u32 %v623, 16
      %v691 = vrot.slane %v689, 1
      %v692 = vsel %vm632, %v687, %v691
      %v693 = vshrl.u32 %v623, 16
      %v695 = vor.u32 %v693, %v691
      %v697 = vshll.u32 %v624, 16
      %v699 = vrot.slane %v697, 1
      %v700 = vsel %vm632, %v695, %v699
      %v701 = vshrl.u32 %v624, 16
      %v703 = vor.u32 %v701, %v699
      %v705 = vshll.u32 %v625, 16
      %v707 = vrot.slane %v705, 1
      %v708 = vsel %vm632, %v703, %v707
      %v709 = vshrl.u32 %v625, 16
      %v711 = vor.u32 %v709, %v707
      %v713 = vshll.u32 %v626, 16
      %v715 = vrot.slane %v713, 1
      %v716 = vsel %vm632, %v711, %v715
      %v717 = vshrl.u32 %v626, 16
      %v719 = vor.u32 %v717, %v715
      %v721 = vshll.u32 %v627, 16
      %v723 = vrot.slane %v721, 1
      %v724 = vsel %vm632, %v719, %v723
      %v725 = vshrl.u32 %v627, 16
      %v727 = vor.u32 %v725, %v723
      %v729 = vshll.u32 %v628, 16
      %v731 = vrot.slane %v729, 1
      %v732 = vsel %vm632, %v727, %v731
      %v733 = vshrl.u32 %v628, 16
      %v735 = vor.u32 %v733, %v731
      %v737 = vshll.u32 %v629, 16
      %v739 = vrot.slane %v737, 1
      %v740 = vsel %vm632, %v735, %v739
      %v741 = vshrl.u32 %v629, 16
      %v743 = vor.u32 %v741, %v739
      %v745 = vshll.u32 %v630, 16
      %v747 = vrot.slane %v745, 1
      %v748 = vsel %vm632, %v743, %v747
      %v749 = vshrl.u32 %v630, 16
      %v751 = vor.u32 %v749, %v747
      %v753 = vshll.u32 %v631, 16
      %v755 = vrot.slane %v753, 1
      %v756 = vsel %vm632, %v751, %v755
      %vm757 = vcmask 64512
      %v759 = vsel %vm757, %v644, 0
      %v762 = vsel %vm757, %v652, 0
      %v765 = vsel %vm757, %v660, 0
      %v768 = vsel %vm757, %v668, 0
      %v771 = vsel %vm757, %v676, 0
      %v774 = vsel %vm757, %v684, 0
      %v777 = vsel %vm757, %v692, 0
      %v780 = vsel %vm757, %v700, 0
      %v783 = vsel %vm757, %v708, 0
      %v786 = vsel %vm757, %v716, 0
      %v789 = vsel %vm757, %v724, 0
      %v792 = vsel %vm757, %v732, 0
      %v795 = vsel %vm757, %v740, 0
      %v798 = vsel %vm757, %v748, 0
      %v801 = vsel %vm757, %v756, 0
      %vm803 = vcmask 1043456
      %v805 = vsel %vm803, %v553, 0
      %807 = vmatprep.subr.bf16.mxu0 0
      %808 = vmatpush1.bf16.msra.mxu0 %v805
      %809 = vmatprep.subr.bf16.mxu0 0
      %810 = vmatpush1.bf16.msra.mxu0 0
      %811 = vmatprep.subr.bf16.mxu0 0
      %812 = vmatpush1.bf16.msra.mxu0 0
      %813 = vmatprep.subr.bf16.mxu0 0
      %814 = vmatpush1.bf16.msra.mxu0 0
      %815 = vmatprep.subr.bf16.mxu0 0
      %816 = vmatpush1.bf16.msra.mxu0 0
      %817 = vmatprep.subr.bf16.mxu0 0
      %818 = vmatpush1.bf16.msra.mxu0 0
      %819 = vmatprep.subr.bf16.mxu0 0
      %820 = vmatpush1.bf16.msra.mxu0 0
      %821 = vmatprep.subr.bf16.mxu0 0
      %822 = vmatpush1.bf16.msra.mxu0 0
      %823 = vmatprep.subr.bf16.mxu0 0
      %824 = vmatpush1.bf16.msra.mxu0 0
      %825 = vmatprep.subr.bf16.mxu0 0
      %826 = vmatpush1.bf16.msra.mxu0 0
      %827 = vmatprep.subr.bf16.mxu0 0
      %828 = vmatpush1.bf16.msra.mxu0 0
      %829 = vmatprep.subr.bf16.mxu0 0
      %830 = vmatpush1.bf16.msra.mxu0 0
      %831 = vmatprep.subr.bf16.mxu0 0
      %832 = vmatpush1.bf16.msra.mxu0 0
      %833 = vmatprep.subr.bf16.mxu0 0
      %834 = vmatpush1.bf16.msra.mxu0 0
      %835 = vmatprep.subr.bf16.mxu0 0
      %836 = vmatpush1.bf16.msra.mxu0 0
      %837 = vmatprep.subr.bf16.mxu0 0
      %838 = vmatpush1.bf16.msra.mxu0 0
      %839 = vmatprep.mubr.bf16.mxu0 0
      %840 = vmatmul.mubr.bf16.gmra.mrb[0].mxu0 %v759
      %v841 = vpop.f32.mrb[0].mxu0
      %v842 = vadd.f32 0.0, %v841
      %v843 = vpop.f32.mrb[0].mxu0
      %v844 = vpop.f32.mrb[0].mxu0
      %v845 = vadd.f32 0.0, %v844
      %v846 = vpop.f32.mrb[0].mxu0
      %847 = vmatprep.mubr.bf16.mxu0 0
      %848 = vmatmul.mubr.bf16.gmra.mrb[0].mxu0 %v762
      %v849 = vpop.f32.mrb[0].mxu0
      %v850 = vadd.f32 0.0, %v849
      %v851 = vpop.f32.mrb[0].mxu0
      %v852 = vpop.f32.mrb[0].mxu0
      %v853 = vadd.f32 0.0, %v852
      %v854 = vpop.f32.mrb[0].mxu0
      %855 = vmatprep.mubr.bf16.mxu0 0
      %856 = vmatmul.mubr.bf16.gmra.mrb[0].mxu0 %v765
      %v857 = vpop.f32.mrb[0].mxu0
      %v858 = vadd.f32 0.0, %v857
      %v859 = vpop.f32.mrb[0].mxu0
      %v860 = vpop.f32.mrb[0].mxu0
      %v861 = vadd.f32 0.0, %v860
      %v862 = vpop.f32.mrb[0].mxu0
      %863 = vmatprep.mubr.bf16.mxu0 0
      %864 = vmatmul.mubr.bf16.gmra.mrb[0].mxu0 %v768
      %v865 = vpop.f32.mrb[0].mxu0
      %v866 = vadd.f32 0.0, %v865
      %v867 = vpop.f32.mrb[0].mxu0
      %v868 = vpop.f32.mrb[0].mxu0
      %v869 = vadd.f32 0.0, %v868
      %v870 = vpop.f32.mrb[0].mxu0
      %871 = vmatprep.mubr.bf16.mxu0 0
      %872 = vmatmul.mubr.bf16.gmra.mrb[0].mxu0 %v771
      %v873 = vpop.f32.mrb[0].mxu0
      %v874 = vadd.f32 0.0, %v873
      %v875 = vpop.f32.mrb[0].mxu0
      %v876 = vpop.f32.mrb[0].mxu0
      %v877 = vadd.f32 0.0, %v876
      %v878 = vpop.f32.mrb[0].mxu0
      %879 = vmatprep.mubr.bf16.mxu0 0
      %880 = vmatmul.mubr.bf16.gmra.mrb[0].mxu0 %v774
      %v881 = vpop.f32.mrb[0].mxu0
      %v882 = vadd.f32 0.0, %v881
      %v883 = vpop.f32.mrb[0].mxu0
      %v884 = vpop.f32.mrb[0].mxu0
      %v885 = vadd.f32 0.0, %v884
      %v886 = vpop.f32.mrb[0].mxu0
      %887 = vmatprep.mubr.bf16.mxu0 0
      %888 = vmatmul.mubr.bf16.gmra.mrb[0].mxu0 %v777
      %v889 = vpop.f32.mrb[0].mxu0
      %v890 = vadd.f32 0.0, %v889
      %v891 = vpop.f32.mrb[0].mxu0
      %v892 = vpop.f32.mrb[0].mxu0
      %v893 = vadd.f32 0.0, %v892
      %v894 = vpop.f32.mrb[0].mxu0
      %895 = vmatprep.mubr.bf16.mxu0 0
      %896 = vmatmul.mubr.bf16.gmra.mrb[0].mxu0 %v780
      %v897 = vpop.f32.mrb[0].mxu0
      %v898 = vadd.f32 0.0, %v897
      %v899 = vpop.f32.mrb[0].mxu0
      %v900 = vpop.f32.mrb[0].mxu0
      %v901 = vadd.f32 0.0, %v900
      %v902 = vpop.f32.mrb[0].mxu0
      %903 = vmatprep.mubr.bf16.mxu0 0
      %904 = vmatmul.mubr.bf16.gmra.mrb[0].mxu0 %v783
      %v905 = vpop.f32.mrb[0].mxu0
      %v906 = vadd.f32 0.0, %v905
      %v907 = vpop.f32.mrb[0].mxu0
      %v908 = vpop.f32.mrb[0].mxu0
      %v909 = vadd.f32 0.0, %v908
      %v910 = vpop.f32.mrb[0].mxu0
      %911 = vmatprep.mubr.bf16.mxu0 0
      %912 = vmatmul.mubr.bf16.gmra.mrb[0].mxu0 %v786
      %v913 = vpop.f32.mrb[0].mxu0
      %v914 = vadd.f32 0.0, %v913
      %v915 = vpop.f32.mrb[0].mxu0
      %v916 = vpop.f32.mrb[0].mxu0
      %v917 = vadd.f32 0.0, %v916
      %v918 = vpop.f32.mrb[0].mxu0
      %919 = vmatprep.mubr.bf16.mxu0 0
      %920 = vmatmul.mubr.bf16.gmra.mrb[0].mxu0 %v789
      %v921 = vpop.f32.mrb[0].mxu0
      %v922 = vadd.f32 0.0, %v921
      %v923 = vpop.f32.mrb[0].mxu0
      %v924 = vpop.f32.mrb[0].mxu0
      %v925 = vadd.f32 0.0, %v924
      %v926 = vpop.f32.mrb[0].mxu0
      %927 = vmatprep.mubr.bf16.mxu0 0
      %928 = vmatmul.mubr.bf16.gmra.mrb[0].mxu0 %v792
      %v929 = vpop.f32.mrb[0].mxu0
      %v930 = vadd.f32 0.0, %v929
      %v931 = vpop.f32.mrb[0].mxu0
      %v932 = vpop.f32.mrb[0].mxu0
      %v933 = vadd.f32 0.0, %v932
      %v934 = vpop.f32.mrb[0].mxu0
      %935 = vmatprep.mubr.bf16.mxu0 0
      %936 = vmatmul.mubr.bf16.gmra.mrb[0].mxu0 %v795
      %v937 = vpop.f32.mrb[0].mxu0
      %v938 = vadd.f32 0.0, %v937
      %v939 = vpop.f32.mrb[0].mxu0
      %v940 = vpop.f32.mrb[0].mxu0
      %v941 = vadd.f32 0.0, %v940
      %v942 = vpop.f32.mrb[0].mxu0
      %943 = vmatprep.mubr.bf16.mxu0 0
      %944 = vmatmul.mubr.bf16.gmra.mrb[0].mxu0 %v798
      %v945 = vpop.f32.mrb[0].mxu0
      %v946 = vadd.f32 0.0, %v945
      %v947 = vpop.f32.mrb[0].mxu0
      %v948 = vpop.f32.mrb[0].mxu0
      %v949 = vadd.f32 0.0, %v948
      %v950 = vpop.f32.mrb[0].mxu0
      %951 = vmatprep.mubr.bf16.mxu0 0
      %952 = vmatmul.mubr.bf16.gmra.mrb[0].mxu0 %v801
      %v953 = vpop.f32.mrb[0].mxu0
      %v954 = vadd.f32 0.0, %v953
      %v955 = vpop.f32.mrb[0].mxu0
      %v956 = vpop.f32.mrb[0].mxu0
      %v957 = vadd.f32 0.0, %v956
      %v958 = vpop.f32.mrb[0].mxu0
      %959 = vdwg.mxu0
      %v960 = vsel %vm757, %v616, 0
      %v962 = vsel %vm757, %v617, 0
      %v964 = vsel %vm757, %v618, 0
      %v966 = vsel %vm757, %v619, 0
      %v968 = vsel %vm757, %v620, 0
      %v970 = vsel %vm757, %v621, 0
      %v972 = vsel %vm757, %v622, 0
      %v974 = vsel %vm757, %v623, 0
      %v976 = vsel %vm757, %v624, 0
      %v978 = vsel %vm757, %v625, 0
      %v980 = vsel %vm757, %v626, 0
      %v982 = vsel %vm757, %v627, 0
      %v984 = vsel %vm757, %v628, 0
      %v986 = vsel %vm757, %v629, 0
      %v988 = vsel %vm757, %v630, 0
      %v991 = vsel %vm803, %v550, 0
      %993 = vmatprep.subr.bf16.mxu0 0
      %994 = vmatpush1.bf16.msra.mxu0 %v991
      %995 = vmatprep.subr.bf16.mxu0 0
      %996 = vmatpush1.bf16.msra.mxu0 0
      %997 = vmatprep.subr.bf16.mxu0 0
      %998 = vmatpush1.bf16.msra.mxu0 0
      %999 = vmatprep.subr.bf16.mxu0 0
      %1000 = vmatpush1.bf16.msra.mxu0 0
      %1001 = vmatprep.subr.bf16.mxu0 0
      %1002 = vmatpush1.bf16.msra.mxu0 0
      %1003 = vmatprep.subr.bf16.mxu0 0
      %1004 = vmatpush1.bf16.msra.mxu0 0
      %1005 = vmatprep.subr.bf16.mxu0 0
      %1006 = vmatpush1.bf16.msra.mxu0 0
      %1007 = vmatprep.subr.bf16.mxu0 0
      %1008 = vmatpush1.bf16.msra.mxu0 0
      %1009 = vmatprep.subr.bf16.mxu0 0
      %1010 = vmatpush1.bf16.msra.mxu0 0
      %1011 = vmatprep.subr.bf16.mxu0 0
      %1012 = vmatpush1.bf16.msra.mxu0 0
      %1013 = vmatprep.subr.bf16.mxu0 0
      %1014 = vmatpush1.bf16.msra.mxu0 0
      %1015 = vmatprep.subr.bf16.mxu0 0
      %1016 = vmatpush1.bf16.msra.mxu0 0
      %1017 = vmatprep.subr.bf16.mxu0 0
      %1018 = vmatpush1.bf16.msra.mxu0 0
      %1019 = vmatprep.subr.bf16.mxu0 0
      %1020 = vmatpush1.bf16.msra.mxu0 0
      %1021 = vmatprep.subr.bf16.mxu0 0
      %1022 = vmatpush1.bf16.msra.mxu0 0
      %1023 = vmatprep.subr.bf16.mxu0 0
      %1024 = vmatpush1.bf16.msra.mxu0 0
      %1025 = vmatprep.mubr.bf16.mxu0 0
      %1026 = vmatmul.mubr.bf16.gmra.mrb[0].mxu0 %v960
      %v1027 = vpop.f32.mrb[0].mxu0
      %v1028 = vadd.f32 %v842, %v1027
      %v1029 = vpop.f32.mrb[0].mxu0
      %v1030 = vpop.f32.mrb[0].mxu0
      %v1031 = vadd.f32 %v845, %v1030
      %v1032 = vpop.f32.mrb[0].mxu0
      %1033 = vmatprep.mubr.bf16.mxu0 0
      %1034 = vmatmul.mubr.bf16.gmra.mrb[0].mxu0 %v962
      %v1035 = vpop.f32.mrb[0].mxu0
      %v1036 = vadd.f32 %v850, %v1035
      %v1037 = vpop.f32.mrb[0].mxu0
      %v1038 = vpop.f32.mrb[0].mxu0
      %v1039 = vadd.f32 %v853, %v1038
      %v1040 = vpop.f32.mrb[0].mxu0
      %1041 = vmatprep.mubr.bf16.mxu0 0
      %1042 = vmatmul.mubr.bf16.gmra.mrb[0].mxu0 %v964
      %v1043 = vpop.f32.mrb[0].mxu0
      %v1044 = vadd.f32 %v858, %v1043
      %v1045 = vpop.f32.mrb[0].mxu0
      %v1046 = vpop.f32.mrb[0].mxu0
      %v1047 = vadd.f32 %v861, %v1046
      %v1048 = vpop.f32.mrb[0].mxu0
      %1049 = vmatprep.mubr.bf16.mxu0 0
      %1050 = vmatmul.mubr.bf16.gmra.mrb[0].mxu0 %v966
      %v1051 = vpop.f32.mrb[0].mxu0
      %v1052 = vadd.f32 %v866, %v1051
      %v1053 = vpop.f32.mrb[0].mxu0
      %v1054 = vpop.f32.mrb[0].mxu0
      %v1055 = vadd.f32 %v869, %v1054
      %v1056 = vpop.f32.mrb[0].mxu0
      %1057 = vmatprep.mubr.bf16.mxu0 0
      %1058 = vmatmul.mubr.bf16.gmra.mrb[0].mxu0 %v968
      %v1059 = vpop.f32.mrb[0].mxu0
      %v1060 = vadd.f32 %v874, %v1059
      %v1061 = vpop.f32.mrb[0].mxu0
      %v1062 = vpop.f32.mrb[0].mxu0
      %v1063 = vadd.f32 %v877, %v1062
      %v1064 = vpop.f32.mrb[0].mxu0
      %1065 = vmatprep.mubr.bf16.mxu0 0
      %1066 = vmatmul.mubr.bf16.gmra.mrb[0].mxu0 %v970
      %v1067 = vpop.f32.mrb[0].mxu0
      %v1068 = vadd.f32 %v882, %v1067
      %v1069 = vpop.f32.mrb[0].mxu0
      %v1070 = vpop.f32.mrb[0].mxu0
      %v1071 = vadd.f32 %v885, %v1070
      %v1072 = vpop.f32.mrb[0].mxu0
      %1073 = vmatprep.mubr.bf16.mxu0 0
      %1074 = vmatmul.mubr.bf16.gmra.mrb[0].mxu0 %v972
      %v1075 = vpop.f32.mrb[0].mxu0
      %v1076 = vadd.f32 %v890, %v1075
      %v1077 = vpop.f32.mrb[0].mxu0
      %v1078 = vpop.f32.mrb[0].mxu0
      %v1079 = vadd.f32 %v893, %v1078
      %v1080 = vpop.f32.mrb[0].mxu0
      %1081 = vmatprep.mubr.bf16.mxu0 0
      %1082 = vmatmul.mubr.bf16.gmra.mrb[0].mxu0 %v974
      %v1083 = vpop.f32.mrb[0].mxu0
      %v1084 = vadd.f32 %v898, %v1083
      %v1085 = vpop.f32.mrb[0].mxu0
      %v1086 = vpop.f32.mrb[0].mxu0
      %v1087 = vadd.f32 %v901, %v1086
      %v1088 = vpop.f32.mrb[0].mxu0
      %1089 = vmatprep.mubr.bf16.mxu0 0
      %1090 = vmatmul.mubr.bf16.gmra.mrb[0].mxu0 %v976
      %v1091 = vpop.f32.mrb[0].mxu0
      %v1092 = vadd.f32 %v906, %v1091
      %v1093 = vpop.f32.mrb[0].mxu0
      %v1094 = vpop.f32.mrb[0].mxu0
      %v1095 = vadd.f32 %v909, %v1094
      %v1096 = vpop.f32.mrb[0].mxu0
      %1097 = vmatprep.mubr.bf16.mxu0 0
      %1098 = vmatmul.mubr.bf16.gmra.mrb[0].mxu0 %v978
      %v1099 = vpop.f32.mrb[0].mxu0
      %v1100 = vadd.f32 %v914, %v1099
      %v1101 = vpop.f32.mrb[0].mxu0
      %v1102 = vpop.f32.mrb[0].mxu0
      %v1103 = vadd.f32 %v917, %v1102
      %v1104 = vpop.f32.mrb[0].mxu0
      %1105 = vmatprep.mubr.bf16.mxu0 0
      %1106 = vmatmul.mubr.bf16.gmra.mrb[0].mxu0 %v980
      %v1107 = vpop.f32.mrb[0].mxu0
      %v1108 = vadd.f32 %v922, %v1107
      %v1109 = vpop.f32.mrb[0].mxu0
      %v1110 = vpop.f32.mrb[0].mxu0
      %v1111 = vadd.f32 %v925, %v1110
      %v1112 = vpop.f32.mrb[0].mxu0
      %1113 = vmatprep.mubr.bf16.mxu0 0
      %1114 = vmatmul.mubr.bf16.gmra.mrb[0].mxu0 %v982
      %v1115 = vpop.f32.mrb[0].mxu0
      %v1116 = vadd.f32 %v930, %v1115
      %v1117 = vpop.f32.mrb[0].mxu0
      %v1118 = vpop.f32.mrb[0].mxu0
      %v1119 = vadd.f32 %v933, %v1118
      %v1120 = vpop.f32.mrb[0].mxu0
      %1121 = vmatprep.mubr.bf16.mxu0 0
      %1122 = vmatmul.mubr.bf16.gmra.mrb[0].mxu0 %v984
      %v1123 = vpop.f32.mrb[0].mxu0
      %v1124 = vadd.f32 %v938, %v1123
      %v1125 = vpop.f32.mrb[0].mxu0
      %v1126 = vpop.f32.mrb[0].mxu0
      %v1127 = vadd.f32 %v941, %v1126
      %v1128 = vpop.f32.mrb[0].mxu0
      %1129 = vmatprep.mubr.bf16.mxu0 0
      %1130 = vmatmul.mubr.bf16.gmra.mrb[0].mxu0 %v986
      %v1131 = vpop.f32.mrb[0].mxu0
      %v1132 = vadd.f32 %v946, %v1131
      %v1133 = vpop.f32.mrb[0].mxu0
      %v1134 = vpop.f32.mrb[0].mxu0
      %v1135 = vadd.f32 %v949, %v1134
      %v1136 = vpop.f32.mrb[0].mxu0
      %1137 = vmatprep.mubr.bf16.mxu0 0
      %1138 = vmatmul.mubr.bf16.gmra.mrb[0].mxu0 %v988
      %v1139 = vpop.f32.mrb[0].mxu0
      %v1140 = vadd.f32 %v954, %v1139
      %v1141 = vpop.f32.mrb[0].mxu0
      %v1142 = vpop.f32.mrb[0].mxu0
      %v1143 = vadd.f32 %v957, %v1142
      %v1144 = vpop.f32.mrb[0].mxu0
      %1145 = vdwg.mxu0
      %v1146 = vld [vmem:[#allocation2] sm:$0xe]
      %s1147 = scalar_lea.vmem %s2, 8
      %v1148 = vld [vmem:[%s1147] sm:$0xf]
      %v1150 = vunpack.c.l.b16 %v1146
      %v1151 = vpack.c.b16 %v586, %v1150
      %vm1152 = vcmask 1046528
      %v1153 = vrot.slane %v1151, 1
      %v1154 = vrot.slane %v617, 1
      %v1155 = vsel %vm1152, %v1153, %v1154
      %v1156 = vrot.slane %v618, 1
      %v1157 = vsel %vm1152, %v1154, %v1156
      %v1158 = vrot.slane %v619, 1
      %v1159 = vsel %vm1152, %v1156, %v1158
      %v1160 = vrot.slane %v620, 1
      %v1161 = vsel %vm1152, %v1158, %v1160
      %v1162 = vrot.slane %v621, 1
      %v1163 = vsel %vm1152, %v1160, %v1162
      %v1164 = vrot.slane %v622, 1
      %v1165 = vsel %vm1152, %v1162, %v1164
      %v1166 = vrot.slane %v623, 1
      %v1167 = vsel %vm1152, %v1164, %v1166
      %v1168 = vrot.slane %v624, 1
      %v1169 = vsel %vm1152, %v1166, %v1168
      %v1170 = vrot.slane %v625, 1
      %v1171 = vsel %vm1152, %v1168, %v1170
      %v1172 = vrot.slane %v626, 1
      %v1173 = vsel %vm1152, %v1170, %v1172
      %v1174 = vrot.slane %v627, 1
      %v1175 = vsel %vm1152, %v1172, %v1174
      %v1176 = vrot.slane %v628, 1
      %v1177 = vsel %vm1152, %v1174, %v1176
      %v1178 = vrot.slane %v629, 1
      %v1179 = vsel %vm1152, %v1176, %v1178
      %v1180 = vrot.slane %v630, 1
      %v1181 = vsel %vm1152, %v1178, %v1180
      %v1182 = vrot.slane %v631, 1
      %v1183 = vsel %vm1152, %v1180, %v1182
      %v1185 = vsel %vm757, %v1155, 0
      %v1188 = vsel %vm757, %v1157, 0
      %v1191 = vsel %vm757, %v1159, 0
      %v1194 = vsel %vm757, %v1161, 0
      %v1197 = vsel %vm757, %v1163, 0
      %v1200 = vsel %vm757, %v1165, 0
      %v1203 = vsel %vm757, %v1167, 0
      %v1206 = vsel %vm757, %v1169, 0
      %v1209 = vsel %vm757, %v1171, 0
      %v1212 = vsel %vm757, %v1173, 0
      %v1215 = vsel %vm757, %v1175, 0
      %v1218 = vsel %vm757, %v1177, 0
      %v1221 = vsel %vm757, %v1179, 0
      %v1224 = vsel %vm757, %v1181, 0
      %v1227 = vsel %vm757, %v1183, 0
      %v1230 = vsel %vm803, %v1148, 0
      %1232 = vmatprep.subr.bf16.mxu0 0
      %1233 = vmatpush1.bf16.msra.mxu0 %v1230
      %1234 = vmatprep.subr.bf16.mxu0 0
      %1235 = vmatpush1.bf16.msra.mxu0 0
      %1236 = vmatprep.subr.bf16.mxu0 0
      %1237 = vmatpush1.bf16.msra.mxu0 0
      %1238 = vmatprep.subr.bf16.mxu0 0
      %1239 = vmatpush1.bf16.msra.mxu0 0
      %1240 = vmatprep.subr.bf16.mxu0 0
      %1241 = vmatpush1.bf16.msra.mxu0 0
      %1242 = vmatprep.subr.bf16.mxu0 0
      %1243 = vmatpush1.bf16.msra.mxu0 0
      %1244 = vmatprep.subr.bf16.mxu0 0
      %1245 = vmatpush1.bf16.msra.mxu0 0
      %1246 = vmatprep.subr.bf16.mxu0 0
      %1247 = vmatpush1.bf16.msra.mxu0 0
      %1248 = vmatprep.subr.bf16.mxu0 0
      %1249 = vmatpush1.bf16.msra.mxu0 0
      %1250 = vmatprep.subr.bf16.mxu0 0
      %1251 = vmatpush1.bf16.msra.mxu0 0
      %1252 = vmatprep.subr.bf16.mxu0 0
      %1253 = vmatpush1.bf16.msra.mxu0 0
      %1254 = vmatprep.subr.bf16.mxu0 0
      %1255 = vmatpush1.bf16.msra.mxu0 0
      %1256 = vmatprep.subr.bf16.mxu0 0
      %1257 = vmatpush1.bf16.msra.mxu0 0
      %1258 = vmatprep.subr.bf16.mxu0 0
      %1259 = vmatpush1.bf16.msra.mxu0 0
      %1260 = vmatprep.subr.bf16.mxu0 0
      %1261 = vmatpush1.bf16.msra.mxu0 0
      %1262 = vmatprep.subr.bf16.mxu0 0
      %1263 = vmatpush1.bf16.msra.mxu0 0
      %1264 = vmatprep.mubr.bf16.mxu0 0
      %1265 = vmatmul.mubr.bf16.gmra.mrb[0].mxu0 %v1185
      %v1266 = vpop.f32.mrb[0].mxu0
      %v1267 = vadd.f32 0.0, %v1266
      %v1268 = vpop.f32.mrb[0].mxu0
      %v1269 = vpop.f32.mrb[0].mxu0
      %v1270 = vadd.f32 0.0, %v1269
      %v1271 = vpop.f32.mrb[0].mxu0
      %1272 = vmatprep.mubr.bf16.mxu0 0
      %1273 = vmatmul.mubr.bf16.gmra.mrb[0].mxu0 %v1188
      %v1274 = vpop.f32.mrb[0].mxu0
      %v1275 = vadd.f32 0.0, %v1274
      %v1276 = vpop.f32.mrb[0].mxu0
      %v1277 = vpop.f32.mrb[0].mxu0
      %v1278 = vadd.f32 0.0, %v1277
      %v1279 = vpop.f32.mrb[0].mxu0
      %1280 = vmatprep.mubr.bf16.mxu0 0
      %1281 = vmatmul.mubr.bf16.gmra.mrb[0].mxu0 %v1191
      %v1282 = vpop.f32.mrb[0].mxu0
      %v1283 = vadd.f32 0.0, %v1282
      %v1284 = vpop.f32.mrb[0].mxu0
      %v1285 = vpop.f32.mrb[0].mxu0
      %v1286 = vadd.f32 0.0, %v1285
      %v1287 = vpop.f32.mrb[0].mxu0
      %1288 = vmatprep.mubr.bf16.mxu0 0
      %1289 = vmatmul.mubr.bf16.gmra.mrb[0].mxu0 %v1194
      %v1290 = vpop.f32.mrb[0].mxu0
      %v1291 = vadd.f32 0.0, %v1290
      %v1292 = vpop.f32.mrb[0].mxu0
      %v1293 = vpop.f32.mrb[0].mxu0
      %v1294 = vadd.f32 0.0, %v1293
      %v1295 = vpop.f32.mrb[0].mxu0
      %1296 = vmatprep.mubr.bf16.mxu0 0
      %1297 = vmatmul.mubr.bf16.gmra.mrb[0].mxu0 %v1197
      %v1298 = vpop.f32.mrb[0].mxu0
      %v1299 = vadd.f32 0.0, %v1298
      %v1300 = vpop.f32.mrb[0].mxu0
      %v1301 = vpop.f32.mrb[0].mxu0
      %v1302 = vadd.f32 0.0, %v1301
      %v1303 = vpop.f32.mrb[0].mxu0
      %1304 = vmatprep.mubr.bf16.mxu0 0
      %1305 = vmatmul.mubr.bf16.gmra.mrb[0].mxu0 %v1200
      %v1306 = vpop.f32.mrb[0].mxu0
      %v1307 = vadd.f32 0.0, %v1306
      %v1308 = vpop.f32.mrb[0].mxu0
      %v1309 = vpop.f32.mrb[0].mxu0
      %v1310 = vadd.f32 0.0, %v1309
      %v1311 = vpop.f32.mrb[0].mxu0
      %1312 = vmatprep.mubr.bf16.mxu0 0
      %1313 = vmatmul.mubr.bf16.gmra.mrb[0].mxu0 %v1203
      %v1314 = vpop.f32.mrb[0].mxu0
      %v1315 = vadd.f32 0.0, %v1314
      %v1316 = vpop.f32.mrb[0].mxu0
      %v1317 = vpop.f32.mrb[0].mxu0
      %v1318 = vadd.f32 0.0, %v1317
      %v1319 = vpop.f32.mrb[0].mxu0
      %1320 = vmatprep.mubr.bf16.mxu0 0
      %1321 = vmatmul.mubr.bf16.gmra.mrb[0].mxu0 %v1206
      %v1322 = vpop.f32.mrb[0].mxu0
      %v1323 = vadd.f32 0.0, %v1322
      %v1324 = vpop.f32.mrb[0].mxu0
      %v1325 = vpop.f32.mrb[0].mxu0
      %v1326 = vadd.f32 0.0, %v1325
      %v1327 = vpop.f32.mrb[0].mxu0
      %1328 = vmatprep.mubr.bf16.mxu0 0
      %1329 = vmatmul.mubr.bf16.gmra.mrb[0].mxu0 %v1209
      %v1330 = vpop.f32.mrb[0].mxu0
      %v1331 = vadd.f32 0.0, %v1330
      %v1332 = vpop.f32.mrb[0].mxu0
      %v1333 = vpop.f32.mrb[0].mxu0
      %v1334 = vadd.f32 0.0, %v1333
      %v1335 = vpop.f32.mrb[0].mxu0
      %1336 = vmatprep.mubr.bf16.mxu0 0
      %1337 = vmatmul.mubr.bf16.gmra.mrb[0].mxu0 %v1212
      %v1338 = vpop.f32.mrb[0].mxu0
      %v1339 = vadd.f32 0.0, %v1338
      %v1340 = vpop.f32.mrb[0].mxu0
      %v1341 = vpop.f32.mrb[0].mxu0
      %v1342 = vadd.f32 0.0, %v1341
      %v1343 = vpop.f32.mrb[0].mxu0
      %1344 = vmatprep.mubr.bf16.mxu0 0
      %1345 = vmatmul.mubr.bf16.gmra.mrb[0].mxu0 %v1215
      %v1346 = vpop.f32.mrb[0].mxu0
      %v1347 = vadd.f32 0.0, %v1346
      %v1348 = vpop.f32.mrb[0].mxu0
      %v1349 = vpop.f32.mrb[0].mxu0
      %v1350 = vadd.f32 0.0, %v1349
      %v1351 = vpop.f32.mrb[0].mxu0
      %1352 = vmatprep.mubr.bf16.mxu0 0
      %1353 = vmatmul.mubr.bf16.gmra.mrb[0].mxu0 %v1218
      %v1354 = vpop.f32.mrb[0].mxu0
      %v1355 = vadd.f32 0.0, %v1354
      %v1356 = vpop.f32.mrb[0].mxu0
      %v1357 = vpop.f32.mrb[0].mxu0
      %v1358 = vadd.f32 0.0, %v1357
      %v1359 = vpop.f32.mrb[0].mxu0
      %1360 = vmatprep.mubr.bf16.mxu0 0
      %1361 = vmatmul.mubr.bf16.gmra.mrb[0].mxu0 %v1221
      %v1362 = vpop.f32.mrb[0].mxu0
      %v1363 = vadd.f32 0.0, %v1362
      %v1364 = vpop.f32.mrb[0].mxu0
      %v1365 = vpop.f32.mrb[0].mxu0
      %v1366 = vadd.f32 0.0, %v1365
      %v1367 = vpop.f32.mrb[0].mxu0
      %1368 = vmatprep.mubr.bf16.mxu0 0
      %1369 = vmatmul.mubr.bf16.gmra.mrb[0].mxu0 %v1224
      %v1370 = vpop.f32.mrb[0].mxu0
      %v1371 = vadd.f32 0.0, %v1370
      %v1372 = vpop.f32.mrb[0].mxu0
      %v1373 = vpop.f32.mrb[0].mxu0
      %v1374 = vadd.f32 0.0, %v1373
      %v1375 = vpop.f32.mrb[0].mxu0
      %1376 = vmatprep.mubr.bf16.mxu0 0
      %1377 = vmatmul.mubr.bf16.gmra.mrb[0].mxu0 %v1227
      %v1378 = vpop.f32.mrb[0].mxu0
      %v1379 = vadd.f32 0.0, %v1378
      %v1380 = vpop.f32.mrb[0].mxu0
      %v1381 = vpop.f32.mrb[0].mxu0
      %v1382 = vadd.f32 0.0, %v1381
      %v1383 = vpop.f32.mrb[0].mxu0
      %1384 = vdwg.mxu0
      %v1385 = vadd.f32 %v1028, %v1267
      %v1386 = vadd.f32 %v1031, %v1270
      %v1387 = vadd.f32 %v1036, %v1275
      %v1388 = vadd.f32 %v1039, %v1278
      %v1389 = vadd.f32 %v1044, %v1283
      %v1390 = vadd.f32 %v1047, %v1286
      %v1391 = vadd.f32 %v1052, %v1291
      %v1392 = vadd.f32 %v1055, %v1294
      %v1393 = vadd.f32 %v1060, %v1299
      %v1394 = vadd.f32 %v1063, %v1302
      %v1395 = vadd.f32 %v1068, %v1307
      %v1396 = vadd.f32 %v1071, %v1310
      %v1397 = vadd.f32 %v1076, %v1315
      %v1398 = vadd.f32 %v1079, %v1318
      %v1399 = vadd.f32 %v1084, %v1323
      %v1400 = vadd.f32 %v1087, %v1326
      %v1401 = vadd.f32 %v1092, %v1331
      %v1402 = vadd.f32 %v1095, %v1334
      %v1403 = vadd.f32 %v1100, %v1339
      %v1404 = vadd.f32 %v1103, %v1342
      %v1405 = vadd.f32 %v1108, %v1347
      %v1406 = vadd.f32 %v1111, %v1350
      %v1407 = vadd.f32 %v1116, %v1355
      %v1408 = vadd.f32 %v1119, %v1358
      %v1409 = vadd.f32 %v1124, %v1363
      %v1410 = vadd.f32 %v1127, %v1366
      %v1411 = vadd.f32 %v1132, %v1371
      %v1412 = vadd.f32 %v1135, %v1374
      %v1413 = vadd.f32 %v1140, %v1379
      %v1414 = vadd.f32 %v1143, %v1382
      %v1415 = vld [vmem:[#allocation2 + $0xc] sm:$0xf]
      %v1416 = vld [vmem:[#allocation2 + $0x10] sm:$0xf]
      %v1417 = vld [vmem:[#allocation2 + $0x14] sm:$0xf]
      %v1418 = vld [vmem:[#allocation2 + $0x18] sm:$0xf]
      %v1419 = vld [vmem:[#allocation2 + $0x1c] sm:$0xf]
      %v1420 = vld [vmem:[#allocation2 + $0x20] sm:$0xf]
      %v1421 = vld [vmem:[#allocation2 + $0x24] sm:$0xf]
      %v1422 = vld [vmem:[#allocation2 + $0x28] sm:$0xf]
      %v1423 = vld [vmem:[#allocation2 + $0x2c] sm:$0xf]
      %v1424 = vld [vmem:[#allocation2 + $0x30] sm:$0xf]
      %v1425 = vld [vmem:[#allocation2 + $0x34] sm:$0xf]
      %v1426 = vld [vmem:[#allocation2 + $0x38] sm:$0xf]
      %v1427 = vld [vmem:[#allocation2 + $0x3c] sm:$0xf]
      %v1428 = vld [vmem:[#allocation2 + $0x40] sm:$0xf]
      %v1429 = vld [vmem:[#allocation2 + $0x44] sm:$0xf]
      %v1430 = vld [vmem:[#allocation2 + $0x48] sm:$0xf]
      %v1431 = vld [vmem:[#allocation2 + $0x4c] sm:$0xf]
      %v1432 = vld [vmem:[#allocation2 + $0x50] sm:$0xf]
      %v1433 = vld [vmem:[#allocation2 + $0x54] sm:$0xf]
      %v1434 = vld [vmem:[#allocation2 + $0x58] sm:$0xf]
      %v1435 = vld [vmem:[#allocation2 + $0x5c] sm:$0xf]
      %v1436 = vld [vmem:[#allocation2 + $0x60] sm:$0xf]
      %v1437 = vld [vmem:[#allocation2 + $0x64] sm:$0xf]
      %v1438 = vld [vmem:[#allocation2 + $0x68] sm:$0xf]
      %v1439 = vld [vmem:[#allocation2 + $0x6c] sm:$0xf]
      %v1440 = vld [vmem:[#allocation2 + $0x70] sm:$0xf]
      %v1441 = vld [vmem:[#allocation2 + $0x74] sm:$0xf]
      %v1442 = vld [vmem:[#allocation2 + $0x78] sm:$0xf]
      %v1443 = vld [vmem:[#allocation2 + $0x7c] sm:$0xf]
      %v1444 = vld [vmem:[#allocation2 + $0x80] sm:$0xf]
      %s1445 = scalar_lea.vmem %s2, 12
      %v1446 = vld [vmem:[%s1445] sm:$0xf]
      %v1477 = vunpack.c.l.b16 %v1415
      %v1478 = vunpack.c.l.b16 %v1416
      %v1479 = vunpack.c.l.b16 %v1417
      %v1480 = vunpack.c.l.b16 %v1418
      %v1481 = vunpack.c.l.b16 %v1419
      %v1482 = vunpack.c.l.b16 %v1420
      %v1483 = vunpack.c.l.b16 %v1421
      %v1484 = vunpack.c.l.b16 %v1422
      %v1485 = vunpack.c.l.b16 %v1423
      %v1486 = vunpack.c.l.b16 %v1424
      %v1487 = vunpack.c.l.b16 %v1425
      %v1488 = vunpack.c.l.b16 %v1426
      %v1489 = vunpack.c.l.b16 %v1427
      %v1490 = vunpack.c.l.b16 %v1428
      %v1491 = vunpack.c.l.b16 %v1429
      %v1492 = vunpack.c.l.b16 %v1430
      %v1493 = vunpack.c.l.b16 %v1431
      %v1494 = vunpack.c.l.b16 %v1432
      %v1495 = vunpack.c.l.b16 %v1433
      %v1496 = vunpack.c.l.b16 %v1434
      %v1497 = vunpack.c.l.b16 %v1435
      %v1498 = vunpack.c.l.b16 %v1436
      %v1499 = vunpack.c.l.b16 %v1437
      %v1500 = vunpack.c.l.b16 %v1438
      %v1501 = vunpack.c.l.b16 %v1439
      %v1502 = vunpack.c.l.b16 %v1440
      %v1503 = vunpack.c.l.b16 %v1441
      %v1504 = vunpack.c.l.b16 %v1442
      %v1505 = vunpack.c.l.b16 %v1443
      %v1506 = vunpack.c.l.b16 %v1444
      %v1507 = vpack.c.b16 %v1478, %v1477
      %v1508 = vpack.c.b16 %v1480, %v1479
      %v1509 = vpack.c.b16 %v1482, %v1481
      %v1510 = vpack.c.b16 %v1484, %v1483
      %v1511 = vpack.c.b16 %v1486, %v1485
      %v1512 = vpack.c.b16 %v1488, %v1487
      %v1513 = vpack.c.b16 %v1490, %v1489
      %v1514 = vpack.c.b16 %v1492, %v1491
      %v1515 = vpack.c.b16 %v1494, %v1493
      %v1516 = vpack.c.b16 %v1496, %v1495
      %v1517 = vpack.c.b16 %v1498, %v1497
      %v1518 = vpack.c.b16 %v1500, %v1499
      %v1519 = vpack.c.b16 %v1502, %v1501
      %v1520 = vpack.c.b16 %v1504, %v1503
      %v1521 = vpack.c.b16 %v1506, %v1505
      %v1523 = vsel %vm757, %v1507, 0
      %v1526 = vsel %vm757, %v1508, 0
      %v1529 = vsel %vm757, %v1509, 0
      %v1532 = vsel %vm757, %v1510, 0
      %v1535 = vsel %vm757, %v1511, 0
      %v1538 = vsel %vm757, %v1512, 0
      %v1541 = vsel %vm757, %v1513, 0
      %v1544 = vsel %vm757, %v1514, 0
      %v1547 = vsel %vm757, %v1515, 0
      %v1550 = vsel %vm757, %v1516, 0
      %v1553 = vsel %vm757, %v1517, 0
      %v1556 = vsel %vm757, %v1518, 0
      %v1559 = vsel %vm757, %v1519, 0
      %v1562 = vsel %vm757, %v1520, 0
      %v1565 = vsel %vm757, %v1521, 0
      %v1568 = vsel %vm803, %v1446, 0
      %1570 = vmatprep.subr.bf16.mxu0 0
      %1571 = vmatpush1.bf16.msra.mxu0 %v1568
      %1572 = vmatprep.subr.bf16.mxu0 0
      %1573 = vmatpush1.bf16.msra.mxu0 0
      %1574 = vmatprep.subr.bf16.mxu0 0
      %1575 = vmatpush1.bf16.msra.mxu0 0
      %1576 = vmatprep.subr.bf16.mxu0 0
      %1577 = vmatpush1.bf16.msra.mxu0 0
      %1578 = vmatprep.subr.bf16.mxu0 0
      %1579 = vmatpush1.bf16.msra.mxu0 0
      %1580 = vmatprep.subr.bf16.mxu0 0
      %1581 = vmatpush1.bf16.msra.mxu0 0
      %1582 = vmatprep.subr.bf16.mxu0 0
      %1583 = vmatpush1.bf16.msra.mxu0 0
      %1584 = vmatprep.subr.bf16.mxu0 0
      %1585 = vmatpush1.bf16.msra.mxu0 0
      %1586 = vmatprep.subr.bf16.mxu0 0
      %1587 = vmatpush1.bf16.msra.mxu0 0
      %1588 = vmatprep.subr.bf16.mxu0 0
      %1589 = vmatpush1.bf16.msra.mxu0 0
      %1590 = vmatprep.subr.bf16.mxu0 0
      %1591 = vmatpush1.bf16.msra.mxu0 0
      %1592 = vmatprep.subr.bf16.mxu0 0
      %1593 = vmatpush1.bf16.msra.mxu0 0
      %1594 = vmatprep.subr.bf16.mxu0 0
      %1595 = vmatpush1.bf16.msra.mxu0 0
      %1596 = vmatprep.subr.bf16.mxu0 0
      %1597 = vmatpush1.bf16.msra.mxu0 0
      %1598 = vmatprep.subr.bf16.mxu0 0
      %1599 = vmatpush1.bf16.msra.mxu0 0
      %1600 = vmatprep.subr.bf16.mxu0 0
      %1601 = vmatpush1.bf16.msra.mxu0 0
      %1602 = vmatprep.mubr.bf16.mxu0 0
      %1603 = vmatmul.mubr.bf16.gmra.mrb[0].mxu0 %v1523
      %v1604 = vpop.f32.mrb[0].mxu0
      %v1605 = vadd.f32 0.0, %v1604
      %v1606 = vpop.f32.mrb[0].mxu0
      %v1607 = vpop.f32.mrb[0].mxu0
      %v1608 = vadd.f32 0.0, %v1607
      %v1609 = vpop.f32.mrb[0].mxu0
      %1610 = vmatprep.mubr.bf16.mxu0 0
      %1611 = vmatmul.mubr.bf16.gmra.mrb[0].mxu0 %v1526
      %v1612 = vpop.f32.mrb[0].mxu0
      %v1613 = vadd.f32 0.0, %v1612
      %v1614 = vpop.f32.mrb[0].mxu0
      %v1615 = vpop.f32.mrb[0].mxu0
      %v1616 = vadd.f32 0.0, %v1615
      %v1617 = vpop.f32.mrb[0].mxu0
      %1618 = vmatprep.mubr.bf16.mxu0 0
      %1619 = vmatmul.mubr.bf16.gmra.mrb[0].mxu0 %v1529
      %v1620 = vpop.f32.mrb[0].mxu0
      %v1621 = vadd.f32 0.0, %v1620
      %v1622 = vpop.f32.mrb[0].mxu0
      %v1623 = vpop.f32.mrb[0].mxu0
      %v1624 = vadd.f32 0.0, %v1623
      %v1625 = vpop.f32.mrb[0].mxu0
      %1626 = vmatprep.mubr.bf16.mxu0 0
      %1627 = vmatmul.mubr.bf16.gmra.mrb[0].mxu0 %v1532
      %v1628 = vpop.f32.mrb[0].mxu0
      %v1629 = vadd.f32 0.0, %v1628
      %v1630 = vpop.f32.mrb[0].mxu0
      %v1631 = vpop.f32.mrb[0].mxu0
      %v1632 = vadd.f32 0.0, %v1631
      %v1633 = vpop.f32.mrb[0].mxu0
      %1634 = vmatprep.mubr.bf16.mxu0 0
      %1635 = vmatmul.mubr.bf16.gmra.mrb[0].mxu0 %v1535
      %v1636 = vpop.f32.mrb[0].mxu0
      %v1637 = vadd.f32 0.0, %v1636
      %v1638 = vpop.f32.mrb[0].mxu0
      %v1639 = vpop.f32.mrb[0].mxu0
      %v1640 = vadd.f32 0.0, %v1639
      %v1641 = vpop.f32.mrb[0].mxu0
      %1642 = vmatprep.mubr.bf16.mxu0 0
      %1643 = vmatmul.mubr.bf16.gmra.mrb[0].mxu0 %v1538
      %v1644 = vpop.f32.mrb[0].mxu0
      %v1645 = vadd.f32 0.0, %v1644
      %v1646 = vpop.f32.mrb[0].mxu0
      %v1647 = vpop.f32.mrb[0].mxu0
      %v1648 = vadd.f32 0.0, %v1647
      %v1649 = vpop.f32.mrb[0].mxu0
      %1650 = vmatprep.mubr.bf16.mxu0 0
      %1651 = vmatmul.mubr.bf16.gmra.mrb[0].mxu0 %v1541
      %v1652 = vpop.f32.mrb[0].mxu0
      %v1653 = vadd.f32 0.0, %v1652
      %v1654 = vpop.f32.mrb[0].mxu0
      %v1655 = vpop.f32.mrb[0].mxu0
      %v1656 = vadd.f32 0.0, %v1655
      %v1657 = vpop.f32.mrb[0].mxu0
      %1658 = vmatprep.mubr.bf16.mxu0 0
      %1659 = vmatmul.mubr.bf16.gmra.mrb[0].mxu0 %v1544
      %v1660 = vpop.f32.mrb[0].mxu0
      %v1661 = vadd.f32 0.0, %v1660
      %v1662 = vpop.f32.mrb[0].mxu0
      %v1663 = vpop.f32.mrb[0].mxu0
      %v1664 = vadd.f32 0.0, %v1663
      %v1665 = vpop.f32.mrb[0].mxu0
      %1666 = vmatprep.mubr.bf16.mxu0 0
      %1667 = vmatmul.mubr.bf16.gmra.mrb[0].mxu0 %v1547
      %v1668 = vpop.f32.mrb[0].mxu0
      %v1669 = vadd.f32 0.0, %v1668
      %v1670 = vpop.f32.mrb[0].mxu0
      %v1671 = vpop.f32.mrb[0].mxu0
      %v1672 = vadd.f32 0.0, %v1671
      %v1673 = vpop.f32.mrb[0].mxu0
      %1674 = vmatprep.mubr.bf16.mxu0 0
      %1675 = vmatmul.mubr.bf16.gmra.mrb[0].mxu0 %v1550
      %v1676 = vpop.f32.mrb[0].mxu0
      %v1677 = vadd.f32 0.0, %v1676
      %v1678 = vpop.f32.mrb[0].mxu0
      %v1679 = vpop.f32.mrb[0].mxu0
      %v1680 = vadd.f32 0.0, %v1679
      %v1681 = vpop.f32.mrb[0].mxu0
      %1682 = vmatprep.mubr.bf16.mxu0 0
      %1683 = vmatmul.mubr.bf16.gmra.mrb[0].mxu0 %v1553
      %v1684 = vpop.f32.mrb[0].mxu0
      %v1685 = vadd.f32 0.0, %v1684
      %v1686 = vpop.f32.mrb[0].mxu0
      %v1687 = vpop.f32.mrb[0].mxu0
      %v1688 = vadd.f32 0.0, %v1687
      %v1689 = vpop.f32.mrb[0].mxu0
      %1690 = vmatprep.mubr.bf16.mxu0 0
      %1691 = vmatmul.mubr.bf16.gmra.mrb[0].mxu0 %v1556
      %v1692 = vpop.f32.mrb[0].mxu0
      %v1693 = vadd.f32 0.0, %v1692
      %v1694 = vpop.f32.mrb[0].mxu0
      %v1695 = vpop.f32.mrb[0].mxu0
      %v1696 = vadd.f32 0.0, %v1695
      %v1697 = vpop.f32.mrb[0].mxu0
      %1698 = vmatprep.mubr.bf16.mxu0 0
      %1699 = vmatmul.mubr.bf16.gmra.mrb[0].mxu0 %v1559
      %v1700 = vpop.f32.mrb[0].mxu0
      %v1701 = vadd.f32 0.0, %v1700
      %v1702 = vpop.f32.mrb[0].mxu0
      %v1703 = vpop.f32.mrb[0].mxu0
      %v1704 = vadd.f32 0.0, %v1703
      %v1705 = vpop.f32.mrb[0].mxu0
      %1706 = vmatprep.mubr.bf16.mxu0 0
      %1707 = vmatmul.mubr.bf16.gmra.mrb[0].mxu0 %v1562
      %v1708 = vpop.f32.mrb[0].mxu0
      %v1709 = vadd.f32 0.0, %v1708
      %v1710 = vpop.f32.mrb[0].mxu0
      %v1711 = vpop.f32.mrb[0].mxu0
      %v1712 = vadd.f32 0.0, %v1711
      %v1713 = vpop.f32.mrb[0].mxu0
      %1714 = vmatprep.mubr.bf16.mxu0 0
      %1715 = vmatmul.mubr.bf16.gmra.mrb[0].mxu0 %v1565
      %v1716 = vpop.f32.mrb[0].mxu0
      %v1717 = vadd.f32 0.0, %v1716
      %v1718 = vpop.f32.mrb[0].mxu0
      %v1719 = vpop.f32.mrb[0].mxu0
      %v1720 = vadd.f32 0.0, %v1719
      %v1721 = vpop.f32.mrb[0].mxu0
      %1722 = vdwg.mxu0
      %v1723 = vadd.f32 %v1385, %v1605
      %v1724 = vadd.f32 %v1386, %v1608
      %v1725 = vadd.f32 %v1387, %v1613
      %v1726 = vadd.f32 %v1388, %v1616
      %v1727 = vadd.f32 %v1389, %v1621
      %v1728 = vadd.f32 %v1390, %v1624
      %v1729 = vadd.f32 %v1391, %v1629
      %v1730 = vadd.f32 %v1392, %v1632
      %v1731 = vadd.f32 %v1393, %v1637
      %v1732 = vadd.f32 %v1394, %v1640
      %v1733 = vadd.f32 %v1395, %v1645
      %v1734 = vadd.f32 %v1396, %v1648
      %v1735 = vadd.f32 %v1397, %v1653
      %v1736 = vadd.f32 %v1398, %v1656
      %v1737 = vadd.f32 %v1399, %v1661
      %v1738 = vadd.f32 %v1400, %v1664
      %v1739 = vadd.f32 %v1401, %v1669
      %v1740 = vadd.f32 %v1402, %v1672
      %v1741 = vadd.f32 %v1403, %v1677
      %v1742 = vadd.f32 %v1404, %v1680
      %v1743 = vadd.f32 %v1405, %v1685
      %v1744 = vadd.f32 %v1406, %v1688
      %v1745 = vadd.f32 %v1407, %v1693
      %v1746 = vadd.f32 %v1408, %v1696
      %v1747 = vadd.f32 %v1409, %v1701
      %v1748 = vadd.f32 %v1410, %v1704
      %v1749 = vadd.f32 %v1411, %v1709
      %v1750 = vadd.f32 %v1412, %v1712
      %v1751 = vadd.f32 %v1413, %v1717
      %v1752 = vadd.f32 %v1414, %v1720
      %v1753 = vld [vmem:[#allocation2 + $0xc] sm:$0xf]
      %v1754 = vld [vmem:[#allocation2 + $0x10] sm:$0xf]
      %v1755 = vld [vmem:[#allocation2 + $0x14] sm:$0xf]
      %v1756 = vld [vmem:[#allocation2 + $0x18] sm:$0xf]
      %v1757 = vld [vmem:[#allocation2 + $0x1c] sm:$0xf]
      %v1758 = vld [vmem:[#allocation2 + $0x20] sm:$0xf]
      %v1759 = vld [vmem:[#allocation2 + $0x24] sm:$0xf]
      %v1760 = vld [vmem:[#allocation2 + $0x28] sm:$0xf]
      %v1761 = vld [vmem:[#allocation2 + $0x2c] sm:$0xf]
      %v1762 = vld [vmem:[#allocation2 + $0x30] sm:$0xf]
      %v1763 = vld [vmem:[#allocation2 + $0x34] sm:$0xf]
      %v1764 = vld [vmem:[#allocation2 + $0x38] sm:$0xf]
      %v1765 = vld [vmem:[#allocation2 + $0x3c] sm:$0xf]
      %v1766 = vld [vmem:[#allocation2 + $0x40] sm:$0xf]
      %v1767 = vld [vmem:[#allocation2 + $0x44] sm:$0xf]
      %v1768 = vld [vmem:[#allocation2 + $0x48] sm:$0xf]
      %v1769 = vld [vmem:[#allocation2 + $0x4c] sm:$0xf]
      %v1770 = vld [vmem:[#allocation2 + $0x50] sm:$0xf]
      %v1771 = vld [vmem:[#allocation2 + $0x54] sm:$0xf]
      %v1772 = vld [vmem:[#allocation2 + $0x58] sm:$0xf]
      %v1773 = vld [vmem:[#allocation2 + $0x5c] sm:$0xf]
      %v1774 = vld [vmem:[#allocation2 + $0x60] sm:$0xf]
      %v1775 = vld [vmem:[#allocation2 + $0x64] sm:$0xf]
      %v1776 = vld [vmem:[#allocation2 + $0x68] sm:$0xf]
      %v1777 = vld [vmem:[#allocation2 + $0x6c] sm:$0xf]
      %v1778 = vld [vmem:[#allocation2 + $0x70] sm:$0xf]
      %v1779 = vld [vmem:[#allocation2 + $0x74] sm:$0xf]
      %v1780 = vld [vmem:[#allocation2 + $0x78] sm:$0xf]
      %v1781 = vld [vmem:[#allocation2 + $0x7c] sm:$0xf]
      %v1782 = vld [vmem:[#allocation2 + $0x80] sm:$0xf]
      %v1783 = vld [vmem:[#allocation2 + $0x84] sm:$0x1]
      %s1784 = scalar_lea.vmem %s2, 16
      %v1785 = vld [vmem:[%s1784] sm:$0xf]
      %v1817 = vunpack.c.l.b16 %v1753
      %v1818 = vunpack.c.l.b16 %v1754
      %v1819 = vunpack.c.l.b16 %v1755
      %v1820 = vunpack.c.l.b16 %v1756
      %v1821 = vunpack.c.l.b16 %v1757
      %v1822 = vunpack.c.l.b16 %v1758
      %v1823 = vunpack.c.l.b16 %v1759
      %v1824 = vunpack.c.l.b16 %v1760
      %v1825 = vunpack.c.l.b16 %v1761
      %v1826 = vunpack.c.l.b16 %v1762
      %v1827 = vunpack.c.l.b16 %v1763
      %v1828 = vunpack.c.l.b16 %v1764
      %v1829 = vunpack.c.l.b16 %v1765
      %v1830 = vunpack.c.l.b16 %v1766
      %v1831 = vunpack.c.l.b16 %v1767
      %v1832 = vunpack.c.l.b16 %v1768
      %v1833 = vunpack.c.l.b16 %v1769
      %v1834 = vunpack.c.l.b16 %v1770
      %v1835 = vunpack.c.l.b16 %v1771
      %v1836 = vunpack.c.l.b16 %v1772
      %v1837 = vunpack.c.l.b16 %v1773
      %v1838 = vunpack.c.l.b16 %v1774
      %v1839 = vunpack.c.l.b16 %v1775
      %v1840 = vunpack.c.l.b16 %v1776
      %v1841 = vunpack.c.l.b16 %v1777
      %v1842 = vunpack.c.l.b16 %v1778
      %v1843 = vunpack.c.l.b16 %v1779
      %v1844 = vunpack.c.l.b16 %v1780
      %v1845 = vunpack.c.l.b16 %v1781
      %v1846 = vunpack.c.l.b16 %v1782
      %v1847 = vunpack.c.l.b16 %v1783
      %v1848 = vpack.c.b16 %v1818, %v1817
      %v1849 = vpack.c.b16 %v1820, %v1819
      %v1850 = vpack.c.b16 %v1822, %v1821
      %v1851 = vpack.c.b16 %v1824, %v1823
      %v1852 = vpack.c.b16 %v1826, %v1825
      %v1853 = vpack.c.b16 %v1828, %v1827
      %v1854 = vpack.c.b16 %v1830, %v1829
      %v1855 = vpack.c.b16 %v1832, %v1831
      %v1856 = vpack.c.b16 %v1834, %v1833
      %v1857 = vpack.c.b16 %v1836, %v1835
      %v1858 = vpack.c.b16 %v1838, %v1837
      %v1859 = vpack.c.b16 %v1840, %v1839
      %v1860 = vpack.c.b16 %v1842, %v1841
      %v1861 = vpack.c.b16 %v1844, %v1843
      %v1862 = vpack.c.b16 %v1846, %v1845
      %v1863 = vpack.c.b16 %v1847, %v1847
      %v1865 = vshrl.u32 %v1848, 16
      %v1867 = vshll.u32 %v1848, 16
      %v1869 = vrot.slane %v1867, 1
      %v1870 = vor.u32 %v1865, %v1869
      %v1872 = vshll.u32 %v1849, 16
      %v1874 = vrot.slane %v1872, 1
      %v1875 = vsel %vm632, %v1870, %v1874
      %v1876 = vshrl.u32 %v1849, 16
      %v1878 = vor.u32 %v1876, %v1874
      %v1880 = vshll.u32 %v1850, 16
      %v1882 = vrot.slane %v1880, 1
      %v1883 = vsel %vm632, %v1878, %v1882
      %v1884 = vshrl.u32 %v1850, 16
      %v1886 = vor.u32 %v1884, %v1882
      %v1888 = vshll.u32 %v1851, 16
      %v1890 = vrot.slane %v1888, 1
      %v1891 = vsel %vm632, %v1886, %v1890
      %v1892 = vshrl.u32 %v1851, 16
      %v1894 = vor.u32 %v1892, %v1890
      %v1896 = vshll.u32 %v1852, 16
      %v1898 = vrot.slane %v1896, 1
      %v1899 = vsel %vm632, %v1894, %v1898
      %v1900 = vshrl.u32 %v1852, 16
      %v1902 = vor.u32 %v1900, %v1898
      %v1904 = vshll.u32 %v1853, 16
      %v1906 = vrot.slane %v1904, 1
      %v1907 = vsel %vm632, %v1902, %v1906
      %v1908 = vshrl.u32 %v1853, 16
      %v1910 = vor.u32 %v1908, %v1906
      %v1912 = vshll.u32 %v1854, 16
      %v1914 = vrot.slane %v1912, 1
      %v1915 = vsel %vm632, %v1910, %v1914
      %v1916 = vshrl.u32 %v1854, 16
      %v1918 = vor.u32 %v1916, %v1914
      %v1920 = vshll.u32 %v1855, 16
      %v1922 = vrot.slane %v1920, 1
      %v1923 = vsel %vm632, %v1918, %v1922
      %v1924 = vshrl.u32 %v1855, 16
      %v1926 = vor.u32 %v1924, %v1922
      %v1928 = vshll.u32 %v1856, 16
      %v1930 = vrot.slane %v1928, 1
      %v1931 = vsel %vm632, %v1926, %v1930
      %v1932 = vshrl.u32 %v1856, 16
      %v1934 = vor.u32 %v1932, %v1930
      %v1936 = vshll.u32 %v1857, 16
      %v1938 = vrot.slane %v1936, 1
      %v1939 = vsel %vm632, %v1934, %v1938
      %v1940 = vshrl.u32 %v1857, 16
      %v1942 = vor.u32 %v1940, %v1938
      %v1944 = vshll.u32 %v1858, 16
      %v1946 = vrot.slane %v1944, 1
      %v1947 = vsel %vm632, %v1942, %v1946
      %v1948 = vshrl.u32 %v1858, 16
      %v1950 = vor.u32 %v1948, %v1946
      %v1952 = vshll.u32 %v1859, 16
      %v1954 = vrot.slane %v1952, 1
      %v1955 = vsel %vm632, %v1950, %v1954
      %v1956 = vshrl.u32 %v1859, 16
      %v1958 = vor.u32 %v1956, %v1954
      %v1960 = vshll.u32 %v1860, 16
      %v1962 = vrot.slane %v1960, 1
      %v1963 = vsel %vm632, %v1958, %v1962
      %v1964 = vshrl.u32 %v1860, 16
      %v1966 = vor.u32 %v1964, %v1962
      %v1968 = vshll.u32 %v1861, 16
      %v1970 = vrot.slane %v1968, 1
      %v1971 = vsel %vm632, %v1966, %v1970
      %v1972 = vshrl.u32 %v1861, 16
      %v1974 = vor.u32 %v1972, %v1970
      %v1976 = vshll.u32 %v1862, 16
      %v1978 = vrot.slane %v1976, 1
      %v1979 = vsel %vm632, %v1974, %v1978
      %v1980 = vshrl.u32 %v1862, 16
      %v1982 = vor.u32 %v1980, %v1978
      %v1984 = vshll.u32 %v1863, 16
      %v1986 = vrot.slane %v1984, 1
      %v1987 = vsel %vm632, %v1982, %v1986
      %v1989 = vsel %vm757, %v1875, 0
      %v1992 = vsel %vm757, %v1883, 0
      %v1995 = vsel %vm757, %v1891, 0
      %v1998 = vsel %vm757, %v1899, 0
      %v2001 = vsel %vm757, %v1907, 0
      %v2004 = vsel %vm757, %v1915, 0
      %v2007 = vsel %vm757, %v1923, 0
      %v2010 = vsel %vm757, %v1931, 0
      %v2013 = vsel %vm757, %v1939, 0
      %v2016 = vsel %vm757, %v1947, 0
      %v2019 = vsel %vm757, %v1955, 0
      %v2022 = vsel %vm757, %v1963, 0
      %v2025 = vsel %vm757, %v1971, 0
      %v2028 = vsel %vm757, %v1979, 0
      %v2031 = vsel %vm757, %v1987, 0
      %v2034 = vsel %vm803, %v1785, 0
      %2036 = vmatprep.subr.bf16.mxu0 0
      %2037 = vmatpush1.bf16.msra.mxu0 %v2034
      %2038 = vmatprep.subr.bf16.mxu0 0
      %2039 = vmatpush1.bf16.msra.mxu0 0
      %2040 = vmatprep.subr.bf16.mxu0 0
      %2041 = vmatpush1.bf16.msra.mxu0 0
      %2042 = vmatprep.subr.bf16.mxu0 0
      %2043 = vmatpush1.bf16.msra.mxu0 0
      %2044 = vmatprep.subr.bf16.mxu0 0
      %2045 = vmatpush1.bf16.msra.mxu0 0
      %2046 = vmatprep.subr.bf16.mxu0 0
      %2047 = vmatpush1.bf16.msra.mxu0 0
      %2048 = vmatprep.subr.bf16.mxu0 0
      %2049 = vmatpush1.bf16.msra.mxu0 0
      %2050 = vmatprep.subr.bf16.mxu0 0
      %2051 = vmatpush1.bf16.msra.mxu0 0
      %2052 = vmatprep.subr.bf16.mxu0 0
      %2053 = vmatpush1.bf16.msra.mxu0 0
      %2054 = vmatprep.subr.bf16.mxu0 0
      %2055 = vmatpush1.bf16.msra.mxu0 0
      %2056 = vmatprep.subr.bf16.mxu0 0
      %2057 = vmatpush1.bf16.msra.mxu0 0
      %2058 = vmatprep.subr.bf16.mxu0 0
      %2059 = vmatpush1.bf16.msra.mxu0 0
      %2060 = vmatprep.subr.bf16.mxu0 0
      %2061 = vmatpush1.bf16.msra.mxu0 0
      %2062 = vmatprep.subr.bf16.mxu0 0
      %2063 = vmatpush1.bf16.msra.mxu0 0
      %2064 = vmatprep.subr.bf16.mxu0 0
      %2065 = vmatpush1.bf16.msra.mxu0 0
      %2066 = vmatprep.subr.bf16.mxu0 0
      %2067 = vmatpush1.bf16.msra.mxu0 0
      %2068 = vmatprep.mubr.bf16.mxu0 0
      %2069 = vmatmul.mubr.bf16.gmra.mrb[0].mxu0 %v1989
      %v2070 = vpop.f32.mrb[0].mxu0
      %v2071 = vadd.f32 0.0, %v2070
      %v2072 = vpop.f32.mrb[0].mxu0
      %v2073 = vpop.f32.mrb[0].mxu0
      %v2074 = vadd.f32 0.0, %v2073
      %v2075 = vpop.f32.mrb[0].mxu0
      %2076 = vmatprep.mubr.bf16.mxu0 0
      %2077 = vmatmul.mubr.bf16.gmra.mrb[0].mxu0 %v1992
      %v2078 = vpop.f32.mrb[0].mxu0
      %v2079 = vadd.f32 0.0, %v2078
      %v2080 = vpop.f32.mrb[0].mxu0
      %v2081 = vpop.f32.mrb[0].mxu0
      %v2082 = vadd.f32 0.0, %v2081
      %v2083 = vpop.f32.mrb[0].mxu0
      %2084 = vmatprep.mubr.bf16.mxu0 0
      %2085 = vmatmul.mubr.bf16.gmra.mrb[0].mxu0 %v1995
      %v2086 = vpop.f32.mrb[0].mxu0
      %v2087 = vadd.f32 0.0, %v2086
      %v2088 = vpop.f32.mrb[0].mxu0
      %v2089 = vpop.f32.mrb[0].mxu0
      %v2090 = vadd.f32 0.0, %v2089
      %v2091 = vpop.f32.mrb[0].mxu0
      %2092 = vmatprep.mubr.bf16.mxu0 0
      %2093 = vmatmul.mubr.bf16.gmra.mrb[0].mxu0 %v1998
      %v2094 = vpop.f32.mrb[0].mxu0
      %v2095 = vadd.f32 0.0, %v2094
      %v2096 = vpop.f32.mrb[0].mxu0
      %v2097 = vpop.f32.mrb[0].mxu0
      %v2098 = vadd.f32 0.0, %v2097
      %v2099 = vpop.f32.mrb[0].mxu0
      %2100 = vmatprep.mubr.bf16.mxu0 0
      %2101 = vmatmul.mubr.bf16.gmra.mrb[0].mxu0 %v2001
      %v2102 = vpop.f32.mrb[0].mxu0
      %v2103 = vadd.f32 0.0, %v2102
      %v2104 = vpop.f32.mrb[0].mxu0
      %v2105 = vpop.f32.mrb[0].mxu0
      %v2106 = vadd.f32 0.0, %v2105
      %v2107 = vpop.f32.mrb[0].mxu0
      %2108 = vmatprep.mubr.bf16.mxu0 0
      %2109 = vmatmul.mubr.bf16.gmra.mrb[0].mxu0 %v2004
      %v2110 = vpop.f32.mrb[0].mxu0
      %v2111 = vadd.f32 0.0, %v2110
      %v2112 = vpop.f32.mrb[0].mxu0
      %v2113 = vpop.f32.mrb[0].mxu0
      %v2114 = vadd.f32 0.0, %v2113
      %v2115 = vpop.f32.mrb[0].mxu0
      %2116 = vmatprep.mubr.bf16.mxu0 0
      %2117 = vmatmul.mubr.bf16.gmra.mrb[0].mxu0 %v2007
      %v2118 = vpop.f32.mrb[0].mxu0
      %v2119 = vadd.f32 0.0, %v2118
      %v2120 = vpop.f32.mrb[0].mxu0
      %v2121 = vpop.f32.mrb[0].mxu0
      %v2122 = vadd.f32 0.0, %v2121
      %v2123 = vpop.f32.mrb[0].mxu0
      %2124 = vmatprep.mubr.bf16.mxu0 0
      %2125 = vmatmul.mubr.bf16.gmra.mrb[0].mxu0 %v2010
      %v2126 = vpop.f32.mrb[0].mxu0
      %v2127 = vadd.f32 0.0, %v2126
      %v2128 = vpop.f32.mrb[0].mxu0
      %v2129 = vpop.f32.mrb[0].mxu0
      %v2130 = vadd.f32 0.0, %v2129
      %v2131 = vpop.f32.mrb[0].mxu0
      %2132 = vmatprep.mubr.bf16.mxu0 0
      %2133 = vmatmul.mubr.bf16.gmra.mrb[0].mxu0 %v2013
      %v2134 = vpop.f32.mrb[0].mxu0
      %v2135 = vadd.f32 0.0, %v2134
      %v2136 = vpop.f32.mrb[0].mxu0
      %v2137 = vpop.f32.mrb[0].mxu0
      %v2138 = vadd.f32 0.0, %v2137
      %v2139 = vpop.f32.mrb[0].mxu0
      %2140 = vmatprep.mubr.bf16.mxu0 0
      %2141 = vmatmul.mubr.bf16.gmra.mrb[0].mxu0 %v2016
      %v2142 = vpop.f32.mrb[0].mxu0
      %v2143 = vadd.f32 0.0, %v2142
      %v2144 = vpop.f32.mrb[0].mxu0
      %v2145 = vpop.f32.mrb[0].mxu0
      %v2146 = vadd.f32 0.0, %v2145
      %v2147 = vpop.f32.mrb[0].mxu0
      %2148 = vmatprep.mubr.bf16.mxu0 0
      %2149 = vmatmul.mubr.bf16.gmra.mrb[0].mxu0 %v2019
      %v2150 = vpop.f32.mrb[0].mxu0
      %v2151 = vadd.f32 0.0, %v2150
      %v2152 = vpop.f32.mrb[0].mxu0
      %v2153 = vpop.f32.mrb[0].mxu0
      %v2154 = vadd.f32 0.0, %v2153
      %v2155 = vpop.f32.mrb[0].mxu0
      %2156 = vmatprep.mubr.bf16.mxu0 0
      %2157 = vmatmul.mubr.bf16.gmra.mrb[0].mxu0 %v2022
      %v2158 = vpop.f32.mrb[0].mxu0
      %v2159 = vadd.f32 0.0, %v2158
      %v2160 = vpop.f32.mrb[0].mxu0
      %v2161 = vpop.f32.mrb[0].mxu0
      %v2162 = vadd.f32 0.0, %v2161
      %v2163 = vpop.f32.mrb[0].mxu0
      %2164 = vmatprep.mubr.bf16.mxu0 0
      %2165 = vmatmul.mubr.bf16.gmra.mrb[0].mxu0 %v2025
      %v2166 = vpop.f32.mrb[0].mxu0
      %v2167 = vadd.f32 0.0, %v2166
      %v2168 = vpop.f32.mrb[0].mxu0
      %v2169 = vpop.f32.mrb[0].mxu0
      %v2170 = vadd.f32 0.0, %v2169
      %v2171 = vpop.f32.mrb[0].mxu0
      %2172 = vmatprep.mubr.bf16.mxu0 0
      %2173 = vmatmul.mubr.bf16.gmra.mrb[0].mxu0 %v2028
      %v2174 = vpop.f32.mrb[0].mxu0
      %v2175 = vadd.f32 0.0, %v2174
      %v2176 = vpop.f32.mrb[0].mxu0
      %v2177 = vpop.f32.mrb[0].mxu0
      %v2178 = vadd.f32 0.0, %v2177
      %v2179 = vpop.f32.mrb[0].mxu0
      %2180 = vmatprep.mubr.bf16.mxu0 0
      %2181 = vmatmul.mubr.bf16.gmra.mrb[0].mxu0 %v2031
      %v2182 = vpop.f32.mrb[0].mxu0
      %v2183 = vadd.f32 0.0, %v2182
      %v2184 = vpop.f32.mrb[0].mxu0
      %v2185 = vpop.f32.mrb[0].mxu0
      %v2186 = vadd.f32 0.0, %v2185
      %v2187 = vpop.f32.mrb[0].mxu0
      %2188 = vdwg.mxu0
      %v2189 = vadd.f32 %v1723, %v2071
      %v2190 = vadd.f32 %v1724, %v2074
      %v2191 = vadd.f32 %v1725, %v2079
      %v2192 = vadd.f32 %v1726, %v2082
      %v2193 = vadd.f32 %v1727, %v2087
      %v2194 = vadd.f32 %v1728, %v2090
      %v2195 = vadd.f32 %v1729, %v2095
      %v2196 = vadd.f32 %v1730, %v2098
      %v2197 = vadd.f32 %v1731, %v2103
      %v2198 = vadd.f32 %v1732, %v2106
      %v2199 = vadd.f32 %v1733, %v2111
      %v2200 = vadd.f32 %v1734, %v2114
      %v2201 = vadd.f32 %v1735, %v2119
      %v2202 = vadd.f32 %v1736, %v2122
      %v2203 = vadd.f32 %v1737, %v2127
      %v2204 = vadd.f32 %v1738, %v2130
      %v2205 = vadd.f32 %v1739, %v2135
      %v2206 = vadd.f32 %v1740, %v2138
      %v2207 = vadd.f32 %v1741, %v2143
      %v2208 = vadd.f32 %v1742, %v2146
      %v2209 = vadd.f32 %v1743, %v2151
      %v2210 = vadd.f32 %v1744, %v2154
      %v2211 = vadd.f32 %v1745, %v2159
      %v2212 = vadd.f32 %v1746, %v2162
      %v2213 = vadd.f32 %v1747, %v2167
      %v2214 = vadd.f32 %v1748, %v2170
      %v2215 = vadd.f32 %v1749, %v2175
      %v2216 = vadd.f32 %v1750, %v2178
      %v2217 = vadd.f32 %v1751, %v2183
      %v2218 = vadd.f32 %v1752, %v2186
      %v2219 = vld [vmem:[#allocation2 + $0xc] sm:$0xe]
      %s2220 = scalar_lea.vmem %s2, 20
      %v2221 = vld [vmem:[%s2220] sm:$0xf]
      %v2223 = vunpack.c.l.b16 %v2219
      %v2224 = vpack.c.b16 %v1818, %v2223
      %v2225 = vrot.slane %v2224, 1
      %v2226 = vrot.slane %v1849, 1
      %v2227 = vsel %vm1152, %v2225, %v2226
      %v2228 = vrot.slane %v1850, 1
      %v2229 = vsel %vm1152, %v2226, %v2228
      %v2230 = vrot.slane %v1851, 1
      %v2231 = vsel %vm1152, %v2228, %v2230
      %v2232 = vrot.slane %v1852, 1
      %v2233 = vsel %vm1152, %v2230, %v2232
      %v2234 = vrot.slane %v1853, 1
      %v2235 = vsel %vm1152, %v2232, %v2234
      %v2236 = vrot.slane %v1854, 1
      %v2237 = vsel %vm1152, %v2234, %v2236
      %v2238 = vrot.slane %v1855, 1
      %v2239 = vsel %vm1152, %v2236, %v2238
      %v2240 = vrot.slane %v1856, 1
      %v2241 = vsel %vm1152, %v2238, %v2240
      %v2242 = vrot.slane %v1857, 1
      %v2243 = vsel %vm1152, %v2240, %v2242
      %v2244 = vrot.slane %v1858, 1
      %v2245 = vsel %vm1152, %v2242, %v2244
      %v2246 = vrot.slane %v1859, 1
      %v2247 = vsel %vm1152, %v2244, %v2246
      %v2248 = vrot.slane %v1860, 1
      %v2249 = vsel %vm1152, %v2246, %v2248
      %v2250 = vrot.slane %v1861, 1
      %v2251 = vsel %vm1152, %v2248, %v2250
      %v2252 = vrot.slane %v1862, 1
      %v2253 = vsel %vm1152, %v2250, %v2252
      %v2254 = vrot.slane %v1863, 1
      %v2255 = vsel %vm1152, %v2252, %v2254
      %v2257 = vsel %vm757, %v2227, 0
      %v2260 = vsel %vm757, %v2229, 0
      %v2263 = vsel %vm757, %v2231, 0
      %v2266 = vsel %vm757, %v2233, 0
      %v2269 = vsel %vm757, %v2235, 0
      %v2272 = vsel %vm757, %v2237, 0
      %v2275 = vsel %vm757, %v2239, 0
      %v2278 = vsel %vm757, %v2241, 0
      %v2281 = vsel %vm757, %v2243, 0
      %v2284 = vsel %vm757, %v2245, 0
      %v2287 = vsel %vm757, %v2247, 0
      %v2290 = vsel %vm757, %v2249, 0
      %v2293 = vsel %vm757, %v2251, 0
      %v2296 = vsel %vm757, %v2253, 0
      %v2299 = vsel %vm757, %v2255, 0
      %v2302 = vsel %vm803, %v2221, 0
      %2304 = vmatprep.subr.bf16.mxu0 0
      %2305 = vmatpush1.bf16.msra.mxu0 %v2302
      %2306 = vmatprep.subr.bf16.mxu0 0
      %2307 = vmatpush1.bf16.msra.mxu0 0
      %2308 = vmatprep.subr.bf16.mxu0 0
      %2309 = vmatpush1.bf16.msra.mxu0 0
      %2310 = vmatprep.subr.bf16.mxu0 0
      %2311 = vmatpush1.bf16.msra.mxu0 0
      %2312 = vmatprep.subr.bf16.mxu0 0
      %2313 = vmatpush1.bf16.msra.mxu0 0
      %2314 = vmatprep.subr.bf16.mxu0 0
      %2315 = vmatpush1.bf16.msra.mxu0 0
      %2316 = vmatprep.subr.bf16.mxu0 0
      %2317 = vmatpush1.bf16.msra.mxu0 0
      %2318 = vmatprep.subr.bf16.mxu0 0
      %2319 = vmatpush1.bf16.msra.mxu0 0
      %2320 = vmatprep.subr.bf16.mxu0 0
      %2321 = vmatpush1.bf16.msra.mxu0 0
      %2322 = vmatprep.subr.bf16.mxu0 0
      %2323 = vmatpush1.bf16.msra.mxu0 0
      %2324 = vmatprep.subr.bf16.mxu0 0
      %2325 = vmatpush1.bf16.msra.mxu0 0
      %2326 = vmatprep.subr.bf16.mxu0 0
      %2327 = vmatpush1.bf16.msra.mxu0 0
      %2328 = vmatprep.subr.bf16.mxu0 0
      %2329 = vmatpush1.bf16.msra.mxu0 0
      %2330 = vmatprep.subr.bf16.mxu0 0
      %2331 = vmatpush1.bf16.msra.mxu0 0
      %2332 = vmatprep.subr.bf16.mxu0 0
      %2333 = vmatpush1.bf16.msra.mxu0 0
      %2334 = vmatprep.subr.bf16.mxu0 0
      %2335 = vmatpush1.bf16.msra.mxu0 0
      %2336 = vmatprep.mubr.bf16.mxu0 0
      %2337 = vmatmul.mubr.bf16.gmra.mrb[0].mxu0 %v2257
      %v2338 = vpop.f32.mrb[0].mxu0
      %v2339 = vadd.f32 0.0, %v2338
      %v2340 = vpop.f32.mrb[0].mxu0
      %v2341 = vpop.f32.mrb[0].mxu0
      %v2342 = vadd.f32 0.0, %v2341
      %v2343 = vpop.f32.mrb[0].mxu0
      %2344 = vmatprep.mubr.bf16.mxu0 0
      %2345 = vmatmul.mubr.bf16.gmra.mrb[0].mxu0 %v2260
      %v2346 = vpop.f32.mrb[0].mxu0
      %v2347 = vadd.f32 0.0, %v2346
      %v2348 = vpop.f32.mrb[0].mxu0
      %v2349 = vpop.f32.mrb[0].mxu0
      %v2350 = vadd.f32 0.0, %v2349
      %v2351 = vpop.f32.mrb[0].mxu0
      %2352 = vmatprep.mubr.bf16.mxu0 0
      %2353 = vmatmul.mubr.bf16.gmra.mrb[0].mxu0 %v2263
      %v2354 = vpop.f32.mrb[0].mxu0
      %v2355 = vadd.f32 0.0, %v2354
      %v2356 = vpop.f32.mrb[0].mxu0
      %v2357 = vpop.f32.mrb[0].mxu0
      %v2358 = vadd.f32 0.0, %v2357
      %v2359 = vpop.f32.mrb[0].mxu0
      %2360 = vmatprep.mubr.bf16.mxu0 0
      %2361 = vmatmul.mubr.bf16.gmra.mrb[0].mxu0 %v2266
      %v2362 = vpop.f32.mrb[0].mxu0
      %v2363 = vadd.f32 0.0, %v2362
      %v2364 = vpop.f32.mrb[0].mxu0
      %v2365 = vpop.f32.mrb[0].mxu0
      %v2366 = vadd.f32 0.0, %v2365
      %v2367 = vpop.f32.mrb[0].mxu0
      %2368 = vmatprep.mubr.bf16.mxu0 0
      %2369 = vmatmul.mubr.bf16.gmra.mrb[0].mxu0 %v2269
      %v2370 = vpop.f32.mrb[0].mxu0
      %v2371 = vadd.f32 0.0, %v2370
      %v2372 = vpop.f32.mrb[0].mxu0
      %v2373 = vpop.f32.mrb[0].mxu0
      %v2374 = vadd.f32 0.0, %v2373
      %v2375 = vpop.f32.mrb[0].mxu0
      %2376 = vmatprep.mubr.bf16.mxu0 0
      %2377 = vmatmul.mubr.bf16.gmra.mrb[0].mxu0 %v2272
      %v2378 = vpop.f32.mrb[0].mxu0
      %v2379 = vadd.f32 0.0, %v2378
      %v2380 = vpop.f32.mrb[0].mxu0
      %v2381 = vpop.f32.mrb[0].mxu0
      %v2382 = vadd.f32 0.0, %v2381
      %v2383 = vpop.f32.mrb[0].mxu0
      %2384 = vmatprep.mubr.bf16.mxu0 0
      %2385 = vmatmul.mubr.bf16.gmra.mrb[0].mxu0 %v2275
      %v2386 = vpop.f32.mrb[0].mxu0
      %v2387 = vadd.f32 0.0, %v2386
      %v2388 = vpop.f32.mrb[0].mxu0
      %v2389 = vpop.f32.mrb[0].mxu0
      %v2390 = vadd.f32 0.0, %v2389
      %v2391 = vpop.f32.mrb[0].mxu0
      %2392 = vmatprep.mubr.bf16.mxu0 0
      %2393 = vmatmul.mubr.bf16.gmra.mrb[0].mxu0 %v2278
      %v2394 = vpop.f32.mrb[0].mxu0
      %v2395 = vadd.f32 0.0, %v2394
      %v2396 = vpop.f32.mrb[0].mxu0
      %v2397 = vpop.f32.mrb[0].mxu0
      %v2398 = vadd.f32 0.0, %v2397
      %v2399 = vpop.f32.mrb[0].mxu0
      %2400 = vmatprep.mubr.bf16.mxu0 0
      %2401 = vmatmul.mubr.bf16.gmra.mrb[0].mxu0 %v2281
      %v2402 = vpop.f32.mrb[0].mxu0
      %v2403 = vadd.f32 0.0, %v2402
      %v2404 = vpop.f32.mrb[0].mxu0
      %v2405 = vpop.f32.mrb[0].mxu0
      %v2406 = vadd.f32 0.0, %v2405
      %v2407 = vpop.f32.mrb[0].mxu0
      %2408 = vmatprep.mubr.bf16.mxu0 0
      %2409 = vmatmul.mubr.bf16.gmra.mrb[0].mxu0 %v2284
      %v2410 = vpop.f32.mrb[0].mxu0
      %v2411 = vadd.f32 0.0, %v2410
      %v2412 = vpop.f32.mrb[0].mxu0
      %v2413 = vpop.f32.mrb[0].mxu0
      %v2414 = vadd.f32 0.0, %v2413
      %v2415 = vpop.f32.mrb[0].mxu0
      %2416 = vmatprep.mubr.bf16.mxu0 0
      %2417 = vmatmul.mubr.bf16.gmra.mrb[0].mxu0 %v2287
      %v2418 = vpop.f32.mrb[0].mxu0
      %v2419 = vadd.f32 0.0, %v2418
      %v2420 = vpop.f32.mrb[0].mxu0
      %v2421 = vpop.f32.mrb[0].mxu0
      %v2422 = vadd.f32 0.0, %v2421
      %v2423 = vpop.f32.mrb[0].mxu0
      %2424 = vmatprep.mubr.bf16.mxu0 0
      %2425 = vmatmul.mubr.bf16.gmra.mrb[0].mxu0 %v2290
      %v2426 = vpop.f32.mrb[0].mxu0
      %v2427 = vadd.f32 0.0, %v2426
      %v2428 = vpop.f32.mrb[0].mxu0
      %v2429 = vpop.f32.mrb[0].mxu0
      %v2430 = vadd.f32 0.0, %v2429
      %v2431 = vpop.f32.mrb[0].mxu0
      %2432 = vmatprep.mubr.bf16.mxu0 0
      %2433 = vmatmul.mubr.bf16.gmra.mrb[0].mxu0 %v2293
      %v2434 = vpop.f32.mrb[0].mxu0
      %v2435 = vadd.f32 0.0, %v2434
      %v2436 = vpop.f32.mrb[0].mxu0
      %v2437 = vpop.f32.mrb[0].mxu0
      %v2438 = vadd.f32 0.0, %v2437
      %v2439 = vpop.f32.mrb[0].mxu0
      %2440 = vmatprep.mubr.bf16.mxu0 0
      %2441 = vmatmul.mubr.bf16.gmra.mrb[0].mxu0 %v2296
      %v2442 = vpop.f32.mrb[0].mxu0
      %v2443 = vadd.f32 0.0, %v2442
      %v2444 = vpop.f32.mrb[0].mxu0
      %v2445 = vpop.f32.mrb[0].mxu0
      %v2446 = vadd.f32 0.0, %v2445
      %v2447 = vpop.f32.mrb[0].mxu0
      %2448 = vmatprep.mubr.bf16.mxu0 0
      %2449 = vmatmul.mubr.bf16.gmra.mrb[0].mxu0 %v2299
      %v2450 = vpop.f32.mrb[0].mxu0
      %v2451 = vadd.f32 0.0, %v2450
      %v2452 = vpop.f32.mrb[0].mxu0
      %v2453 = vpop.f32.mrb[0].mxu0
      %v2454 = vadd.f32 0.0, %v2453
      %v2455 = vpop.f32.mrb[0].mxu0
      %2456 = vdwg.mxu0
      %v2457 = vadd.f32 %v2189, %v2339
      %v2458 = vadd.f32 %v2190, %v2342
      %v2459 = vadd.f32 %v2191, %v2347
      %v2460 = vadd.f32 %v2192, %v2350
      %v2461 = vadd.f32 %v2193, %v2355
      %v2462 = vadd.f32 %v2194, %v2358
      %v2463 = vadd.f32 %v2195, %v2363
      %v2464 = vadd.f32 %v2196, %v2366
      %v2465 = vadd.f32 %v2197, %v2371
      %v2466 = vadd.f32 %v2198, %v2374
      %v2467 = vadd.f32 %v2199, %v2379
      %v2468 = vadd.f32 %v2200, %v2382
      %v2469 = vadd.f32 %v2201, %v2387
      %v2470 = vadd.f32 %v2202, %v2390
      %v2471 = vadd.f32 %v2203, %v2395
      %v2472 = vadd.f32 %v2204, %v2398
      %v2473 = vadd.f32 %v2205, %v2403
      %v2474 = vadd.f32 %v2206, %v2406
      %v2475 = vadd.f32 %v2207, %v2411
      %v2476 = vadd.f32 %v2208, %v2414
      %v2477 = vadd.f32 %v2209, %v2419
      %v2478 = vadd.f32 %v2210, %v2422
      %v2479 = vadd.f32 %v2211, %v2427
      %v2480 = vadd.f32 %v2212, %v2430
      %v2481 = vadd.f32 %v2213, %v2435
      %v2482 = vadd.f32 %v2214, %v2438
      %v2483 = vadd.f32 %v2215, %v2443
      %v2484 = vadd.f32 %v2216, %v2446
      %v2485 = vadd.f32 %v2217, %v2451
      %v2486 = vadd.f32 %v2218, %v2454
      %v2487 = vld [vmem:[#allocation2 + $0x18] sm:$0xf]
      %v2488 = vld [vmem:[#allocation2 + $0x1c] sm:$0xf]
      %v2489 = vld [vmem:[#allocation2 + $0x20] sm:$0xf]
      %v2490 = vld [vmem:[#allocation2 + $0x24] sm:$0xf]
      %v2491 = vld [vmem:[#allocation2 + $0x28] sm:$0xf]
      %v2492 = vld [vmem:[#allocation2 + $0x2c] sm:$0xf]
      %v2493 = vld [vmem:[#allocation2 + $0x30] sm:$0xf]
      %v2494 = vld [vmem:[#allocation2 + $0x34] sm:$0xf]
      %v2495 = vld [vmem:[#allocation2 + $0x38] sm:$0xf]
      %v2496 = vld [vmem:[#allocation2 + $0x3c] sm:$0xf]
      %v2497 = vld [vmem:[#allocation2 + $0x40] sm:$0xf]
      %v2498 = vld [vmem:[#allocation2 + $0x44] sm:$0xf]
      %v2499 = vld [vmem:[#allocation2 + $0x48] sm:$0xf]
      %v2500 = vld [vmem:[#allocation2 + $0x4c] sm:$0xf]
      %v2501 = vld [vmem:[#allocation2 + $0x50] sm:$0xf]
      %v2502 = vld [vmem:[#allocation2 + $0x54] sm:$0xf]
      %v2503 = vld [vmem:[#allocation2 + $0x58] sm:$0xf]
      %v2504 = vld [vmem:[#allocation2 + $0x5c] sm:$0xf]
      %v2505 = vld [vmem:[#allocation2 + $0x60] sm:$0xf]
      %v2506 = vld [vmem:[#allocation2 + $0x64] sm:$0xf]
      %v2507 = vld [vmem:[#allocation2 + $0x68] sm:$0xf]
      %v2508 = vld [vmem:[#allocation2 + $0x6c] sm:$0xf]
      %v2509 = vld [vmem:[#allocation2 + $0x70] sm:$0xf]
      %v2510 = vld [vmem:[#allocation2 + $0x74] sm:$0xf]
      %v2511 = vld [vmem:[#allocation2 + $0x78] sm:$0xf]
      %v2512 = vld [vmem:[#allocation2 + $0x7c] sm:$0xf]
      %v2513 = vld [vmem:[#allocation2 + $0x80] sm:$0xf]
      %v2514 = vld [vmem:[#allocation2 + $0x84] sm:$0xf]
      %v2515 = vld [vmem:[#allocation2 + $0x88] sm:$0xf]
      %v2516 = vld [vmem:[#allocation2 + $0x8c] sm:$0xf]
      %s2517 = scalar_lea.vmem %s2, 24
      %v2518 = vld [vmem:[%s2517] sm:$0xf]
      %v2549 = vunpack.c.l.b16 %v2487
      %v2550 = vunpack.c.l.b16 %v2488
      %v2551 = vunpack.c.l.b16 %v2489
      %v2552 = vunpack.c.l.b16 %v2490
      %v2553 = vunpack.c.l.b16 %v2491
      %v2554 = vunpack.c.l.b16 %v2492
      %v2555 = vunpack.c.l.b16 %v2493
      %v2556 = vunpack.c.l.b16 %v2494
      %v2557 = vunpack.c.l.b16 %v2495
      %v2558 = vunpack.c.l.b16 %v2496
      %v2559 = vunpack.c.l.b16 %v2497
      %v2560 = vunpack.c.l.b16 %v2498
      %v2561 = vunpack.c.l.b16 %v2499
      %v2562 = vunpack.c.l.b16 %v2500
      %v2563 = vunpack.c.l.b16 %v2501
      %v2564 = vunpack.c.l.b16 %v2502
      %v2565 = vunpack.c.l.b16 %v2503
      %v2566 = vunpack.c.l.b16 %v2504
      %v2567 = vunpack.c.l.b16 %v2505
      %v2568 = vunpack.c.l.b16 %v2506
      %v2569 = vunpack.c.l.b16 %v2507
      %v2570 = vunpack.c.l.b16 %v2508
      %v2571 = vunpack.c.l.b16 %v2509
      %v2572 = vunpack.c.l.b16 %v2510
      %v2573 = vunpack.c.l.b16 %v2511
      %v2574 = vunpack.c.l.b16 %v2512
      %v2575 = vunpack.c.l.b16 %v2513
      %v2576 = vunpack.c.l.b16 %v2514
      %v2577 = vunpack.c.l.b16 %v2515
      %v2578 = vunpack.c.l.b16 %v2516
      %v2579 = vpack.c.b16 %v2550, %v2549
      %v2580 = vpack.c.b16 %v2552, %v2551
      %v2581 = vpack.c.b16 %v2554, %v2553
      %v2582 = vpack.c.b16 %v2556, %v2555
      %v2583 = vpack.c.b16 %v2558, %v2557
      %v2584 = vpack.c.b16 %v2560, %v2559
      %v2585 = vpack.c.b16 %v2562, %v2561
      %v2586 = vpack.c.b16 %v2564, %v2563
      %v2587 = vpack.c.b16 %v2566, %v2565
      %v2588 = vpack.c.b16 %v2568, %v2567
      %v2589 = vpack.c.b16 %v2570, %v2569
      %v2590 = vpack.c.b16 %v2572, %v2571
      %v2591 = vpack.c.b16 %v2574, %v2573
      %v2592 = vpack.c.b16 %v2576, %v2575
      %v2593 = vpack.c.b16 %v2578, %v2577
      %v2595 = vsel %vm757, %v2579, 0
      %v2598 = vsel %vm757, %v2580, 0
      %v2601 = vsel %vm757, %v2581, 0
      %v2604 = vsel %vm757, %v2582, 0
      %v2607 = vsel %vm757, %v2583, 0
      %v2610 = vsel %vm757, %v2584, 0
      %v2613 = vsel %vm757, %v2585, 0
      %v2616 = vsel %vm757, %v2586, 0
      %v2619 = vsel %vm757, %v2587, 0
      %v2622 = vsel %vm757, %v2588, 0
      %v2625 = vsel %vm757, %v2589, 0
      %v2628 = vsel %vm757, %v2590, 0
      %v2631 = vsel %vm757, %v2591, 0
      %v2634 = vsel %vm757, %v2592, 0
      %v2637 = vsel %vm757, %v2593, 0
      %v2640 = vsel %vm803, %v2518, 0
      %2642 = vmatprep.subr.bf16.mxu0 0
      %2643 = vmatpush1.bf16.msra.mxu0 %v2640
      %2644 = vmatprep.subr.bf16.mxu0 0
      %2645 = vmatpush1.bf16.msra.mxu0 0
      %2646 = vmatprep.subr.bf16.mxu0 0
      %2647 = vmatpush1.bf16.msra.mxu0 0
      %2648 = vmatprep.subr.bf16.mxu0 0
      %2649 = vmatpush1.bf16.msra.mxu0 0
      %2650 = vmatprep.subr.bf16.mxu0 0
      %2651 = vmatpush1.bf16.msra.mxu0 0
      %2652 = vmatprep.subr.bf16.mxu0 0
      %2653 = vmatpush1.bf16.msra.mxu0 0
      %2654 = vmatprep.subr.bf16.mxu0 0
      %2655 = vmatpush1.bf16.msra.mxu0 0
      %2656 = vmatprep.subr.bf16.mxu0 0
      %2657 = vmatpush1.bf16.msra.mxu0 0
      %2658 = vmatprep.subr.bf16.mxu0 0
      %2659 = vmatpush1.bf16.msra.mxu0 0
      %2660 = vmatprep.subr.bf16.mxu0 0
      %2661 = vmatpush1.bf16.msra.mxu0 0
      %2662 = vmatprep.subr.bf16.mxu0 0
      %2663 = vmatpush1.bf16.msra.mxu0 0
      %2664 = vmatprep.subr.bf16.mxu0 0
      %2665 = vmatpush1.bf16.msra.mxu0 0
      %2666 = vmatprep.subr.bf16.mxu0 0
      %2667 = vmatpush1.bf16.msra.mxu0 0
      %2668 = vmatprep.subr.bf16.mxu0 0
      %2669 = vmatpush1.bf16.msra.mxu0 0
      %2670 = vmatprep.subr.bf16.mxu0 0
      %2671 = vmatpush1.bf16.msra.mxu0 0
      %2672 = vmatprep.subr.bf16.mxu0 0
      %2673 = vmatpush1.bf16.msra.mxu0 0
      %2674 = vmatprep.mubr.bf16.mxu0 0
      %2675 = vmatmul.mubr.bf16.gmra.mrb[0].mxu0 %v2595
      %v2676 = vpop.f32.mrb[0].mxu0
      %v2677 = vadd.f32 0.0, %v2676
      %v2678 = vpop.f32.mrb[0].mxu0
      %v2679 = vpop.f32.mrb[0].mxu0
      %v2680 = vadd.f32 0.0, %v2679
      %v2681 = vpop.f32.mrb[0].mxu0
      %2682 = vmatprep.mubr.bf16.mxu0 0
      %2683 = vmatmul.mubr.bf16.gmra.mrb[0].mxu0 %v2598
      %v2684 = vpop.f32.mrb[0].mxu0
      %v2685 = vadd.f32 0.0, %v2684
      %v2686 = vpop.f32.mrb[0].mxu0
      %v2687 = vpop.f32.mrb[0].mxu0
      %v2688 = vadd.f32 0.0, %v2687
      %v2689 = vpop.f32.mrb[0].mxu0
      %2690 = vmatprep.mubr.bf16.mxu0 0
      %2691 = vmatmul.mubr.bf16.gmra.mrb[0].mxu0 %v2601
      %v2692 = vpop.f32.mrb[0].mxu0
      %v2693 = vadd.f32 0.0, %v2692
      %v2694 = vpop.f32.mrb[0].mxu0
      %v2695 = vpop.f32.mrb[0].mxu0
      %v2696 = vadd.f32 0.0, %v2695
      %v2697 = vpop.f32.mrb[0].mxu0
      %2698 = vmatprep.mubr.bf16.mxu0 0
      %2699 = vmatmul.mubr.bf16.gmra.mrb[0].mxu0 %v2604
      %v2700 = vpop.f32.mrb[0].mxu0
      %v2701 = vadd.f32 0.0, %v2700
      %v2702 = vpop.f32.mrb[0].mxu0
      %v2703 = vpop.f32.mrb[0].mxu0
      %v2704 = vadd.f32 0.0, %v2703
      %v2705 = vpop.f32.mrb[0].mxu0
      %2706 = vmatprep.mubr.bf16.mxu0 0
      %2707 = vmatmul.mubr.bf16.gmra.mrb[0].mxu0 %v2607
      %v2708 = vpop.f32.mrb[0].mxu0
      %v2709 = vadd.f32 0.0, %v2708
      %v2710 = vpop.f32.mrb[0].mxu0
      %v2711 = vpop.f32.mrb[0].mxu0
      %v2712 = vadd.f32 0.0, %v2711
      %v2713 = vpop.f32.mrb[0].mxu0
      %2714 = vmatprep.mubr.bf16.mxu0 0
      %2715 = vmatmul.mubr.bf16.gmra.mrb[0].mxu0 %v2610
      %v2716 = vpop.f32.mrb[0].mxu0
      %v2717 = vadd.f32 0.0, %v2716
      %v2718 = vpop.f32.mrb[0].mxu0
      %v2719 = vpop.f32.mrb[0].mxu0
      %v2720 = vadd.f32 0.0, %v2719
      %v2721 = vpop.f32.mrb[0].mxu0
      %2722 = vmatprep.mubr.bf16.mxu0 0
      %2723 = vmatmul.mubr.bf16.gmra.mrb[0].mxu0 %v2613
      %v2724 = vpop.f32.mrb[0].mxu0
      %v2725 = vadd.f32 0.0, %v2724
      %v2726 = vpop.f32.mrb[0].mxu0
      %v2727 = vpop.f32.mrb[0].mxu0
      %v2728 = vadd.f32 0.0, %v2727
      %v2729 = vpop.f32.mrb[0].mxu0
      %2730 = vmatprep.mubr.bf16.mxu0 0
      %2731 = vmatmul.mubr.bf16.gmra.mrb[0].mxu0 %v2616
      %v2732 = vpop.f32.mrb[0].mxu0
      %v2733 = vadd.f32 0.0, %v2732
      %v2734 = vpop.f32.mrb[0].mxu0
      %v2735 = vpop.f32.mrb[0].mxu0
      %v2736 = vadd.f32 0.0, %v2735
      %v2737 = vpop.f32.mrb[0].mxu0
      %2738 = vmatprep.mubr.bf16.mxu0 0
      %2739 = vmatmul.mubr.bf16.gmra.mrb[0].mxu0 %v2619
      %v2740 = vpop.f32.mrb[0].mxu0
      %v2741 = vadd.f32 0.0, %v2740
      %v2742 = vpop.f32.mrb[0].mxu0
      %v2743 = vpop.f32.mrb[0].mxu0
      %v2744 = vadd.f32 0.0, %v2743
      %v2745 = vpop.f32.mrb[0].mxu0
      %2746 = vmatprep.mubr.bf16.mxu0 0
      %2747 = vmatmul.mubr.bf16.gmra.mrb[0].mxu0 %v2622
      %v2748 = vpop.f32.mrb[0].mxu0
      %v2749 = vadd.f32 0.0, %v2748
      %v2750 = vpop.f32.mrb[0].mxu0
      %v2751 = vpop.f32.mrb[0].mxu0
      %v2752 = vadd.f32 0.0, %v2751
      %v2753 = vpop.f32.mrb[0].mxu0
      %2754 = vmatprep.mubr.bf16.mxu0 0
      %2755 = vmatmul.mubr.bf16.gmra.mrb[0].mxu0 %v2625
      %v2756 = vpop.f32.mrb[0].mxu0
      %v2757 = vadd.f32 0.0, %v2756
      %v2758 = vpop.f32.mrb[0].mxu0
      %v2759 = vpop.f32.mrb[0].mxu0
      %v2760 = vadd.f32 0.0, %v2759
      %v2761 = vpop.f32.mrb[0].mxu0
      %2762 = vmatprep.mubr.bf16.mxu0 0
      %2763 = vmatmul.mubr.bf16.gmra.mrb[0].mxu0 %v2628
      %v2764 = vpop.f32.mrb[0].mxu0
      %v2765 = vadd.f32 0.0, %v2764
      %v2766 = vpop.f32.mrb[0].mxu0
      %v2767 = vpop.f32.mrb[0].mxu0
      %v2768 = vadd.f32 0.0, %v2767
      %v2769 = vpop.f32.mrb[0].mxu0
      %2770 = vmatprep.mubr.bf16.mxu0 0
      %2771 = vmatmul.mubr.bf16.gmra.mrb[0].mxu0 %v2631
      %v2772 = vpop.f32.mrb[0].mxu0
      %v2773 = vadd.f32 0.0, %v2772
      %v2774 = vpop.f32.mrb[0].mxu0
      %v2775 = vpop.f32.mrb[0].mxu0
      %v2776 = vadd.f32 0.0, %v2775
      %v2777 = vpop.f32.mrb[0].mxu0
      %2778 = vmatprep.mubr.bf16.mxu0 0
      %2779 = vmatmul.mubr.bf16.gmra.mrb[0].mxu0 %v2634
      %v2780 = vpop.f32.mrb[0].mxu0
      %v2781 = vadd.f32 0.0, %v2780
      %v2782 = vpop.f32.mrb[0].mxu0
      %v2783 = vpop.f32.mrb[0].mxu0
      %v2784 = vadd.f32 0.0, %v2783
      %v2785 = vpop.f32.mrb[0].mxu0
      %2786 = vmatprep.mubr.bf16.mxu0 0
      %2787 = vmatmul.mubr.bf16.gmra.mrb[0].mxu0 %v2637
      %v2788 = vpop.f32.mrb[0].mxu0
      %v2789 = vadd.f32 0.0, %v2788
      %v2790 = vpop.f32.mrb[0].mxu0
      %v2791 = vpop.f32.mrb[0].mxu0
      %v2792 = vadd.f32 0.0, %v2791
      %v2793 = vpop.f32.mrb[0].mxu0
      %2794 = vdwg.mxu0
      %v2795 = vadd.f32 %v2457, %v2677
      %v2796 = vadd.f32 %v2458, %v2680
      %v2797 = vadd.f32 %v2459, %v2685
      %v2798 = vadd.f32 %v2460, %v2688
      %v2799 = vadd.f32 %v2461, %v2693
      %v2800 = vadd.f32 %v2462, %v2696
      %v2801 = vadd.f32 %v2463, %v2701
      %v2802 = vadd.f32 %v2464, %v2704
      %v2803 = vadd.f32 %v2465, %v2709
      %v2804 = vadd.f32 %v2466, %v2712
      %v2805 = vadd.f32 %v2467, %v2717
      %v2806 = vadd.f32 %v2468, %v2720
      %v2807 = vadd.f32 %v2469, %v2725
      %v2808 = vadd.f32 %v2470, %v2728
      %v2809 = vadd.f32 %v2471, %v2733
      %v2810 = vadd.f32 %v2472, %v2736
      %v2811 = vadd.f32 %v2473, %v2741
      %v2812 = vadd.f32 %v2474, %v2744
      %v2813 = vadd.f32 %v2475, %v2749
      %v2814 = vadd.f32 %v2476, %v2752
      %v2815 = vadd.f32 %v2477, %v2757
      %v2816 = vadd.f32 %v2478, %v2760
      %v2817 = vadd.f32 %v2479, %v2765
      %v2818 = vadd.f32 %v2480, %v2768
      %v2819 = vadd.f32 %v2481, %v2773
      %v2820 = vadd.f32 %v2482, %v2776
      %v2821 = vadd.f32 %v2483, %v2781
      %v2822 = vadd.f32 %v2484, %v2784
      %v2823 = vadd.f32 %v2485, %v2789
      %v2824 = vadd.f32 %v2486, %v2792
      %v2825 = vld [vmem:[#allocation2 + $0x18] sm:$0xf]
      %v2826 = vld [vmem:[#allocation2 + $0x1c] sm:$0xf]
      %v2827 = vld [vmem:[#allocation2 + $0x20] sm:$0xf]
      %v2828 = vld [vmem:[#allocation2 + $0x24] sm:$0xf]
      %v2829 = vld [vmem:[#allocation2 + $0x28] sm:$0xf]
      %v2830 = vld [vmem:[#allocation2 + $0x2c] sm:$0xf]
      %v2831 = vld [vmem:[#allocation2 + $0x30] sm:$0xf]
      %v2832 = vld [vmem:[#allocation2 + $0x34] sm:$0xf]
      %v2833 = vld [vmem:[#allocation2 + $0x38] sm:$0xf]
      %v2834 = vld [vmem:[#allocation2 + $0x3c] sm:$0xf]
      %v2835 = vld [vmem:[#allocation2 + $0x40] sm:$0xf]
      %v2836 = vld [vmem:[#allocation2 + $0x44] sm:$0xf]
      %v2837 = vld [vmem:[#allocation2 + $0x48] sm:$0xf]
      %v2838 = vld [vmem:[#allocation2 + $0x4c] sm:$0xf]
      %v2839 = vld [vmem:[#allocation2 + $0x50] sm:$0xf]
      %v2840 = vld [vmem:[#allocation2 + $0x54] sm:$0xf]
      %v2841 = vld [vmem:[#allocation2 + $0x58] sm:$0xf]
      %v2842 = vld [vmem:[#allocation2 + $0x5c] sm:$0xf]
      %v2843 = vld [vmem:[#allocation2 + $0x60] sm:$0xf]
      %v2844 = vld [vmem:[#allocation2 + $0x64] sm:$0xf]
      %v2845 = vld [vmem:[#allocation2 + $0x68] sm:$0xf]
      %v2846 = vld [vmem:[#allocation2 + $0x6c] sm:$0xf]
      %v2847 = vld [vmem:[#allocation2 + $0x70] sm:$0xf]
      %v2848 = vld [vmem:[#allocation2 + $0x74] sm:$0xf]
      %v2849 = vld [vmem:[#allocation2 + $0x78] sm:$0xf]
      %v2850 = vld [vmem:[#allocation2 + $0x7c] sm:$0xf]
      %v2851 = vld [vmem:[#allocation2 + $0x80] sm:$0xf]
      %v2852 = vld [vmem:[#allocation2 + $0x84] sm:$0xf]
      %v2853 = vld [vmem:[#allocation2 + $0x88] sm:$0xf]
      %v2854 = vld [vmem:[#allocation2 + $0x8c] sm:$0xf]
      %v2855 = vld [vmem:[#allocation2 + $0x90] sm:$0x1]
      %s2856 = scalar_lea.vmem %s2, 28
      %v2857 = vld [vmem:[%s2856] sm:$0xf]
      %v2889 = vunpack.c.l.b16 %v2825
      %v2890 = vunpack.c.l.b16 %v2826
      %v2891 = vunpack.c.l.b16 %v2827
      %v2892 = vunpack.c.l.b16 %v2828
      %v2893 = vunpack.c.l.b16 %v2829
      %v2894 = vunpack.c.l.b16 %v2830
      %v2895 = vunpack.c.l.b16 %v2831
      %v2896 = vunpack.c.l.b16 %v2832
      %v2897 = vunpack.c.l.b16 %v2833
      %v2898 = vunpack.c.l.b16 %v2834
      %v2899 = vunpack.c.l.b16 %v2835
      %v2900 = vunpack.c.l.b16 %v2836
      %v2901 = vunpack.c.l.b16 %v2837
      %v2902 = vunpack.c.l.b16 %v2838
      %v2903 = vunpack.c.l.b16 %v2839
      %v2904 = vunpack.c.l.b16 %v2840
      %v2905 = vunpack.c.l.b16 %v2841
      %v2906 = vunpack.c.l.b16 %v2842
      %v2907 = vunpack.c.l.b16 %v2843
      %v2908 = vunpack.c.l.b16 %v2844
      %v2909 = vunpack.c.l.b16 %v2845
      %v2910 = vunpack.c.l.b16 %v2846
      %v2911 = vunpack.c.l.b16 %v2847
      %v2912 = vunpack.c.l.b16 %v2848
      %v2913 = vunpack.c.l.b16 %v2849
      %v2914 = vunpack.c.l.b16 %v2850
      %v2915 = vunpack.c.l.b16 %v2851
      %v2916 = vunpack.c.l.b16 %v2852
      %v2917 = vunpack.c.l.b16 %v2853
      %v2918 = vunpack.c.l.b16 %v2854
      %v2919 = vunpack.c.l.b16 %v2855
      %v2920 = vpack.c.b16 %v2890, %v2889
      %v2921 = vpack.c.b16 %v2892, %v2891
      %v2922 = vpack.c.b16 %v2894, %v2893
      %v2923 = vpack.c.b16 %v2896, %v2895
      %v2924 = vpack.c.b16 %v2898, %v2897
      %v2925 = vpack.c.b16 %v2900, %v2899
      %v2926 = vpack.c.b16 %v2902, %v2901
      %v2927 = vpack.c.b16 %v2904, %v2903
      %v2928 = vpack.c.b16 %v2906, %v2905
      %v2929 = vpack.c.b16 %v2908, %v2907
      %v2930 = vpack.c.b16 %v2910, %v2909
      %v2931 = vpack.c.b16 %v2912, %v2911
      %v2932 = vpack.c.b16 %v2914, %v2913
      %v2933 = vpack.c.b16 %v2916, %v2915
      %v2934 = vpack.c.b16 %v2918, %v2917
      %v2935 = vpack.c.b16 %v2919, %v2919
      %v2937 = vshrl.u32 %v2920, 16
      %v2939 = vshll.u32 %v2920, 16
      %v2941 = vrot.slane %v2939, 1
      %v2942 = vor.u32 %v2937, %v2941
      %v2944 = vshll.u32 %v2921, 16
      %v2946 = vrot.slane %v2944, 1
      %v2947 = vsel %vm632, %v2942, %v2946
      %v2948 = vshrl.u32 %v2921, 16
      %v2950 = vor.u32 %v2948, %v2946
      %v2952 = vshll.u32 %v2922, 16
      %v2954 = vrot.slane %v2952, 1
      %v2955 = vsel %vm632, %v2950, %v2954
      %v2956 = vshrl.u32 %v2922, 16
      %v2958 = vor.u32 %v2956, %v2954
      %v2960 = vshll.u32 %v2923, 16
      %v2962 = vrot.slane %v2960, 1
      %v2963 = vsel %vm632, %v2958, %v2962
      %v2964 = vshrl.u32 %v2923, 16
      %v2966 = vor.u32 %v2964, %v2962
      %v2968 = vshll.u32 %v2924, 16
      %v2970 = vrot.slane %v2968, 1
      %v2971 = vsel %vm632, %v2966, %v2970
      %v2972 = vshrl.u32 %v2924, 16
      %v2974 = vor.u32 %v2972, %v2970
      %v2976 = vshll.u32 %v2925, 16
      %v2978 = vrot.slane %v2976, 1
      %v2979 = vsel %vm632, %v2974, %v2978
      %v2980 = vshrl.u32 %v2925, 16
      %v2982 = vor.u32 %v2980, %v2978
      %v2984 = vshll.u32 %v2926, 16
      %v2986 = vrot.slane %v2984, 1
      %v2987 = vsel %vm632, %v2982, %v2986
      %v2988 = vshrl.u32 %v2926, 16
      %v2990 = vor.u32 %v2988, %v2986
      %v2992 = vshll.u32 %v2927, 16
      %v2994 = vrot.slane %v2992, 1
      %v2995 = vsel %vm632, %v2990, %v2994
      %v2996 = vshrl.u32 %v2927, 16
      %v2998 = vor.u32 %v2996, %v2994
      %v3000 = vshll.u32 %v2928, 16
      %v3002 = vrot.slane %v3000, 1
      %v3003 = vsel %vm632, %v2998, %v3002
      %v3004 = vshrl.u32 %v2928, 16
      %v3006 = vor.u32 %v3004, %v3002
      %v3008 = vshll.u32 %v2929, 16
      %v3010 = vrot.slane %v3008, 1
      %v3011 = vsel %vm632, %v3006, %v3010
      %v3012 = vshrl.u32 %v2929, 16
      %v3014 = vor.u32 %v3012, %v3010
      %v3016 = vshll.u32 %v2930, 16
      %v3018 = vrot.slane %v3016, 1
      %v3019 = vsel %vm632, %v3014, %v3018
      %v3020 = vshrl.u32 %v2930, 16
      %v3022 = vor.u32 %v3020, %v3018
      %v3024 = vshll.u32 %v2931, 16
      %v3026 = vrot.slane %v3024, 1
      %v3027 = vsel %vm632, %v3022, %v3026
      %v3028 = vshrl.u32 %v2931, 16
      %v3030 = vor.u32 %v3028, %v3026
      %v3032 = vshll.u32 %v2932, 16
      %v3034 = vrot.slane %v3032, 1
      %v3035 = vsel %vm632, %v3030, %v3034
      %v3036 = vshrl.u32 %v2932, 16
      %v3038 = vor.u32 %v3036, %v3034
      %v3040 = vshll.u32 %v2933, 16
      %v3042 = vrot.slane %v3040, 1
      %v3043 = vsel %vm632, %v3038, %v3042
      %v3044 = vshrl.u32 %v2933, 16
      %v3046 = vor.u32 %v3044, %v3042
      %v3048 = vshll.u32 %v2934, 16
      %v3050 = vrot.slane %v3048, 1
      %v3051 = vsel %vm632, %v3046, %v3050
      %v3052 = vshrl.u32 %v2934, 16
      %v3054 = vor.u32 %v3052, %v3050
      %v3056 = vshll.u32 %v2935, 16
      %v3058 = vrot.slane %v3056, 1
      %v3059 = vsel %vm632, %v3054, %v3058
      %v3061 = vsel %vm757, %v2947, 0
      %v3064 = vsel %vm757, %v2955, 0
      %v3067 = vsel %vm757, %v2963, 0
      %v3070 = vsel %vm757, %v2971, 0
      %v3073 = vsel %vm757, %v2979, 0
      %v3076 = vsel %vm757, %v2987, 0
      %v3079 = vsel %vm757, %v2995, 0
      %v3082 = vsel %vm757, %v3003, 0
      %v3085 = vsel %vm757, %v3011, 0
      %v3088 = vsel %vm757, %v3019, 0
      %v3091 = vsel %vm757, %v3027, 0
      %v3094 = vsel %vm757, %v3035, 0
      %v3097 = vsel %vm757, %v3043, 0
      %v3100 = vsel %vm757, %v3051, 0
      %v3103 = vsel %vm757, %v3059, 0
      %v3106 = vsel %vm803, %v2857, 0
      %3108 = vmatprep.subr.bf16.mxu0 0
      %3109 = vmatpush1.bf16.msra.mxu0 %v3106
      %3110 = vmatprep.subr.bf16.mxu0 0
      %3111 = vmatpush1.bf16.msra.mxu0 0
      %3112 = vmatprep.subr.bf16.mxu0 0
      %3113 = vmatpush1.bf16.msra.mxu0 0
      %3114 = vmatprep.subr.bf16.mxu0 0
      %3115 = vmatpush1.bf16.msra.mxu0 0
      %3116 = vmatprep.subr.bf16.mxu0 0
      %3117 = vmatpush1.bf16.msra.mxu0 0
      %3118 = vmatprep.subr.bf16.mxu0 0
      %3119 = vmatpush1.bf16.msra.mxu0 0
      %3120 = vmatprep.subr.bf16.mxu0 0
      %3121 = vmatpush1.bf16.msra.mxu0 0
      %3122 = vmatprep.subr.bf16.mxu0 0
      %3123 = vmatpush1.bf16.msra.mxu0 0
      %3124 = vmatprep.subr.bf16.mxu0 0
      %3125 = vmatpush1.bf16.msra.mxu0 0
      %3126 = vmatprep.subr.bf16.mxu0 0
      %3127 = vmatpush1.bf16.msra.mxu0 0
      %3128 = vmatprep.subr.bf16.mxu0 0
      %3129 = vmatpush1.bf16.msra.mxu0 0
      %3130 = vmatprep.subr.bf16.mxu0 0
      %3131 = vmatpush1.bf16.msra.mxu0 0
      %3132 = vmatprep.subr.bf16.mxu0 0
      %3133 = vmatpush1.bf16.msra.mxu0 0
      %3134 = vmatprep.subr.bf16.mxu0 0
      %3135 = vmatpush1.bf16.msra.mxu0 0
      %3136 = vmatprep.subr.bf16.mxu0 0
      %3137 = vmatpush1.bf16.msra.mxu0 0
      %3138 = vmatprep.subr.bf16.mxu0 0
      %3139 = vmatpush1.bf16.msra.mxu0 0
      %3140 = vmatprep.mubr.bf16.mxu0 0
      %3141 = vmatmul.mubr.bf16.gmra.mrb[0].mxu0 %v3061
      %v3142 = vpop.f32.mrb[0].mxu0
      %v3143 = vadd.f32 0.0, %v3142
      %v3144 = vpop.f32.mrb[0].mxu0
      %v3145 = vpop.f32.mrb[0].mxu0
      %v3146 = vadd.f32 0.0, %v3145
      %v3147 = vpop.f32.mrb[0].mxu0
      %3148 = vmatprep.mubr.bf16.mxu0 0
      %3149 = vmatmul.mubr.bf16.gmra.mrb[0].mxu0 %v3064
      %v3150 = vpop.f32.mrb[0].mxu0
      %v3151 = vadd.f32 0.0, %v3150
      %v3152 = vpop.f32.mrb[0].mxu0
      %v3153 = vpop.f32.mrb[0].mxu0
      %v3154 = vadd.f32 0.0, %v3153
      %v3155 = vpop.f32.mrb[0].mxu0
      %3156 = vmatprep.mubr.bf16.mxu0 0
      %3157 = vmatmul.mubr.bf16.gmra.mrb[0].mxu0 %v3067
      %v3158 = vpop.f32.mrb[0].mxu0
      %v3159 = vadd.f32 0.0, %v3158
      %v3160 = vpop.f32.mrb[0].mxu0
      %v3161 = vpop.f32.mrb[0].mxu0
      %v3162 = vadd.f32 0.0, %v3161
      %v3163 = vpop.f32.mrb[0].mxu0
      %3164 = vmatprep.mubr.bf16.mxu0 0
      %3165 = vmatmul.mubr.bf16.gmra.mrb[0].mxu0 %v3070
      %v3166 = vpop.f32.mrb[0].mxu0
      %v3167 = vadd.f32 0.0, %v3166
      %v3168 = vpop.f32.mrb[0].mxu0
      %v3169 = vpop.f32.mrb[0].mxu0
      %v3170 = vadd.f32 0.0, %v3169
      %v3171 = vpop.f32.mrb[0].mxu0
      %3172 = vmatprep.mubr.bf16.mxu0 0
      %3173 = vmatmul.mubr.bf16.gmra.mrb[0].mxu0 %v3073
      %v3174 = vpop.f32.mrb[0].mxu0
      %v3175 = vadd.f32 0.0, %v3174
      %v3176 = vpop.f32.mrb[0].mxu0
      %v3177 = vpop.f32.mrb[0].mxu0
      %v3178 = vadd.f32 0.0, %v3177
      %v3179 = vpop.f32.mrb[0].mxu0
      %3180 = vmatprep.mubr.bf16.mxu0 0
      %3181 = vmatmul.mubr.bf16.gmra.mrb[0].mxu0 %v3076
      %v3182 = vpop.f32.mrb[0].mxu0
      %v3183 = vadd.f32 0.0, %v3182
      %v3184 = vpop.f32.mrb[0].mxu0
      %v3185 = vpop.f32.mrb[0].mxu0
      %v3186 = vadd.f32 0.0, %v3185
      %v3187 = vpop.f32.mrb[0].mxu0
      %3188 = vmatprep.mubr.bf16.mxu0 0
      %3189 = vmatmul.mubr.bf16.gmra.mrb[0].mxu0 %v3079
      %v3190 = vpop.f32.mrb[0].mxu0
      %v3191 = vadd.f32 0.0, %v3190
      %v3192 = vpop.f32.mrb[0].mxu0
      %v3193 = vpop.f32.mrb[0].mxu0
      %v3194 = vadd.f32 0.0, %v3193
      %v3195 = vpop.f32.mrb[0].mxu0
      %3196 = vmatprep.mubr.bf16.mxu0 0
      %3197 = vmatmul.mubr.bf16.gmra.mrb[0].mxu0 %v3082
      %v3198 = vpop.f32.mrb[0].mxu0
      %v3199 = vadd.f32 0.0, %v3198
      %v3200 = vpop.f32.mrb[0].mxu0
      %v3201 = vpop.f32.mrb[0].mxu0
      %v3202 = vadd.f32 0.0, %v3201
      %v3203 = vpop.f32.mrb[0].mxu0
      %3204 = vmatprep.mubr.bf16.mxu0 0
      %3205 = vmatmul.mubr.bf16.gmra.mrb[0].mxu0 %v3085
      %v3206 = vpop.f32.mrb[0].mxu0
      %v3207 = vadd.f32 0.0, %v3206
      %v3208 = vpop.f32.mrb[0].mxu0
      %v3209 = vpop.f32.mrb[0].mxu0
      %v3210 = vadd.f32 0.0, %v3209
      %v3211 = vpop.f32.mrb[0].mxu0
      %3212 = vmatprep.mubr.bf16.mxu0 0
      %3213 = vmatmul.mubr.bf16.gmra.mrb[0].mxu0 %v3088
      %v3214 = vpop.f32.mrb[0].mxu0
      %v3215 = vadd.f32 0.0, %v3214
      %v3216 = vpop.f32.mrb[0].mxu0
      %v3217 = vpop.f32.mrb[0].mxu0
      %v3218 = vadd.f32 0.0, %v3217
      %v3219 = vpop.f32.mrb[0].mxu0
      %3220 = vmatprep.mubr.bf16.mxu0 0
      %3221 = vmatmul.mubr.bf16.gmra.mrb[0].mxu0 %v3091
      %v3222 = vpop.f32.mrb[0].mxu0
      %v3223 = vadd.f32 0.0, %v3222
      %v3224 = vpop.f32.mrb[0].mxu0
      %v3225 = vpop.f32.mrb[0].mxu0
      %v3226 = vadd.f32 0.0, %v3225
      %v3227 = vpop.f32.mrb[0].mxu0
      %3228 = vmatprep.mubr.bf16.mxu0 0
      %3229 = vmatmul.mubr.bf16.gmra.mrb[0].mxu0 %v3094
      %v3230 = vpop.f32.mrb[0].mxu0
      %v3231 = vadd.f32 0.0, %v3230
      %v3232 = vpop.f32.mrb[0].mxu0
      %v3233 = vpop.f32.mrb[0].mxu0
      %v3234 = vadd.f32 0.0, %v3233
      %v3235 = vpop.f32.mrb[0].mxu0
      %3236 = vmatprep.mubr.bf16.mxu0 0
      %3237 = vmatmul.mubr.bf16.gmra.mrb[0].mxu0 %v3097
      %v3238 = vpop.f32.mrb[0].mxu0
      %v3239 = vadd.f32 0.0, %v3238
      %v3240 = vpop.f32.mrb[0].mxu0
      %v3241 = vpop.f32.mrb[0].mxu0
      %v3242 = vadd.f32 0.0, %v3241
      %v3243 = vpop.f32.mrb[0].mxu0
      %3244 = vmatprep.mubr.bf16.mxu0 0
      %3245 = vmatmul.mubr.bf16.gmra.mrb[0].mxu0 %v3100
      %v3246 = vpop.f32.mrb[0].mxu0
      %v3247 = vadd.f32 0.0, %v3246
      %v3248 = vpop.f32.mrb[0].mxu0
      %v3249 = vpop.f32.mrb[0].mxu0
      %v3250 = vadd.f32 0.0, %v3249
      %v3251 = vpop.f32.mrb[0].mxu0
      %3252 = vmatprep.mubr.bf16.mxu0 0
      %3253 = vmatmul.mubr.bf16.gmra.mrb[0].mxu0 %v3103
      %v3254 = vpop.f32.mrb[0].mxu0
      %v3255 = vadd.f32 0.0, %v3254
      %v3256 = vpop.f32.mrb[0].mxu0
      %v3257 = vpop.f32.mrb[0].mxu0
      %v3258 = vadd.f32 0.0, %v3257
      %v3259 = vpop.f32.mrb[0].mxu0
      %3260 = vdwg.mxu0
      %v3261 = vadd.f32 %v2795, %v3143
      %v3262 = vadd.f32 %v2796, %v3146
      %v3263 = vadd.f32 %v2797, %v3151
      %v3264 = vadd.f32 %v2798, %v3154
      %v3265 = vadd.f32 %v2799, %v3159
      %v3266 = vadd.f32 %v2800, %v3162
      %v3267 = vadd.f32 %v2801, %v3167
      %v3268 = vadd.f32 %v2802, %v3170
      %v3269 = vadd.f32 %v2803, %v3175
      %v3270 = vadd.f32 %v2804, %v3178
      %v3271 = vadd.f32 %v2805, %v3183
      %v3272 = vadd.f32 %v2806, %v3186
      %v3273 = vadd.f32 %v2807, %v3191
      %v3274 = vadd.f32 %v2808, %v3194
      %v3275 = vadd.f32 %v2809, %v3199
      %v3276 = vadd.f32 %v2810, %v3202
      %v3277 = vadd.f32 %v2811, %v3207
      %v3278 = vadd.f32 %v2812, %v3210
      %v3279 = vadd.f32 %v2813, %v3215
      %v3280 = vadd.f32 %v2814, %v3218
      %v3281 = vadd.f32 %v2815, %v3223
      %v3282 = vadd.f32 %v2816, %v3226
      %v3283 = vadd.f32 %v2817, %v3231
      %v3284 = vadd.f32 %v2818, %v3234
      %v3285 = vadd.f32 %v2819, %v3239
      %v3286 = vadd.f32 %v2820, %v3242
      %v3287 = vadd.f32 %v2821, %v3247
      %v3288 = vadd.f32 %v2822, %v3250
      %v3289 = vadd.f32 %v2823, %v3255
      %v3290 = vadd.f32 %v2824, %v3258
      %v3291 = vld [vmem:[#allocation2 + $0x18] sm:$0xe]
      %s3292 = scalar_lea.vmem %s2, 32
      %v3293 = vld [vmem:[%s3292] sm:$0xf]
      %v3295 = vunpack.c.l.b16 %v3291
      %v3296 = vpack.c.b16 %v2890, %v3295
      %v3297 = vrot.slane %v3296, 1
      %v3298 = vrot.slane %v2921, 1
      %v3299 = vsel %vm1152, %v3297, %v3298
      %v3300 = vrot.slane %v2922, 1
      %v3301 = vsel %vm1152, %v3298, %v3300
      %v3302 = vrot.slane %v2923, 1
      %v3303 = vsel %vm1152, %v3300, %v3302
      %v3304 = vrot.slane %v2924, 1
      %v3305 = vsel %vm1152, %v3302, %v3304
      %v3306 = vrot.slane %v2925, 1
      %v3307 = vsel %vm1152, %v3304, %v3306
      %v3308 = vrot.slane %v2926, 1
      %v3309 = vsel %vm1152, %v3306, %v3308
      %v3310 = vrot.slane %v2927, 1
      %v3311 = vsel %vm1152, %v3308, %v3310
      %v3312 = vrot.slane %v2928, 1
      %v3313 = vsel %vm1152, %v3310, %v3312
      %v3314 = vrot.slane %v2929, 1
      %v3315 = vsel %vm1152, %v3312, %v3314
      %v3316 = vrot.slane %v2930, 1
      %v3317 = vsel %vm1152, %v3314, %v3316
      %v3318 = vrot.slane %v2931, 1
      %v3319 = vsel %vm1152, %v3316, %v3318
      %v3320 = vrot.slane %v2932, 1
      %v3321 = vsel %vm1152, %v3318, %v3320
      %v3322 = vrot.slane %v2933, 1
      %v3323 = vsel %vm1152, %v3320, %v3322
      %v3324 = vrot.slane %v2934, 1
      %v3325 = vsel %vm1152, %v3322, %v3324
      %v3326 = vrot.slane %v2935, 1
      %v3327 = vsel %vm1152, %v3324, %v3326
      %v3329 = vsel %vm757, %v3299, 0
      %v3332 = vsel %vm757, %v3301, 0
      %v3335 = vsel %vm757, %v3303, 0
      %v3338 = vsel %vm757, %v3305, 0
      %v3341 = vsel %vm757, %v3307, 0
      %v3344 = vsel %vm757, %v3309, 0
      %v3347 = vsel %vm757, %v3311, 0
      %v3350 = vsel %vm757, %v3313, 0
      %v3353 = vsel %vm757, %v3315, 0
      %v3356 = vsel %vm757, %v3317, 0
      %v3359 = vsel %vm757, %v3319, 0
      %v3362 = vsel %vm757, %v3321, 0
      %v3365 = vsel %vm757, %v3323, 0
      %v3368 = vsel %vm757, %v3325, 0
      %v3371 = vsel %vm757, %v3327, 0
      %v3374 = vsel %vm803, %v3293, 0
      %3376 = vmatprep.subr.bf16.mxu0 0
      %3377 = vmatpush1.bf16.msra.mxu0 %v3374
      %3378 = vmatprep.subr.bf16.mxu0 0
      %3379 = vmatpush1.bf16.msra.mxu0 0
      %3380 = vmatprep.subr.bf16.mxu0 0
      %3381 = vmatpush1.bf16.msra.mxu0 0
      %3382 = vmatprep.subr.bf16.mxu0 0
      %3383 = vmatpush1.bf16.msra.mxu0 0
      %3384 = vmatprep.subr.bf16.mxu0 0
      %3385 = vmatpush1.bf16.msra.mxu0 0
      %3386 = vmatprep.subr.bf16.mxu0 0
      %3387 = vmatpush1.bf16.msra.mxu0 0
      %3388 = vmatprep.subr.bf16.mxu0 0
      %3389 = vmatpush1.bf16.msra.mxu0 0
      %3390 = vmatprep.subr.bf16.mxu0 0
      %3391 = vmatpush1.bf16.msra.mxu0 0
      %3392 = vmatprep.subr.bf16.mxu0 0
      %3393 = vmatpush1.bf16.msra.mxu0 0
      %3394 = vmatprep.subr.bf16.mxu0 0
      %3395 = vmatpush1.bf16.msra.mxu0 0
      %3396 = vmatprep.subr.bf16.mxu0 0
      %3397 = vmatpush1.bf16.msra.mxu0 0
      %3398 = vmatprep.subr.bf16.mxu0 0
      %3399 = vmatpush1.bf16.msra.mxu0 0
      %3400 = vmatprep.subr.bf16.mxu0 0
      %3401 = vmatpush1.bf16.msra.mxu0 0
      %3402 = vmatprep.subr.bf16.mxu0 0
      %3403 = vmatpush1.bf16.msra.mxu0 0
      %3404 = vmatprep.subr.bf16.mxu0 0
      %3405 = vmatpush1.bf16.msra.mxu0 0
      %3406 = vmatprep.subr.bf16.mxu0 0
      %3407 = vmatpush1.bf16.msra.mxu0 0
      %3408 = vmatprep.mubr.bf16.mxu0 0
      %3409 = vmatmul.mubr.bf16.gmra.mrb[0].mxu0 %v3329
      %v3410 = vpop.f32.mrb[0].mxu0
      %v3411 = vadd.f32 0.0, %v3410
      %v3412 = vpop.f32.mrb[0].mxu0
      %v3413 = vpop.f32.mrb[0].mxu0
      %v3414 = vadd.f32 0.0, %v3413
      %v3415 = vpop.f32.mrb[0].mxu0
      %3416 = vmatprep.mubr.bf16.mxu0 0
      %3417 = vmatmul.mubr.bf16.gmra.mrb[0].mxu0 %v3332
      %v3418 = vpop.f32.mrb[0].mxu0
      %v3419 = vadd.f32 0.0, %v3418
      %v3420 = vpop.f32.mrb[0].mxu0
      %v3421 = vpop.f32.mrb[0].mxu0
      %v3422 = vadd.f32 0.0, %v3421
      %v3423 = vpop.f32.mrb[0].mxu0
      %3424 = vmatprep.mubr.bf16.mxu0 0
      %3425 = vmatmul.mubr.bf16.gmra.mrb[0].mxu0 %v3335
      %v3426 = vpop.f32.mrb[0].mxu0
      %v3427 = vadd.f32 0.0, %v3426
      %v3428 = vpop.f32.mrb[0].mxu0
      %v3429 = vpop.f32.mrb[0].mxu0
      %v3430 = vadd.f32 0.0, %v3429
      %v3431 = vpop.f32.mrb[0].mxu0
      %3432 = vmatprep.mubr.bf16.mxu0 0
      %3433 = vmatmul.mubr.bf16.gmra.mrb[0].mxu0 %v3338
      %v3434 = vpop.f32.mrb[0].mxu0
      %v3435 = vadd.f32 0.0, %v3434
      %v3436 = vpop.f32.mrb[0].mxu0
      %v3437 = vpop.f32.mrb[0].mxu0
      %v3438 = vadd.f32 0.0, %v3437
      %v3439 = vpop.f32.mrb[0].mxu0
      %3440 = vmatprep.mubr.bf16.mxu0 0
      %3441 = vmatmul.mubr.bf16.gmra.mrb[0].mxu0 %v3341
      %v3442 = vpop.f32.mrb[0].mxu0
      %v3443 = vadd.f32 0.0, %v3442
      %v3444 = vpop.f32.mrb[0].mxu0
      %v3445 = vpop.f32.mrb[0].mxu0
      %v3446 = vadd.f32 0.0, %v3445
      %v3447 = vpop.f32.mrb[0].mxu0
      %3448 = vmatprep.mubr.bf16.mxu0 0
      %3449 = vmatmul.mubr.bf16.gmra.mrb[0].mxu0 %v3344
      %v3450 = vpop.f32.mrb[0].mxu0
      %v3451 = vadd.f32 0.0, %v3450
      %v3452 = vpop.f32.mrb[0].mxu0
      %v3453 = vpop.f32.mrb[0].mxu0
      %v3454 = vadd.f32 0.0, %v3453
      %v3455 = vpop.f32.mrb[0].mxu0
      %3456 = vmatprep.mubr.bf16.mxu0 0
      %3457 = vmatmul.mubr.bf16.gmra.mrb[0].mxu0 %v3347
      %v3458 = vpop.f32.mrb[0].mxu0
      %v3459 = vadd.f32 0.0, %v3458
      %v3460 = vpop.f32.mrb[0].mxu0
      %v3461 = vpop.f32.mrb[0].mxu0
      %v3462 = vadd.f32 0.0, %v3461
      %v3463 = vpop.f32.mrb[0].mxu0
      %3464 = vmatprep.mubr.bf16.mxu0 0
      %3465 = vmatmul.mubr.bf16.gmra.mrb[0].mxu0 %v3350
      %v3466 = vpop.f32.mrb[0].mxu0
      %v3467 = vadd.f32 0.0, %v3466
      %v3468 = vpop.f32.mrb[0].mxu0
      %v3469 = vpop.f32.mrb[0].mxu0
      %v3470 = vadd.f32 0.0, %v3469
      %v3471 = vpop.f32.mrb[0].mxu0
      %3472 = vmatprep.mubr.bf16.mxu0 0
      %3473 = vmatmul.mubr.bf16.gmra.mrb[0].mxu0 %v3353
      %v3474 = vpop.f32.mrb[0].mxu0
      %v3475 = vadd.f32 0.0, %v3474
      %v3476 = vpop.f32.mrb[0].mxu0
      %v3477 = vpop.f32.mrb[0].mxu0
      %v3478 = vadd.f32 0.0, %v3477
      %v3479 = vpop.f32.mrb[0].mxu0
      %3480 = vmatprep.mubr.bf16.mxu0 0
      %3481 = vmatmul.mubr.bf16.gmra.mrb[0].mxu0 %v3356
      %v3482 = vpop.f32.mrb[0].mxu0
      %v3483 = vadd.f32 0.0, %v3482
      %v3484 = vpop.f32.mrb[0].mxu0
      %v3485 = vpop.f32.mrb[0].mxu0
      %v3486 = vadd.f32 0.0, %v3485
      %v3487 = vpop.f32.mrb[0].mxu0
      %3488 = vmatprep.mubr.bf16.mxu0 0
      %3489 = vmatmul.mubr.bf16.gmra.mrb[0].mxu0 %v3359
      %v3490 = vpop.f32.mrb[0].mxu0
      %v3491 = vadd.f32 0.0, %v3490
      %v3492 = vpop.f32.mrb[0].mxu0
      %v3493 = vpop.f32.mrb[0].mxu0
      %v3494 = vadd.f32 0.0, %v3493
      %v3495 = vpop.f32.mrb[0].mxu0
      %3496 = vmatprep.mubr.bf16.mxu0 0
      %3497 = vmatmul.mubr.bf16.gmra.mrb[0].mxu0 %v3362
      %v3498 = vpop.f32.mrb[0].mxu0
      %v3499 = vadd.f32 0.0, %v3498
      %v3500 = vpop.f32.mrb[0].mxu0
      %v3501 = vpop.f32.mrb[0].mxu0
      %v3502 = vadd.f32 0.0, %v3501
      %v3503 = vpop.f32.mrb[0].mxu0
      %3504 = vmatprep.mubr.bf16.mxu0 0
      %3505 = vmatmul.mubr.bf16.gmra.mrb[0].mxu0 %v3365
      %v3506 = vpop.f32.mrb[0].mxu0
      %v3507 = vadd.f32 0.0, %v3506
      %v3508 = vpop.f32.mrb[0].mxu0
      %v3509 = vpop.f32.mrb[0].mxu0
      %v3510 = vadd.f32 0.0, %v3509
      %v3511 = vpop.f32.mrb[0].mxu0
      %3512 = vmatprep.mubr.bf16.mxu0 0
      %3513 = vmatmul.mubr.bf16.gmra.mrb[0].mxu0 %v3368
      %v3514 = vpop.f32.mrb[0].mxu0
      %v3515 = vadd.f32 0.0, %v3514
      %v3516 = vpop.f32.mrb[0].mxu0
      %v3517 = vpop.f32.mrb[0].mxu0
      %v3518 = vadd.f32 0.0, %v3517
      %v3519 = vpop.f32.mrb[0].mxu0
      %3520 = vmatprep.mubr.bf16.mxu0 0
      %3521 = vmatmul.mubr.bf16.gmra.mrb[0].mxu0 %v3371
      %v3522 = vpop.f32.mrb[0].mxu0
      %v3523 = vadd.f32 0.0, %v3522
      %v3524 = vpop.f32.mrb[0].mxu0
      %v3525 = vpop.f32.mrb[0].mxu0
      %v3526 = vadd.f32 0.0, %v3525
      %v3527 = vpop.f32.mrb[0].mxu0
      %3528 = vdwg.mxu0
      %v3529 = vadd.f32 %v3261, %v3411
      %v3530 = vadd.f32 %v3262, %v3414
      %v3531 = vadd.f32 %v3263, %v3419
      %v3532 = vadd.f32 %v3264, %v3422
      %v3533 = vadd.f32 %v3265, %v3427
      %v3534 = vadd.f32 %v3266, %v3430
      %v3535 = vadd.f32 %v3267, %v3435
      %v3536 = vadd.f32 %v3268, %v3438
      %v3537 = vadd.f32 %v3269, %v3443
      %v3538 = vadd.f32 %v3270, %v3446
      %v3539 = vadd.f32 %v3271, %v3451
      %v3540 = vadd.f32 %v3272, %v3454
      %v3541 = vadd.f32 %v3273, %v3459
      %v3542 = vadd.f32 %v3274, %v3462
      %v3543 = vadd.f32 %v3275, %v3467
      %v3544 = vadd.f32 %v3276, %v3470
      %v3545 = vadd.f32 %v3277, %v3475
      %v3546 = vadd.f32 %v3278, %v3478
      %v3547 = vadd.f32 %v3279, %v3483
      %v3548 = vadd.f32 %v3280, %v3486
      %v3549 = vadd.f32 %v3281, %v3491
      %v3550 = vadd.f32 %v3282, %v3494
      %v3551 = vadd.f32 %v3283, %v3499
      %v3552 = vadd.f32 %v3284, %v3502
      %v3553 = vadd.f32 %v3285, %v3507
      %v3554 = vadd.f32 %v3286, %v3510
      %v3555 = vadd.f32 %v3287, %v3515
      %v3556 = vadd.f32 %v3288, %v3518
      %v3557 = vadd.f32 %v3289, %v3523
      %v3558 = vadd.f32 %v3290, %v3526
      %v3559 = vld [vmem:[%s3] sm:$0x1]
      %v3561 = vlaneseq
      %v3562 = vshrl.u32 %v3561, 7
      %v3563 = vsub.s32 0, %v3562
      %v3564 = vrot.slane %v3559, %v3563
      %v3566 = vmul.f32 %v3529, %v3564
      %v3567 = vmul.f32 %v3530, %v3564
      %v3568 = vmul.f32 %v3531, %v3564
      %v3569 = vmul.f32 %v3532, %v3564
      %v3570 = vmul.f32 %v3533, %v3564
      %v3571 = vmul.f32 %v3534, %v3564
      %v3572 = vmul.f32 %v3535, %v3564
      %v3573 = vmul.f32 %v3536, %v3564
      %v3574 = vmul.f32 %v3537, %v3564
      %v3575 = vmul.f32 %v3538, %v3564
      %v3576 = vmul.f32 %v3539, %v3564
      %v3577 = vmul.f32 %v3540, %v3564
      %v3578 = vmul.f32 %v3541, %v3564
      %v3579 = vmul.f32 %v3542, %v3564
      %v3580 = vmul.f32 %v3543, %v3564
      %v3581 = vmul.f32 %v3544, %v3564
      %v3582 = vmul.f32 %v3545, %v3564
      %v3583 = vmul.f32 %v3546, %v3564
      %v3584 = vmul.f32 %v3547, %v3564
      %v3585 = vmul.f32 %v3548, %v3564
      %v3586 = vmul.f32 %v3549, %v3564
      %v3587 = vmul.f32 %v3550, %v3564
      %v3588 = vmul.f32 %v3551, %v3564
      %v3589 = vmul.f32 %v3552, %v3564
      %v3590 = vmul.f32 %v3553, %v3564
      %v3591 = vmul.f32 %v3554, %v3564
      %v3592 = vmul.f32 %v3555, %v3564
      %v3593 = vmul.f32 %v3556, %v3564
      %v3594 = vmul.f32 %v3557, %v3564
      %v3595 = vmul.f32 %v3558, %v3564
      %v3596 = vld [vmem:[%s4] sm:$0x1]
      %v3598 = vlaneseq
      %v3599 = vshrl.u32 %v3598, 7
      %v3600 = vsub.s32 0, %v3599
      %v3601 = vrot.slane %v3596, %v3600
      %v3603 = vadd.f32 %v3566, %v3601
      %v3604 = vadd.f32 %v3567, %v3601
      %v3605 = vadd.f32 %v3568, %v3601
      %v3606 = vadd.f32 %v3569, %v3601
      %v3607 = vadd.f32 %v3570, %v3601
      %v3608 = vadd.f32 %v3571, %v3601
      %v3609 = vadd.f32 %v3572, %v3601
      %v3610 = vadd.f32 %v3573, %v3601
      %v3611 = vadd.f32 %v3574, %v3601
      %v3612 = vadd.f32 %v3575, %v3601
      %v3613 = vadd.f32 %v3576, %v3601
      %v3614 = vadd.f32 %v3577, %v3601
      %v3615 = vadd.f32 %v3578, %v3601
      %v3616 = vadd.f32 %v3579, %v3601
      %v3617 = vadd.f32 %v3580, %v3601
      %v3618 = vadd.f32 %v3581, %v3601
      %v3619 = vadd.f32 %v3582, %v3601
      %v3620 = vadd.f32 %v3583, %v3601
      %v3621 = vadd.f32 %v3584, %v3601
      %v3622 = vadd.f32 %v3585, %v3601
      %v3623 = vadd.f32 %v3586, %v3601
      %v3624 = vadd.f32 %v3587, %v3601
      %v3625 = vadd.f32 %v3588, %v3601
      %v3626 = vadd.f32 %v3589, %v3601
      %v3627 = vadd.f32 %v3590, %v3601
      %v3628 = vadd.f32 %v3591, %v3601
      %v3629 = vadd.f32 %v3592, %v3601
      %v3630 = vadd.f32 %v3593, %v3601
      %v3631 = vadd.f32 %v3594, %v3601
      %v3632 = vadd.f32 %v3595, %v3601
      %v3633 = vmax.f32 %v3603, 0.0
      %v3634 = vmax.f32 %v3604, 0.0
      %v3635 = vmax.f32 %v3605, 0.0
      %v3636 = vmax.f32 %v3606, 0.0
      %v3637 = vmax.f32 %v3607, 0.0
      %v3638 = vmax.f32 %v3608, 0.0
      %v3639 = vmax.f32 %v3609, 0.0
      %v3640 = vmax.f32 %v3610, 0.0
      %v3641 = vmax.f32 %v3611, 0.0
      %v3642 = vmax.f32 %v3612, 0.0
      %v3643 = vmax.f32 %v3613, 0.0
      %v3644 = vmax.f32 %v3614, 0.0
      %v3645 = vmax.f32 %v3615, 0.0
      %v3646 = vmax.f32 %v3616, 0.0
      %v3647 = vmax.f32 %v3617, 0.0
      %v3648 = vmax.f32 %v3618, 0.0
      %v3649 = vmax.f32 %v3619, 0.0
      %v3650 = vmax.f32 %v3620, 0.0
      %v3651 = vmax.f32 %v3621, 0.0
      %v3652 = vmax.f32 %v3622, 0.0
      %v3653 = vmax.f32 %v3623, 0.0
      %v3654 = vmax.f32 %v3624, 0.0
      %v3655 = vmax.f32 %v3625, 0.0
      %v3656 = vmax.f32 %v3626, 0.0
      %v3657 = vmax.f32 %v3627, 0.0
      %v3658 = vmax.f32 %v3628, 0.0
      %v3659 = vmax.f32 %v3629, 0.0
      %v3660 = vmax.f32 %v3630, 0.0
      %v3661 = vmax.f32 %v3631, 0.0
      %v3662 = vmax.f32 %v3632, 0.0
      %v3663 = vld [vmem:[%s435] sm:$0xff]
      %v3664 = vld [vmem:[%s435 + $0x8] sm:$0xff]
      %v3665 = vld [vmem:[%s435 + $0x10] sm:$0xff]
      %v3666 = vld [vmem:[%s435 + $0x18] sm:$0xff]
      %v3667 = vld [vmem:[%s435 + $0x20] sm:$0xff]
      %v3668 = vld [vmem:[%s435 + $0x28] sm:$0xff]
      %v3669 = vld [vmem:[%s435 + $0x30] sm:$0xff]
      %v3670 = vld [vmem:[%s435 + $0x38] sm:$0xff]
      %v3671 = vld [vmem:[%s435 + $0x40] sm:$0xff]
      %v3672 = vld [vmem:[%s435 + $0x48] sm:$0xff]
      %v3673 = vld [vmem:[%s435 + $0x50] sm:$0xff]
      %v3674 = vld [vmem:[%s435 + $0x58] sm:$0xff]
      %v3675 = vld [vmem:[%s435 + $0x60] sm:$0xff]
      %v3676 = vld [vmem:[%s435 + $0x68] sm:$0xff]
      %v3677 = vld [vmem:[%s435 + $0x70] sm:$0xff]
      %v3678 = vld [vmem:[%s435 + $0x78] sm:$0xff]
      %v3679 = vld [vmem:[%s435 + $0x80] sm:$0xff]
      %v3680 = vld [vmem:[%s435 + $0x88] sm:$0xff]
      %v3681 = vld [vmem:[%s435 + $0x90] sm:$0xff]
      %v3682 = vld [vmem:[%s435 + $0x98] sm:$0xff]
      %v3683 = vld [vmem:[%s435 + $0xa0] sm:$0xff]
      %v3684 = vld [vmem:[%s435 + $0xa8] sm:$0xff]
      %v3685 = vld [vmem:[%s435 + $0xb0] sm:$0xff]
      %v3686 = vld [vmem:[%s435 + $0xb8] sm:$0xff]
      %v3687 = vld [vmem:[%s435 + $0xc0] sm:$0xff]
      %v3688 = vld [vmem:[%s435 + $0xc8] sm:$0xff]
      %v3689 = vld [vmem:[%s435 + $0xd0] sm:$0xff]
      %v3690 = vld [vmem:[%s435 + $0xd8] sm:$0xff]
      %v3691 = vld [vmem:[%s435 + $0xe0] sm:$0xff]
      %v3692 = vld [vmem:[%s435 + $0xe8] sm:$0xff]
      %3694 = vset.pattern.permute.xlu0 0
      %3695 = vperm.xlu0 %3694, %v3663
      %v3696 = vpop.permute.xlu0 %3695
      %3699 = vset.pattern.permute.xlu0 0
      %3700 = vperm.xlu0 %3699, %v3664
      %v3701 = vpop.permute.xlu0 %3700
      %3704 = vset.pattern.permute.xlu0 0
      %3705 = vperm.xlu0 %3704, %v3665
      %v3706 = vpop.permute.xlu0 %3705
      %3709 = vset.pattern.permute.xlu0 0
      %3710 = vperm.xlu0 %3709, %v3666
      %v3711 = vpop.permute.xlu0 %3710
      %3714 = vset.pattern.permute.xlu0 0
      %3715 = vperm.xlu0 %3714, %v3667
      %v3716 = vpop.permute.xlu0 %3715
      %3719 = vset.pattern.permute.xlu0 0
      %3720 = vperm.xlu0 %3719, %v3668
      %v3721 = vpop.permute.xlu0 %3720
      %3724 = vset.pattern.permute.xlu0 0
      %3725 = vperm.xlu0 %3724, %v3669
      %v3726 = vpop.permute.xlu0 %3725
      %3729 = vset.pattern.permute.xlu0 0
      %3730 = vperm.xlu0 %3729, %v3670
      %v3731 = vpop.permute.xlu0 %3730
      %3734 = vset.pattern.permute.xlu0 0
      %3735 = vperm.xlu0 %3734, %v3671
      %v3736 = vpop.permute.xlu0 %3735
      %3739 = vset.pattern.permute.xlu0 0
      %3740 = vperm.xlu0 %3739, %v3672
      %v3741 = vpop.permute.xlu0 %3740
      %3744 = vset.pattern.permute.xlu0 0
      %3745 = vperm.xlu0 %3744, %v3673
      %v3746 = vpop.permute.xlu0 %3745
      %3749 = vset.pattern.permute.xlu0 0
      %3750 = vperm.xlu0 %3749, %v3674
      %v3751 = vpop.permute.xlu0 %3750
      %3754 = vset.pattern.permute.xlu0 0
      %3755 = vperm.xlu0 %3754, %v3675
      %v3756 = vpop.permute.xlu0 %3755
      %3759 = vset.pattern.permute.xlu0 0
      %3760 = vperm.xlu0 %3759, %v3676
      %v3761 = vpop.permute.xlu0 %3760
      %3764 = vset.pattern.permute.xlu0 0
      %3765 = vperm.xlu0 %3764, %v3677
      %v3766 = vpop.permute.xlu0 %3765
      %3769 = vset.pattern.permute.xlu0 0
      %3770 = vperm.xlu0 %3769, %v3678
      %v3771 = vpop.permute.xlu0 %3770
      %3774 = vset.pattern.permute.xlu0 0
      %3775 = vperm.xlu0 %3774, %v3679
      %v3776 = vpop.permute.xlu0 %3775
      %3779 = vset.pattern.permute.xlu0 0
      %3780 = vperm.xlu0 %3779, %v3680
      %v3781 = vpop.permute.xlu0 %3780
      %3784 = vset.pattern.permute.xlu0 0
      %3785 = vperm.xlu0 %3784, %v3681
      %v3786 = vpop.permute.xlu0 %3785
      %3789 = vset.pattern.permute.xlu0 0
      %3790 = vperm.xlu0 %3789, %v3682
      %v3791 = vpop.permute.xlu0 %3790
      %3794 = vset.pattern.permute.xlu0 0
      %3795 = vperm.xlu0 %3794, %v3683
      %v3796 = vpop.permute.xlu0 %3795
      %3799 = vset.pattern.permute.xlu0 0
      %3800 = vperm.xlu0 %3799, %v3684
      %v3801 = vpop.permute.xlu0 %3800
      %3804 = vset.pattern.permute.xlu0 0
      %3805 = vperm.xlu0 %3804, %v3685
      %v3806 = vpop.permute.xlu0 %3805
      %3809 = vset.pattern.permute.xlu0 0
      %3810 = vperm.xlu0 %3809, %v3686
      %v3811 = vpop.permute.xlu0 %3810
      %3814 = vset.pattern.permute.xlu0 0
      %3815 = vperm.xlu0 %3814, %v3687
      %v3816 = vpop.permute.xlu0 %3815
      %3819 = vset.pattern.permute.xlu0 0
      %3820 = vperm.xlu0 %3819, %v3688
      %v3821 = vpop.permute.xlu0 %3820
      %3824 = vset.pattern.permute.xlu0 0
      %3825 = vperm.xlu0 %3824, %v3689
      %v3826 = vpop.permute.xlu0 %3825
      %3829 = vset.pattern.permute.xlu0 0
      %3830 = vperm.xlu0 %3829, %v3690
      %v3831 = vpop.permute.xlu0 %3830
      %3834 = vset.pattern.permute.xlu0 0
      %3835 = vperm.xlu0 %3834, %v3691
      %v3836 = vpop.permute.xlu0 %3835
      %3839 = vset.pattern.permute.xlu0 0
      %3840 = vperm.xlu0 %3839, %v3692
      %v3841 = vpop.permute.xlu0 %3840
      %v3843 = vmul.f32 %v3633, %v3696
      %v3844 = vmul.f32 %v3634, %v3701
      %v3845 = vmul.f32 %v3635, %v3706
      %v3846 = vmul.f32 %v3636, %v3711
      %v3847 = vmul.f32 %v3637, %v3716
      %v3848 = vmul.f32 %v3638, %v3721
      %v3849 = vmul.f32 %v3639, %v3726
      %v3850 = vmul.f32 %v3640, %v3731
      %v3851 = vmul.f32 %v3641, %v3736
      %v3852 = vmul.f32 %v3642, %v3741
      %v3853 = vmul.f32 %v3643, %v3746
      %v3854 = vmul.f32 %v3644, %v3751
      %v3855 = vmul.f32 %v3645, %v3756
      %v3856 = vmul.f32 %v3646, %v3761
      %v3857 = vmul.f32 %v3647, %v3766
      %v3858 = vmul.f32 %v3648, %v3771
      %v3859 = vmul.f32 %v3649, %v3776
      %v3860 = vmul.f32 %v3650, %v3781
      %v3861 = vmul.f32 %v3651, %v3786
      %v3862 = vmul.f32 %v3652, %v3791
      %v3863 = vmul.f32 %v3653, %v3796
      %v3864 = vmul.f32 %v3654, %v3801
      %v3865 = vmul.f32 %v3655, %v3806
      %v3866 = vmul.f32 %v3656, %v3811
      %v3867 = vmul.f32 %v3657, %v3816
      %v3868 = vmul.f32 %v3658, %v3821
      %v3869 = vmul.f32 %v3659, %v3826
      %v3870 = vmul.f32 %v3660, %v3831
      %v3871 = vmul.f32 %v3661, %v3836
      %v3872 = vmul.f32 %v3662, %v3841
      %v3873 = vpack.c.bf16 %v3844, %v3843
      %v3874 = vpack.c.bf16 %v3846, %v3845
      %v3875 = vpack.c.bf16 %v3848, %v3847
      %v3876 = vpack.c.bf16 %v3850, %v3849
      %v3877 = vpack.c.bf16 %v3852, %v3851
      %v3878 = vpack.c.bf16 %v3854, %v3853
      %v3879 = vpack.c.bf16 %v3856, %v3855
      %v3880 = vpack.c.bf16 %v3858, %v3857
      %v3881 = vpack.c.bf16 %v3860, %v3859
      %v3882 = vpack.c.bf16 %v3862, %v3861
      %v3883 = vpack.c.bf16 %v3864, %v3863
      %v3884 = vpack.c.bf16 %v3866, %v3865
      %v3885 = vpack.c.bf16 %v3868, %v3867
      %v3886 = vpack.c.bf16 %v3870, %v3869
      %v3887 = vpack.c.bf16 %v3872, %v3871
      %v3903 = vunpack.c.l.b16 %v3873
      %v3904 = vunpack.c.h.b16 %v3873
      %v3905 = vunpack.c.l.b16 %v3874
      %v3906 = vunpack.c.h.b16 %v3874
      %v3907 = vunpack.c.l.b16 %v3875
      %v3908 = vunpack.c.h.b16 %v3875
      %v3909 = vunpack.c.l.b16 %v3876
      %v3910 = vunpack.c.h.b16 %v3876
      %v3911 = vunpack.c.l.b16 %v3877
      %v3912 = vunpack.c.h.b16 %v3877
      %v3913 = vunpack.c.l.b16 %v3878
      %v3914 = vunpack.c.h.b16 %v3878
      %v3915 = vunpack.c.l.b16 %v3879
      %v3916 = vunpack.c.h.b16 %v3879
      %v3917 = vunpack.c.l.b16 %v3880
      %v3918 = vunpack.c.h.b16 %v3880
      %v3919 = vunpack.c.l.b16 %v3881
      %v3920 = vunpack.c.h.b16 %v3881
      %v3921 = vunpack.c.l.b16 %v3882
      %v3922 = vunpack.c.h.b16 %v3882
      %v3923 = vunpack.c.l.b16 %v3883
      %v3924 = vunpack.c.h.b16 %v3883
      %v3925 = vunpack.c.l.b16 %v3884
      %v3926 = vunpack.c.h.b16 %v3884
      %v3927 = vunpack.c.l.b16 %v3885
      %v3928 = vunpack.c.h.b16 %v3885
      %v3929 = vunpack.c.l.b16 %v3886
      %v3930 = vunpack.c.h.b16 %v3886
      %v3931 = vunpack.c.l.b16 %v3887
      %v3932 = vunpack.c.h.b16 %v3887
      %v3933 = vpack.c.b16 %v3903, %v3903
      %v3934 = vpack.c.b16 %v3904, %v3904
      %v3935 = vpack.c.b16 %v3905, %v3905
      %v3936 = vpack.c.b16 %v3906, %v3906
      %v3937 = vpack.c.b16 %v3907, %v3907
      %v3938 = vpack.c.b16 %v3908, %v3908
      %v3939 = vpack.c.b16 %v3909, %v3909
      %v3940 = vpack.c.b16 %v3910, %v3910
      %v3941 = vpack.c.b16 %v3911, %v3911
      %v3942 = vpack.c.b16 %v3912, %v3912
      %v3943 = vpack.c.b16 %v3913, %v3913
      %v3944 = vpack.c.b16 %v3914, %v3914
      %v3945 = vpack.c.b16 %v3915, %v3915
      %v3946 = vpack.c.b16 %v3916, %v3916
      %v3947 = vpack.c.b16 %v3917, %v3917
      %v3948 = vpack.c.b16 %v3918, %v3918
      %v3949 = vpack.c.b16 %v3919, %v3919
      %v3950 = vpack.c.b16 %v3920, %v3920
      %v3951 = vpack.c.b16 %v3921, %v3921
      %v3952 = vpack.c.b16 %v3922, %v3922
      %v3953 = vpack.c.b16 %v3923, %v3923
      %v3954 = vpack.c.b16 %v3924, %v3924
      %v3955 = vpack.c.b16 %v3925, %v3925
      %v3956 = vpack.c.b16 %v3926, %v3926
      %v3957 = vpack.c.b16 %v3927, %v3927
      %v3958 = vpack.c.b16 %v3928, %v3928
      %v3959 = vpack.c.b16 %v3929, %v3929
      %v3960 = vpack.c.b16 %v3930, %v3930
      %v3961 = vpack.c.b16 %v3931, %v3931
      %v3962 = vpack.c.b16 %v3932, %v3932
      %vm3993 = vcmask 27648
      %3994 = vst.msk [vmem:[#allocation3] sm:$0xf] %vm3993, %v3933
      %3995 = vst.msk [vmem:[#allocation3 + $0x4] sm:$0xf] %vm3993, %v3934
      %3996 = vst.msk [vmem:[#allocation3 + $0x8] sm:$0xf] %vm3993, %v3935
      %3997 = vst.msk [vmem:[#allocation3 + $0xc] sm:$0xf] %vm3993, %v3936
      %3998 = vst.msk [vmem:[#allocation3 + $0x10] sm:$0xf] %vm3993, %v3937
      %3999 = vst.msk [vmem:[#allocation3 + $0x14] sm:$0xf] %vm3993, %v3938
      %4000 = vst.msk [vmem:[#allocation3 + $0x18] sm:$0xf] %vm3993, %v3939
      %4001 = vst.msk [vmem:[#allocation3 + $0x1c] sm:$0xf] %vm3993, %v3940
      %4002 = vst.msk [vmem:[#allocation3 + $0x20] sm:$0xf] %vm3993, %v3941
      %4003 = vst.msk [vmem:[#allocation3 + $0x24] sm:$0xf] %vm3993, %v3942
      %4004 = vst.msk [vmem:[#allocation3 + $0x28] sm:$0xf] %vm3993, %v3943
      %4005 = vst.msk [vmem:[#allocation3 + $0x2c] sm:$0xf] %vm3993, %v3944
      %4006 = vst.msk [vmem:[#allocation3 + $0x30] sm:$0xf] %vm3993, %v3945
      %4007 = vst.msk [vmem:[#allocation3 + $0x34] sm:$0xf] %vm3993, %v3946
      %4008 = vst.msk [vmem:[#allocation3 + $0x38] sm:$0xf] %vm3993, %v3947
      %4009 = vst.msk [vmem:[#allocation3 + $0x3c] sm:$0xf] %vm3993, %v3948
      %4010 = vst.msk [vmem:[#allocation3 + $0x40] sm:$0xf] %vm3993, %v3949
      %4011 = vst.msk [vmem:[#allocation3 + $0x44] sm:$0xf] %vm3993, %v3950
      %4012 = vst.msk [vmem:[#allocation3 + $0x48] sm:$0xf] %vm3993, %v3951
      %4013 = vst.msk [vmem:[#allocation3 + $0x4c] sm:$0xf] %vm3993, %v3952
      %4014 = vst.msk [vmem:[#allocation3 + $0x50] sm:$0xf] %vm3993, %v3953
      %4015 = vst.msk [vmem:[#allocation3 + $0x54] sm:$0xf] %vm3993, %v3954
      %4016 = vst.msk [vmem:[#allocation3 + $0x58] sm:$0xf] %vm3993, %v3955
      %4017 = vst.msk [vmem:[#allocation3 + $0x5c] sm:$0xf] %vm3993, %v3956
      %4018 = vst.msk [vmem:[#allocation3 + $0x60] sm:$0xf] %vm3993, %v3957
      %4019 = vst.msk [vmem:[#allocation3 + $0x64] sm:$0xf] %vm3993, %v3958
      %4020 = vst.msk [vmem:[#allocation3 + $0x68] sm:$0xf] %vm3993, %v3959
      %4021 = vst.msk [vmem:[#allocation3 + $0x6c] sm:$0xf] %vm3993, %v3960
      %4022 = vst.msk [vmem:[#allocation3 + $0x70] sm:$0xf] %vm3993, %v3961
      %4023 = vst.msk [vmem:[#allocation3 + $0x74] sm:$0xf] %vm3993, %v3962
      %4024 = vst.msk [vmem:[#allocation3 + $0x78] sm:$0xf] %vm3993, 0
      %v4025 = vld [vmem:[#allocation3] sm:$0xf]
      %v4026 = vld [vmem:[#allocation3 + $0x4] sm:$0xf]
      %v4027 = vld [vmem:[#allocation3 + $0x8] sm:$0xf]
      %v4028 = vld [vmem:[#allocation3 + $0xc] sm:$0xf]
      %v4029 = vld [vmem:[#allocation3 + $0x10] sm:$0xf]
      %v4030 = vld [vmem:[#allocation3 + $0x14] sm:$0xf]
      %v4031 = vld [vmem:[#allocation3 + $0x18] sm:$0xf]
      %v4032 = vld [vmem:[#allocation3 + $0x1c] sm:$0xf]
      %v4033 = vld [vmem:[#allocation3 + $0x20] sm:$0xf]
      %v4034 = vld [vmem:[#allocation3 + $0x24] sm:$0xf]
      %v4035 = vld [vmem:[#allocation3 + $0x28] sm:$0xf]
      %v4036 = vld [vmem:[#allocation3 + $0x2c] sm:$0xf]
      %v4037 = vld [vmem:[#allocation3 + $0x30] sm:$0xf]
      %v4038 = vld [vmem:[#allocation3 + $0x34] sm:$0xf]
      %v4039 = vld [vmem:[#allocation3 + $0x38] sm:$0xf]
      %v4040 = vld [vmem:[#allocation3 + $0x3c] sm:$0xf]
      %v4041 = vld [vmem:[#allocation3 + $0x40] sm:$0xf]
      %v4042 = vld [vmem:[#allocation3 + $0x44] sm:$0xf]
      %v4043 = vld [vmem:[#allocation3 + $0x48] sm:$0xf]
      %v4044 = vld [vmem:[#allocation3 + $0x4c] sm:$0xf]
      %v4045 = vld [vmem:[#allocation3 + $0x50] sm:$0xf]
      %v4046 = vld [vmem:[#allocation3 + $0x54] sm:$0xf]
      %v4047 = vld [vmem:[#allocation3 + $0x58] sm:$0xf]
      %v4048 = vld [vmem:[#allocation3 + $0x5c] sm:$0xf]
      %v4049 = vld [vmem:[%s5] sm:$0x3]
      %v4050 = vld [vmem:[#allocation3 + $0x60] sm:$0x1]
      %s4051 = scalar_lea.vmem %s5, 2
      %v4052 = vld [vmem:[%s4051] sm:$0x3]
      %v4078 = vunpack.c.l.b16 %v4025
      %v4079 = vunpack.c.l.b16 %v4026
      %v4080 = vunpack.c.l.b16 %v4027
      %v4081 = vunpack.c.l.b16 %v4028
      %v4082 = vunpack.c.l.b16 %v4029
      %v4083 = vunpack.c.l.b16 %v4030
      %v4084 = vunpack.c.l.b16 %v4031
      %v4085 = vunpack.c.l.b16 %v4032
      %v4086 = vunpack.c.l.b16 %v4033
      %v4087 = vunpack.c.l.b16 %v4034
      %v4088 = vunpack.c.l.b16 %v4035
      %v4089 = vunpack.c.l.b16 %v4036
      %v4090 = vunpack.c.l.b16 %v4037
      %v4091 = vunpack.c.l.b16 %v4038
      %v4092 = vunpack.c.l.b16 %v4039
      %v4093 = vunpack.c.l.b16 %v4040
      %v4094 = vunpack.c.l.b16 %v4041
      %v4095 = vunpack.c.l.b16 %v4042
      %v4096 = vunpack.c.l.b16 %v4043
      %v4097 = vunpack.c.l.b16 %v4044
      %v4098 = vunpack.c.l.b16 %v4045
      %v4099 = vunpack.c.l.b16 %v4046
      %v4100 = vunpack.c.l.b16 %v4047
      %v4101 = vunpack.c.l.b16 %v4048
      %v4102 = vunpack.c.l.b16 %v4050
      %v4103 = vpack.c.b16 %v4079, %v4078
      %v4104 = vpack.c.b16 %v4081, %v4080
      %v4105 = vpack.c.b16 %v4083, %v4082
      %v4106 = vpack.c.b16 %v4085, %v4084
      %v4107 = vpack.c.b16 %v4087, %v4086
      %v4108 = vpack.c.b16 %v4089, %v4088
      %v4109 = vpack.c.b16 %v4091, %v4090
      %v4110 = vpack.c.b16 %v4093, %v4092
      %v4111 = vpack.c.b16 %v4095, %v4094
      %v4112 = vpack.c.b16 %v4097, %v4096
      %v4113 = vpack.c.b16 %v4099, %v4098
      %v4114 = vpack.c.b16 %v4101, %v4100
      %v4115 = vpack.c.b16 %v4102, %v4102
      %v4117 = vshrl.u32 %v4103, 16
      %v4119 = vshll.u32 %v4103, 16
      %v4121 = vrot.slane %v4119, 1
      %v4122 = vor.u32 %v4117, %v4121
      %v4124 = vshll.u32 %v4104, 16
      %v4126 = vrot.slane %v4124, 1
      %v4127 = vsel %vm632, %v4122, %v4126
      %v4128 = vshrl.u32 %v4104, 16
      %v4130 = vor.u32 %v4128, %v4126
      %v4132 = vshll.u32 %v4105, 16
      %v4134 = vrot.slane %v4132, 1
      %v4135 = vsel %vm632, %v4130, %v4134
      %v4136 = vshrl.u32 %v4105, 16
      %v4138 = vor.u32 %v4136, %v4134
      %v4140 = vshll.u32 %v4106, 16
      %v4142 = vrot.slane %v4140, 1
      %v4143 = vsel %vm632, %v4138, %v4142
      %v4144 = vshrl.u32 %v4106, 16
      %v4146 = vor.u32 %v4144, %v4142
      %v4148 = vshll.u32 %v4107, 16
      %v4150 = vrot.slane %v4148, 1
      %v4151 = vsel %vm632, %v4146, %v4150
      %v4152 = vshrl.u32 %v4107, 16
      %v4154 = vor.u32 %v4152, %v4150
      %v4156 = vshll.u32 %v4108, 16
      %v4158 = vrot.slane %v4156, 1
      %v4159 = vsel %vm632, %v4154, %v4158
      %v4160 = vshrl.u32 %v4108, 16
      %v4162 = vor.u32 %v4160, %v4158
      %v4164 = vshll.u32 %v4109, 16
      %v4166 = vrot.slane %v4164, 1
      %v4167 = vsel %vm632, %v4162, %v4166
      %v4168 = vshrl.u32 %v4109, 16
      %v4170 = vor.u32 %v4168, %v4166
      %v4172 = vshll.u32 %v4110, 16
      %v4174 = vrot.slane %v4172, 1
      %v4175 = vsel %vm632, %v4170, %v4174
      %v4176 = vshrl.u32 %v4110, 16
      %v4178 = vor.u32 %v4176, %v4174
      %v4180 = vshll.u32 %v4111, 16
      %v4182 = vrot.slane %v4180, 1
      %v4183 = vsel %vm632, %v4178, %v4182
      %v4184 = vshrl.u32 %v4111, 16
      %v4186 = vor.u32 %v4184, %v4182
      %v4188 = vshll.u32 %v4112, 16
      %v4190 = vrot.slane %v4188, 1
      %v4191 = vsel %vm632, %v4186, %v4190
      %v4192 = vshrl.u32 %v4112, 16
      %v4194 = vor.u32 %v4192, %v4190
      %v4196 = vshll.u32 %v4113, 16
      %v4198 = vrot.slane %v4196, 1
      %v4199 = vsel %vm632, %v4194, %v4198
      %v4200 = vshrl.u32 %v4113, 16
      %v4202 = vor.u32 %v4200, %v4198
      %v4204 = vshll.u32 %v4114, 16
      %v4206 = vrot.slane %v4204, 1
      %v4207 = vsel %vm632, %v4202, %v4206
      %v4208 = vshrl.u32 %v4114, 16
      %v4210 = vor.u32 %v4208, %v4206
      %v4212 = vshll.u32 %v4115, 16
      %v4214 = vrot.slane %v4212, 1
      %v4215 = vsel %vm632, %v4210, %v4214
      %vm4216 = vcmask 31744
      %v4218 = vsel %vm4216, %v4127, 0
      %v4221 = vsel %vm4216, %v4135, 0
      %v4224 = vsel %vm4216, %v4143, 0
      %v4227 = vsel %vm4216, %v4151, 0
      %v4230 = vsel %vm4216, %v4159, 0
      %v4233 = vsel %vm4216, %v4167, 0
      %v4236 = vsel %vm4216, %v4175, 0
      %v4239 = vsel %vm4216, %v4183, 0
      %v4242 = vsel %vm4216, %v4191, 0
      %v4245 = vsel %vm4216, %v4199, 0
      %v4248 = vsel %vm4216, %v4207, 0
      %v4251 = vsel %vm4216, %v4215, 0
      %vm4253 = vcmask 1041408
      %v4255 = vsel %vm4253, %v4052, 0
      %4257 = vmatprep.subr.bf16.mxu0 0
      %4258 = vmatpush1.bf16.msra.mxu0 %v4255
      %4259 = vmatprep.subr.bf16.mxu0 0
      %4260 = vmatpush1.bf16.msra.mxu0 0
      %4261 = vmatprep.subr.bf16.mxu0 0
      %4262 = vmatpush1.bf16.msra.mxu0 0
      %4263 = vmatprep.subr.bf16.mxu0 0
      %4264 = vmatpush1.bf16.msra.mxu0 0
      %4265 = vmatprep.subr.bf16.mxu0 0
      %4266 = vmatpush1.bf16.msra.mxu0 0
      %4267 = vmatprep.subr.bf16.mxu0 0
      %4268 = vmatpush1.bf16.msra.mxu0 0
      %4269 = vmatprep.subr.bf16.mxu0 0
      %4270 = vmatpush1.bf16.msra.mxu0 0
      %4271 = vmatprep.subr.bf16.mxu0 0
      %4272 = vmatpush1.bf16.msra.mxu0 0
      %4273 = vmatprep.subr.bf16.mxu0 0
      %4274 = vmatpush1.bf16.msra.mxu0 0
      %4275 = vmatprep.subr.bf16.mxu0 0
      %4276 = vmatpush1.bf16.msra.mxu0 0
      %4277 = vmatprep.subr.bf16.mxu0 0
      %4278 = vmatpush1.bf16.msra.mxu0 0
      %4279 = vmatprep.subr.bf16.mxu0 0
      %4280 = vmatpush1.bf16.msra.mxu0 0
      %4281 = vmatprep.subr.bf16.mxu0 0
      %4282 = vmatpush1.bf16.msra.mxu0 0
      %4283 = vmatprep.subr.bf16.mxu0 0
      %4284 = vmatpush1.bf16.msra.mxu0 0
      %4285 = vmatprep.subr.bf16.mxu0 0
      %4286 = vmatpush1.bf16.msra.mxu0 0
      %4287 = vmatprep.subr.bf16.mxu0 0
      %4288 = vmatpush1.bf16.msra.mxu0 0
      %4289 = vmatprep.mubr.bf16.mxu0 0
      %4290 = vmatmul.mubr.bf16.gmra.mrb[0].mxu0 %v4218
      %v4291 = vpop.f32.mrb[0].mxu0
      %v4292 = vadd.f32 0.0, %v4291
      %v4293 = vpop.f32.mrb[0].mxu0
      %v4294 = vpop.f32.mrb[0].mxu0
      %v4295 = vadd.f32 0.0, %v4294
      %v4296 = vpop.f32.mrb[0].mxu0
      %4297 = vmatprep.mubr.bf16.mxu0 0
      %4298 = vmatmul.mubr.bf16.gmra.mrb[0].mxu0 %v4221
      %v4299 = vpop.f32.mrb[0].mxu0
      %v4300 = vadd.f32 0.0, %v4299
      %v4301 = vpop.f32.mrb[0].mxu0
      %v4302 = vpop.f32.mrb[0].mxu0
      %v4303 = vadd.f32 0.0, %v4302
      %v4304 = vpop.f32.mrb[0].mxu0
      %4305 = vmatprep.mubr.bf16.mxu0 0
      %4306 = vmatmul.mubr.bf16.gmra.mrb[0].mxu0 %v4224
      %v4307 = vpop.f32.mrb[0].mxu0
      %v4308 = vadd.f32 0.0, %v4307
      %v4309 = vpop.f32.mrb[0].mxu0
      %v4310 = vpop.f32.mrb[0].mxu0
      %v4311 = vadd.f32 0.0, %v4310
      %v4312 = vpop.f32.mrb[0].mxu0
      %4313 = vmatprep.mubr.bf16.mxu0 0
      %4314 = vmatmul.mubr.bf16.gmra.mrb[0].mxu0 %v4227
      %v4315 = vpop.f32.mrb[0].mxu0
      %v4316 = vadd.f32 0.0, %v4315
      %v4317 = vpop.f32.mrb[0].mxu0
      %v4318 = vpop.f32.mrb[0].mxu0
      %v4319 = vadd.f32 0.0, %v4318
      %v4320 = vpop.f32.mrb[0].mxu0
      %4321 = vmatprep.mubr.bf16.mxu0 0
      %4322 = vmatmul.mubr.bf16.gmra.mrb[0].mxu0 %v4230
      %v4323 = vpop.f32.mrb[0].mxu0
      %v4324 = vadd.f32 0.0, %v4323
      %v4325 = vpop.f32.mrb[0].mxu0
      %v4326 = vpop.f32.mrb[0].mxu0
      %v4327 = vadd.f32 0.0, %v4326
      %v4328 = vpop.f32.mrb[0].mxu0
      %4329 = vmatprep.mubr.bf16.mxu0 0
      %4330 = vmatmul.mubr.bf16.gmra.mrb[0].mxu0 %v4233
      %v4331 = vpop.f32.mrb[0].mxu0
      %v4332 = vadd.f32 0.0, %v4331
      %v4333 = vpop.f32.mrb[0].mxu0
      %v4334 = vpop.f32.mrb[0].mxu0
      %v4335 = vadd.f32 0.0, %v4334
      %v4336 = vpop.f32.mrb[0].mxu0
      %4337 = vmatprep.mubr.bf16.mxu0 0
      %4338 = vmatmul.mubr.bf16.gmra.mrb[0].mxu0 %v4236
      %v4339 = vpop.f32.mrb[0].mxu0
      %v4340 = vadd.f32 0.0, %v4339
      %v4341 = vpop.f32.mrb[0].mxu0
      %v4342 = vpop.f32.mrb[0].mxu0
      %v4343 = vadd.f32 0.0, %v4342
      %v4344 = vpop.f32.mrb[0].mxu0
      %4345 = vmatprep.mubr.bf16.mxu0 0
      %4346 = vmatmul.mubr.bf16.gmra.mrb[0].mxu0 %v4239
      %v4347 = vpop.f32.mrb[0].mxu0
      %v4348 = vadd.f32 0.0, %v4347
      %v4349 = vpop.f32.mrb[0].mxu0
      %v4350 = vpop.f32.mrb[0].mxu0
      %v4351 = vadd.f32 0.0, %v4350
      %v4352 = vpop.f32.mrb[0].mxu0
      %4353 = vmatprep.mubr.bf16.mxu0 0
      %4354 = vmatmul.mubr.bf16.gmra.mrb[0].mxu0 %v4242
      %v4355 = vpop.f32.mrb[0].mxu0
      %v4356 = vadd.f32 0.0, %v4355
      %v4357 = vpop.f32.mrb[0].mxu0
      %v4358 = vpop.f32.mrb[0].mxu0
      %v4359 = vadd.f32 0.0, %v4358
      %v4360 = vpop.f32.mrb[0].mxu0
      %4361 = vmatprep.mubr.bf16.mxu0 0
      %4362 = vmatmul.mubr.bf16.gmra.mrb[0].mxu0 %v4245
      %v4363 = vpop.f32.mrb[0].mxu0
      %v4364 = vadd.f32 0.0, %v4363
      %v4365 = vpop.f32.mrb[0].mxu0
      %v4366 = vpop.f32.mrb[0].mxu0
      %v4367 = vadd.f32 0.0, %v4366
      %v4368 = vpop.f32.mrb[0].mxu0
      %4369 = vmatprep.mubr.bf16.mxu0 0
      %4370 = vmatmul.mubr.bf16.gmra.mrb[0].mxu0 %v4248
      %v4371 = vpop.f32.mrb[0].mxu0
      %v4372 = vadd.f32 0.0, %v4371
      %v4373 = vpop.f32.mrb[0].mxu0
      %v4374 = vpop.f32.mrb[0].mxu0
      %v4375 = vadd.f32 0.0, %v4374
      %v4376 = vpop.f32.mrb[0].mxu0
      %4377 = vmatprep.mubr.bf16.mxu0 0
      %4378 = vmatmul.mubr.bf16.gmra.mrb[0].mxu0 %v4251
      %v4379 = vpop.f32.mrb[0].mxu0
      %v4380 = vadd.f32 0.0, %v4379
      %v4381 = vpop.f32.mrb[0].mxu0
      %v4382 = vpop.f32.mrb[0].mxu0
      %v4383 = vadd.f32 0.0, %v4382
      %v4384 = vpop.f32.mrb[0].mxu0
      %4385 = vdwg.mxu0
      %v4386 = vsel %vm4216, %v4103, 0
      %v4388 = vsel %vm4216, %v4104, 0
      %v4390 = vsel %vm4216, %v4105, 0
      %v4392 = vsel %vm4216, %v4106, 0
      %v4394 = vsel %vm4216, %v4107, 0
      %v4396 = vsel %vm4216, %v4108, 0
      %v4398 = vsel %vm4216, %v4109, 0
      %v4400 = vsel %vm4216, %v4110, 0
      %v4402 = vsel %vm4216, %v4111, 0
      %v4404 = vsel %vm4216, %v4112, 0
      %v4406 = vsel %vm4216, %v4113, 0
      %v4408 = vsel %vm4216, %v4114, 0
      %v4411 = vsel %vm4253, %v4049, 0
      %4413 = vmatprep.subr.bf16.mxu0 0
      %4414 = vmatpush1.bf16.msra.mxu0 %v4411
      %4415 = vmatprep.subr.bf16.mxu0 0
      %4416 = vmatpush1.bf16.msra.mxu0 0
      %4417 = vmatprep.subr.bf16.mxu0 0
      %4418 = vmatpush1.bf16.msra.mxu0 0
      %4419 = vmatprep.subr.bf16.mxu0 0
      %4420 = vmatpush1.bf16.msra.mxu0 0
      %4421 = vmatprep.subr.bf16.mxu0 0
      %4422 = vmatpush1.bf16.msra.mxu0 0
      %4423 = vmatprep.subr.bf16.mxu0 0
      %4424 = vmatpush1.bf16.msra.mxu0 0
      %4425 = vmatprep.subr.bf16.mxu0 0
      %4426 = vmatpush1.bf16.msra.mxu0 0
      %4427 = vmatprep.subr.bf16.mxu0 0
      %4428 = vmatpush1.bf16.msra.mxu0 0
      %4429 = vmatprep.subr.bf16.mxu0 0
      %4430 = vmatpush1.bf16.msra.mxu0 0
      %4431 = vmatprep.subr.bf16.mxu0 0
      %4432 = vmatpush1.bf16.msra.mxu0 0
      %4433 = vmatprep.subr.bf16.mxu0 0
      %4434 = vmatpush1.bf16.msra.mxu0 0
      %4435 = vmatprep.subr.bf16.mxu0 0
      %4436 = vmatpush1.bf16.msra.mxu0 0
      %4437 = vmatprep.subr.bf16.mxu0 0
      %4438 = vmatpush1.bf16.msra.mxu0 0
      %4439 = vmatprep.subr.bf16.mxu0 0
      %4440 = vmatpush1.bf16.msra.mxu0 0
      %4441 = vmatprep.subr.bf16.mxu0 0
      %4442 = vmatpush1.bf16.msra.mxu0 0
      %4443 = vmatprep.subr.bf16.mxu0 0
      %4444 = vmatpush1.bf16.msra.mxu0 0
      %4445 = vmatprep.mubr.bf16.mxu0 0
      %4446 = vmatmul.mubr.bf16.gmra.mrb[0].mxu0 %v4386
      %v4447 = vpop.f32.mrb[0].mxu0
      %v4448 = vadd.f32 %v4292, %v4447
      %v4449 = vpop.f32.mrb[0].mxu0
      %v4450 = vpop.f32.mrb[0].mxu0
      %v4451 = vadd.f32 %v4295, %v4450
      %v4452 = vpop.f32.mrb[0].mxu0
      %4453 = vmatprep.mubr.bf16.mxu0 0
      %4454 = vmatmul.mubr.bf16.gmra.mrb[0].mxu0 %v4388
      %v4455 = vpop.f32.mrb[0].mxu0
      %v4456 = vadd.f32 %v4300, %v4455
      %v4457 = vpop.f32.mrb[0].mxu0
      %v4458 = vpop.f32.mrb[0].mxu0
      %v4459 = vadd.f32 %v4303, %v4458
      %v4460 = vpop.f32.mrb[0].mxu0
      %4461 = vmatprep.mubr.bf16.mxu0 0
      %4462 = vmatmul.mubr.bf16.gmra.mrb[0].mxu0 %v4390
      %v4463 = vpop.f32.mrb[0].mxu0
      %v4464 = vadd.f32 %v4308, %v4463
      %v4465 = vpop.f32.mrb[0].mxu0
      %v4466 = vpop.f32.mrb[0].mxu0
      %v4467 = vadd.f32 %v4311, %v4466
      %v4468 = vpop.f32.mrb[0].mxu0
      %4469 = vmatprep.mubr.bf16.mxu0 0
      %4470 = vmatmul.mubr.bf16.gmra.mrb[0].mxu0 %v4392
      %v4471 = vpop.f32.mrb[0].mxu0
      %v4472 = vadd.f32 %v4316, %v4471
      %v4473 = vpop.f32.mrb[0].mxu0
      %v4474 = vpop.f32.mrb[0].mxu0
      %v4475 = vadd.f32 %v4319, %v4474
      %v4476 = vpop.f32.mrb[0].mxu0
      %4477 = vmatprep.mubr.bf16.mxu0 0
      %4478 = vmatmul.mubr.bf16.gmra.mrb[0].mxu0 %v4394
      %v4479 = vpop.f32.mrb[0].mxu0
      %v4480 = vadd.f32 %v4324, %v4479
      %v4481 = vpop.f32.mrb[0].mxu0
      %v4482 = vpop.f32.mrb[0].mxu0
      %v4483 = vadd.f32 %v4327, %v4482
      %v4484 = vpop.f32.mrb[0].mxu0
      %4485 = vmatprep.mubr.bf16.mxu0 0
      %4486 = vmatmul.mubr.bf16.gmra.mrb[0].mxu0 %v4396
      %v4487 = vpop.f32.mrb[0].mxu0
      %v4488 = vadd.f32 %v4332, %v4487
      %v4489 = vpop.f32.mrb[0].mxu0
      %v4490 = vpop.f32.mrb[0].mxu0
      %v4491 = vadd.f32 %v4335, %v4490
      %v4492 = vpop.f32.mrb[0].mxu0
      %4493 = vmatprep.mubr.bf16.mxu0 0
      %4494 = vmatmul.mubr.bf16.gmra.mrb[0].mxu0 %v4398
      %v4495 = vpop.f32.mrb[0].mxu0
      %v4496 = vadd.f32 %v4340, %v4495
      %v4497 = vpop.f32.mrb[0].mxu0
      %v4498 = vpop.f32.mrb[0].mxu0
      %v4499 = vadd.f32 %v4343, %v4498
      %v4500 = vpop.f32.mrb[0].mxu0
      %4501 = vmatprep.mubr.bf16.mxu0 0
      %4502 = vmatmul.mubr.bf16.gmra.mrb[0].mxu0 %v4400
      %v4503 = vpop.f32.mrb[0].mxu0
      %v4504 = vadd.f32 %v4348, %v4503
      %v4505 = vpop.f32.mrb[0].mxu0
      %v4506 = vpop.f32.mrb[0].mxu0
      %v4507 = vadd.f32 %v4351, %v4506
      %v4508 = vpop.f32.mrb[0].mxu0
      %4509 = vmatprep.mubr.bf16.mxu0 0
      %4510 = vmatmul.mubr.bf16.gmra.mrb[0].mxu0 %v4402
      %v4511 = vpop.f32.mrb[0].mxu0
      %v4512 = vadd.f32 %v4356, %v4511
      %v4513 = vpop.f32.mrb[0].mxu0
      %v4514 = vpop.f32.mrb[0].mxu0
      %v4515 = vadd.f32 %v4359, %v4514
      %v4516 = vpop.f32.mrb[0].mxu0
      %4517 = vmatprep.mubr.bf16.mxu0 0
      %4518 = vmatmul.mubr.bf16.gmra.mrb[0].mxu0 %v4404
      %v4519 = vpop.f32.mrb[0].mxu0
      %v4520 = vadd.f32 %v4364, %v4519
      %v4521 = vpop.f32.mrb[0].mxu0
      %v4522 = vpop.f32.mrb[0].mxu0
      %v4523 = vadd.f32 %v4367, %v4522
      %v4524 = vpop.f32.mrb[0].mxu0
      %4525 = vmatprep.mubr.bf16.mxu0 0
      %4526 = vmatmul.mubr.bf16.gmra.mrb[0].mxu0 %v4406
      %v4527 = vpop.f32.mrb[0].mxu0
      %v4528 = vadd.f32 %v4372, %v4527
      %v4529 = vpop.f32.mrb[0].mxu0
      %v4530 = vpop.f32.mrb[0].mxu0
      %v4531 = vadd.f32 %v4375, %v4530
      %v4532 = vpop.f32.mrb[0].mxu0
      %4533 = vmatprep.mubr.bf16.mxu0 0
      %4534 = vmatmul.mubr.bf16.gmra.mrb[0].mxu0 %v4408
      %v4535 = vpop.f32.mrb[0].mxu0
      %v4536 = vadd.f32 %v4380, %v4535
      %v4537 = vpop.f32.mrb[0].mxu0
      %v4538 = vpop.f32.mrb[0].mxu0
      %v4539 = vadd.f32 %v4383, %v4538
      %v4540 = vpop.f32.mrb[0].mxu0
      %4541 = vdwg.mxu0
      %v4542 = vld [vmem:[#allocation3] sm:$0xe]
      %s4543 = scalar_lea.vmem %s5, 4
      %v4544 = vld [vmem:[%s4543] sm:$0x3]
      %v4546 = vunpack.c.l.b16 %v4542
      %v4547 = vpack.c.b16 %v4079, %v4546
      %v4548 = vrot.slane %v4547, 1
      %v4549 = vrot.slane %v4104, 1
      %v4550 = vsel %vm1152, %v4548, %v4549
      %v4551 = vrot.slane %v4105, 1
      %v4552 = vsel %vm1152, %v4549, %v4551
      %v4553 = vrot.slane %v4106, 1
      %v4554 = vsel %vm1152, %v4551, %v4553
      %v4555 = vrot.slane %v4107, 1
      %v4556 = vsel %vm1152, %v4553, %v4555
      %v4557 = vrot.slane %v4108, 1
      %v4558 = vsel %vm1152, %v4555, %v4557
      %v4559 = vrot.slane %v4109, 1
      %v4560 = vsel %vm1152, %v4557, %v4559
      %v4561 = vrot.slane %v4110, 1
      %v4562 = vsel %vm1152, %v4559, %v4561
      %v4563 = vrot.slane %v4111, 1
      %v4564 = vsel %vm1152, %v4561, %v4563
      %v4565 = vrot.slane %v4112, 1
      %v4566 = vsel %vm1152, %v4563, %v4565
      %v4567 = vrot.slane %v4113, 1
      %v4568 = vsel %vm1152, %v4565, %v4567
      %v4569 = vrot.slane %v4114, 1
      %v4570 = vsel %vm1152, %v4567, %v4569
      %v4571 = vrot.slane %v4115, 1
      %v4572 = vsel %vm1152, %v4569, %v4571
      %v4574 = vsel %vm4216, %v4550, 0
      %v4577 = vsel %vm4216, %v4552, 0
      %v4580 = vsel %vm4216, %v4554, 0
      %v4583 = vsel %vm4216, %v4556, 0
      %v4586 = vsel %vm4216, %v4558, 0
      %v4589 = vsel %vm4216, %v4560, 0
      %v4592 = vsel %vm4216, %v4562, 0
      %v4595 = vsel %vm4216, %v4564, 0
      %v4598 = vsel %vm4216, %v4566, 0
      %v4601 = vsel %vm4216, %v4568, 0
      %v4604 = vsel %vm4216, %v4570, 0
      %v4607 = vsel %vm4216, %v4572, 0
      %v4610 = vsel %vm4253, %v4544, 0
      %4612 = vmatprep.subr.bf16.mxu0 0
      %4613 = vmatpush1.bf16.msra.mxu0 %v4610
      %4614 = vmatprep.subr.bf16.mxu0 0
      %4615 = vmatpush1.bf16.msra.mxu0 0
      %4616 = vmatprep.subr.bf16.mxu0 0
      %4617 = vmatpush1.bf16.msra.mxu0 0
      %4618 = vmatprep.subr.bf16.mxu0 0
      %4619 = vmatpush1.bf16.msra.mxu0 0
      %4620 = vmatprep.subr.bf16.mxu0 0
      %4621 = vmatpush1.bf16.msra.mxu0 0
      %4622 = vmatprep.subr.bf16.mxu0 0
      %4623 = vmatpush1.bf16.msra.mxu0 0
      %4624 = vmatprep.subr.bf16.mxu0 0
      %4625 = vmatpush1.bf16.msra.mxu0 0
      %4626 = vmatprep.subr.bf16.mxu0 0
      %4627 = vmatpush1.bf16.msra.mxu0 0
      %4628 = vmatprep.subr.bf16.mxu0 0
      %4629 = vmatpush1.bf16.msra.mxu0 0
      %4630 = vmatprep.subr.bf16.mxu0 0
      %4631 = vmatpush1.bf16.msra.mxu0 0
      %4632 = vmatprep.subr.bf16.mxu0 0
      %4633 = vmatpush1.bf16.msra.mxu0 0
      %4634 = vmatprep.subr.bf16.mxu0 0
      %4635 = vmatpush1.bf16.msra.mxu0 0
      %4636 = vmatprep.subr.bf16.mxu0 0
      %4637 = vmatpush1.bf16.msra.mxu0 0
      %4638 = vmatprep.subr.bf16.mxu0 0
      %4639 = vmatpush1.bf16.msra.mxu0 0
      %4640 = vmatprep.subr.bf16.mxu0 0
      %4641 = vmatpush1.bf16.msra.mxu0 0
      %4642 = vmatprep.subr.bf16.mxu0 0
      %4643 = vmatpush1.bf16.msra.mxu0 0
      %4644 = vmatprep.mubr.bf16.mxu0 0
      %4645 = vmatmul.mubr.bf16.gmra.mrb[0].mxu0 %v4574
      %v4646 = vpop.f32.mrb[0].mxu0
      %v4647 = vadd.f32 0.0, %v4646
      %v4648 = vpop.f32.mrb[0].mxu0
      %v4649 = vpop.f32.mrb[0].mxu0
      %v4650 = vadd.f32 0.0, %v4649
      %v4651 = vpop.f32.mrb[0].mxu0
      %4652 = vmatprep.mubr.bf16.mxu0 0
      %4653 = vmatmul.mubr.bf16.gmra.mrb[0].mxu0 %v4577
      %v4654 = vpop.f32.mrb[0].mxu0
      %v4655 = vadd.f32 0.0, %v4654
      %v4656 = vpop.f32.mrb[0].mxu0
      %v4657 = vpop.f32.mrb[0].mxu0
      %v4658 = vadd.f32 0.0, %v4657
      %v4659 = vpop.f32.mrb[0].mxu0
      %4660 = vmatprep.mubr.bf16.mxu0 0
      %4661 = vmatmul.mubr.bf16.gmra.mrb[0].mxu0 %v4580
      %v4662 = vpop.f32.mrb[0].mxu0
      %v4663 = vadd.f32 0.0, %v4662
      %v4664 = vpop.f32.mrb[0].mxu0
      %v4665 = vpop.f32.mrb[0].mxu0
      %v4666 = vadd.f32 0.0, %v4665
      %v4667 = vpop.f32.mrb[0].mxu0
      %4668 = vmatprep.mubr.bf16.mxu0 0
      %4669 = vmatmul.mubr.bf16.gmra.mrb[0].mxu0 %v4583
      %v4670 = vpop.f32.mrb[0].mxu0
      %v4671 = vadd.f32 0.0, %v4670
      %v4672 = vpop.f32.mrb[0].mxu0
      %v4673 = vpop.f32.mrb[0].mxu0
      %v4674 = vadd.f32 0.0, %v4673
      %v4675 = vpop.f32.mrb[0].mxu0
      %4676 = vmatprep.mubr.bf16.mxu0 0
      %4677 = vmatmul.mubr.bf16.gmra.mrb[0].mxu0 %v4586
      %v4678 = vpop.f32.mrb[0].mxu0
      %v4679 = vadd.f32 0.0, %v4678
      %v4680 = vpop.f32.mrb[0].mxu0
      %v4681 = vpop.f32.mrb[0].mxu0
      %v4682 = vadd.f32 0.0, %v4681
      %v4683 = vpop.f32.mrb[0].mxu0
      %4684 = vmatprep.mubr.bf16.mxu0 0
      %4685 = vmatmul.mubr.bf16.gmra.mrb[0].mxu0 %v4589
      %v4686 = vpop.f32.mrb[0].mxu0
      %v4687 = vadd.f32 0.0, %v4686
      %v4688 = vpop.f32.mrb[0].mxu0
      %v4689 = vpop.f32.mrb[0].mxu0
      %v4690 = vadd.f32 0.0, %v4689
      %v4691 = vpop.f32.mrb[0].mxu0
      %4692 = vmatprep.mubr.bf16.mxu0 0
      %4693 = vmatmul.mubr.bf16.gmra.mrb[0].mxu0 %v4592
      %v4694 = vpop.f32.mrb[0].mxu0
      %v4695 = vadd.f32 0.0, %v4694
      %v4696 = vpop.f32.mrb[0].mxu0
      %v4697 = vpop.f32.mrb[0].mxu0
      %v4698 = vadd.f32 0.0, %v4697
      %v4699 = vpop.f32.mrb[0].mxu0
      %4700 = vmatprep.mubr.bf16.mxu0 0
      %4701 = vmatmul.mubr.bf16.gmra.mrb[0].mxu0 %v4595
      %v4702 = vpop.f32.mrb[0].mxu0
      %v4703 = vadd.f32 0.0, %v4702
      %v4704 = vpop.f32.mrb[0].mxu0
      %v4705 = vpop.f32.mrb[0].mxu0
      %v4706 = vadd.f32 0.0, %v4705
      %v4707 = vpop.f32.mrb[0].mxu0
      %4708 = vmatprep.mubr.bf16.mxu0 0
      %4709 = vmatmul.mubr.bf16.gmra.mrb[0].mxu0 %v4598
      %v4710 = vpop.f32.mrb[0].mxu0
      %v4711 = vadd.f32 0.0, %v4710
      %v4712 = vpop.f32.mrb[0].mxu0
      %v4713 = vpop.f32.mrb[0].mxu0
      %v4714 = vadd.f32 0.0, %v4713
      %v4715 = vpop.f32.mrb[0].mxu0
      %4716 = vmatprep.mubr.bf16.mxu0 0
      %4717 = vmatmul.mubr.bf16.gmra.mrb[0].mxu0 %v4601
      %v4718 = vpop.f32.mrb[0].mxu0
      %v4719 = vadd.f32 0.0, %v4718
      %v4720 = vpop.f32.mrb[0].mxu0
      %v4721 = vpop.f32.mrb[0].mxu0
      %v4722 = vadd.f32 0.0, %v4721
      %v4723 = vpop.f32.mrb[0].mxu0
      %4724 = vmatprep.mubr.bf16.mxu0 0
      %4725 = vmatmul.mubr.bf16.gmra.mrb[0].mxu0 %v4604
      %v4726 = vpop.f32.mrb[0].mxu0
      %v4727 = vadd.f32 0.0, %v4726
      %v4728 = vpop.f32.mrb[0].mxu0
      %v4729 = vpop.f32.mrb[0].mxu0
      %v4730 = vadd.f32 0.0, %v4729
      %v4731 = vpop.f32.mrb[0].mxu0
      %4732 = vmatprep.mubr.bf16.mxu0 0
      %4733 = vmatmul.mubr.bf16.gmra.mrb[0].mxu0 %v4607
      %v4734 = vpop.f32.mrb[0].mxu0
      %v4735 = vadd.f32 0.0, %v4734
      %v4736 = vpop.f32.mrb[0].mxu0
      %v4737 = vpop.f32.mrb[0].mxu0
      %v4738 = vadd.f32 0.0, %v4737
      %v4739 = vpop.f32.mrb[0].mxu0
      %4740 = vdwg.mxu0
      %v4741 = vadd.f32 %v4448, %v4647
      %v4742 = vadd.f32 %v4451, %v4650
      %v4743 = vadd.f32 %v4456, %v4655
      %v4744 = vadd.f32 %v4459, %v4658
      %v4745 = vadd.f32 %v4464, %v4663
      %v4746 = vadd.f32 %v4467, %v4666
      %v4747 = vadd.f32 %v4472, %v4671
      %v4748 = vadd.f32 %v4475, %v4674
      %v4749 = vadd.f32 %v4480, %v4679
      %v4750 = vadd.f32 %v4483, %v4682
      %v4751 = vadd.f32 %v4488, %v4687
      %v4752 = vadd.f32 %v4491, %v4690
      %v4753 = vadd.f32 %v4496, %v4695
      %v4754 = vadd.f32 %v4499, %v4698
      %v4755 = vadd.f32 %v4504, %v4703
      %v4756 = vadd.f32 %v4507, %v4706
      %v4757 = vadd.f32 %v4512, %v4711
      %v4758 = vadd.f32 %v4515, %v4714
      %v4759 = vadd.f32 %v4520, %v4719
      %v4760 = vadd.f32 %v4523, %v4722
      %v4761 = vadd.f32 %v4528, %v4727
      %v4762 = vadd.f32 %v4531, %v4730
      %v4763 = vadd.f32 %v4536, %v4735
      %v4764 = vadd.f32 %v4539, %v4738
      %v4765 = vld [vmem:[#allocation3 + $0xc] sm:$0xf]
      %v4766 = vld [vmem:[#allocation3 + $0x10] sm:$0xf]
      %v4767 = vld [vmem:[#allocation3 + $0x14] sm:$0xf]
      %v4768 = vld [vmem:[#allocation3 + $0x18] sm:$0xf]
      %v4769 = vld [vmem:[#allocation3 + $0x1c] sm:$0xf]
      %v4770 = vld [vmem:[#allocation3 + $0x20] sm:$0xf]
      %v4771 = vld [vmem:[#allocation3 + $0x24] sm:$0xf]
      %v4772 = vld [vmem:[#allocation3 + $0x28] sm:$0xf]
      %v4773 = vld [vmem:[#allocation3 + $0x2c] sm:$0xf]
      %v4774 = vld [vmem:[#allocation3 + $0x30] sm:$0xf]
      %v4775 = vld [vmem:[#allocation3 + $0x34] sm:$0xf]
      %v4776 = vld [vmem:[#allocation3 + $0x38] sm:$0xf]
      %v4777 = vld [vmem:[#allocation3 + $0x3c] sm:$0xf]
      %v4778 = vld [vmem:[#allocation3 + $0x40] sm:$0xf]
      %v4779 = vld [vmem:[#allocation3 + $0x44] sm:$0xf]
      %v4780 = vld [vmem:[#allocation3 + $0x48] sm:$0xf]
      %v4781 = vld [vmem:[#allocation3 + $0x4c] sm:$0xf]
      %v4782 = vld [vmem:[#allocation3 + $0x50] sm:$0xf]
      %v4783 = vld [vmem:[#allocation3 + $0x54] sm:$0xf]
      %v4784 = vld [vmem:[#allocation3 + $0x58] sm:$0xf]
      %v4785 = vld [vmem:[#allocation3 + $0x5c] sm:$0xf]
      %v4786 = vld [vmem:[#allocation3 + $0x60] sm:$0xf]
      %v4787 = vld [vmem:[#allocation3 + $0x64] sm:$0xf]
      %v4788 = vld [vmem:[#allocation3 + $0x68] sm:$0xf]
      %s4789 = scalar_lea.vmem %s5, 6
      %v4790 = vld [vmem:[%s4789] sm:$0x3]
      %v4815 = vunpack.c.l.b16 %v4765
      %v4816 = vunpack.c.l.b16 %v4766
      %v4817 = vunpack.c.l.b16 %v4767
      %v4818 = vunpack.c.l.b16 %v4768
      %v4819 = vunpack.c.l.b16 %v4769
      %v4820 = vunpack.c.l.b16 %v4770
      %v4821 = vunpack.c.l.b16 %v4771
      %v4822 = vunpack.c.l.b16 %v4772
      %v4823 = vunpack.c.l.b16 %v4773
      %v4824 = vunpack.c.l.b16 %v4774
      %v4825 = vunpack.c.l.b16 %v4775
      %v4826 = vunpack.c.l.b16 %v4776
      %v4827 = vunpack.c.l.b16 %v4777
      %v4828 = vunpack.c.l.b16 %v4778
      %v4829 = vunpack.c.l.b16 %v4779
      %v4830 = vunpack.c.l.b16 %v4780
      %v4831 = vunpack.c.l.b16 %v4781
      %v4832 = vunpack.c.l.b16 %v4782
      %v4833 = vunpack.c.l.b16 %v4783
      %v4834 = vunpack.c.l.b16 %v4784
      %v4835 = vunpack.c.l.b16 %v4785
      %v4836 = vunpack.c.l.b16 %v4786
      %v4837 = vunpack.c.l.b16 %v4787
      %v4838 = vunpack.c.l.b16 %v4788
      %v4839 = vpack.c.b16 %v4816, %v4815
      %v4840 = vpack.c.b16 %v4818, %v4817
      %v4841 = vpack.c.b16 %v4820, %v4819
      %v4842 = vpack.c.b16 %v4822, %v4821
      %v4843 = vpack.c.b16 %v4824, %v4823
      %v4844 = vpack.c.b16 %v4826, %v4825
      %v4845 = vpack.c.b16 %v4828, %v4827
      %v4846 = vpack.c.b16 %v4830, %v4829
      %v4847 = vpack.c.b16 %v4832, %v4831
      %v4848 = vpack.c.b16 %v4834, %v4833
      %v4849 = vpack.c.b16 %v4836, %v4835
      %v4850 = vpack.c.b16 %v4838, %v4837
      %v4852 = vsel %vm4216, %v4839, 0
      %v4855 = vsel %vm4216, %v4840, 0
      %v4858 = vsel %vm4216, %v4841, 0
      %v4861 = vsel %vm4216, %v4842, 0
      %v4864 = vsel %vm4216, %v4843, 0
      %v4867 = vsel %vm4216, %v4844, 0
      %v4870 = vsel %vm4216, %v4845, 0
      %v4873 = vsel %vm4216, %v4846, 0
      %v4876 = vsel %vm4216, %v4847, 0
      %v4879 = vsel %vm4216, %v4848, 0
      %v4882 = vsel %vm4216, %v4849, 0
      %v4885 = vsel %vm4216, %v4850, 0
      %v4888 = vsel %vm4253, %v4790, 0
      %4890 = vmatprep.subr.bf16.mxu0 0
      %4891 = vmatpush1.bf16.msra.mxu0 %v4888
      %4892 = vmatprep.subr.bf16.mxu0 0
      %4893 = vmatpush1.bf16.msra.mxu0 0
      %4894 = vmatprep.subr.bf16.mxu0 0
      %4895 = vmatpush1.bf16.msra.mxu0 0
      %4896 = vmatprep.subr.bf16.mxu0 0
      %4897 = vmatpush1.bf16.msra.mxu0 0
      %4898 = vmatprep.subr.bf16.mxu0 0
      %4899 = vmatpush1.bf16.msra.mxu0 0
      %4900 = vmatprep.subr.bf16.mxu0 0
      %4901 = vmatpush1.bf16.msra.mxu0 0
      %4902 = vmatprep.subr.bf16.mxu0 0
      %4903 = vmatpush1.bf16.msra.mxu0 0
      %4904 = vmatprep.subr.bf16.mxu0 0
      %4905 = vmatpush1.bf16.msra.mxu0 0
      %4906 = vmatprep.subr.bf16.mxu0 0
      %4907 = vmatpush1.bf16.msra.mxu0 0
      %4908 = vmatprep.subr.bf16.mxu0 0
      %4909 = vmatpush1.bf16.msra.mxu0 0
      %4910 = vmatprep.subr.bf16.mxu0 0
      %4911 = vmatpush1.bf16.msra.mxu0 0
      %4912 = vmatprep.subr.bf16.mxu0 0
      %4913 = vmatpush1.bf16.msra.mxu0 0
      %4914 = vmatprep.subr.bf16.mxu0 0
      %4915 = vmatpush1.bf16.msra.mxu0 0
      %4916 = vmatprep.subr.bf16.mxu0 0
      %4917 = vmatpush1.bf16.msra.mxu0 0
      %4918 = vmatprep.subr.bf16.mxu0 0
      %4919 = vmatpush1.bf16.msra.mxu0 0
      %4920 = vmatprep.subr.bf16.mxu0 0
      %4921 = vmatpush1.bf16.msra.mxu0 0
      %4922 = vmatprep.mubr.bf16.mxu0 0
      %4923 = vmatmul.mubr.bf16.gmra.mrb[0].mxu0 %v4852
      %v4924 = vpop.f32.mrb[0].mxu0
      %v4925 = vadd.f32 0.0, %v4924
      %v4926 = vpop.f32.mrb[0].mxu0
      %v4927 = vpop.f32.mrb[0].mxu0
      %v4928 = vadd.f32 0.0, %v4927
      %v4929 = vpop.f32.mrb[0].mxu0
      %4930 = vmatprep.mubr.bf16.mxu0 0
      %4931 = vmatmul.mubr.bf16.gmra.mrb[0].mxu0 %v4855
      %v4932 = vpop.f32.mrb[0].mxu0
      %v4933 = vadd.f32 0.0, %v4932
      %v4934 = vpop.f32.mrb[0].mxu0
      %v4935 = vpop.f32.mrb[0].mxu0
      %v4936 = vadd.f32 0.0, %v4935
      %v4937 = vpop.f32.mrb[0].mxu0
      %4938 = vmatprep.mubr.bf16.mxu0 0
      %4939 = vmatmul.mubr.bf16.gmra.mrb[0].mxu0 %v4858
      %v4940 = vpop.f32.mrb[0].mxu0
      %v4941 = vadd.f32 0.0, %v4940
      %v4942 = vpop.f32.mrb[0].mxu0
      %v4943 = vpop.f32.mrb[0].mxu0
      %v4944 = vadd.f32 0.0, %v4943
      %v4945 = vpop.f32.mrb[0].mxu0
      %4946 = vmatprep.mubr.bf16.mxu0 0
      %4947 = vmatmul.mubr.bf16.gmra.mrb[0].mxu0 %v4861
      %v4948 = vpop.f32.mrb[0].mxu0
      %v4949 = vadd.f32 0.0, %v4948
      %v4950 = vpop.f32.mrb[0].mxu0
      %v4951 = vpop.f32.mrb[0].mxu0
      %v4952 = vadd.f32 0.0, %v4951
      %v4953 = vpop.f32.mrb[0].mxu0
      %4954 = vmatprep.mubr.bf16.mxu0 0
      %4955 = vmatmul.mubr.bf16.gmra.mrb[0].mxu0 %v4864
      %v4956 = vpop.f32.mrb[0].mxu0
      %v4957 = vadd.f32 0.0, %v4956
      %v4958 = vpop.f32.mrb[0].mxu0
      %v4959 = vpop.f32.mrb[0].mxu0
      %v4960 = vadd.f32 0.0, %v4959
      %v4961 = vpop.f32.mrb[0].mxu0
      %4962 = vmatprep.mubr.bf16.mxu0 0
      %4963 = vmatmul.mubr.bf16.gmra.mrb[0].mxu0 %v4867
      %v4964 = vpop.f32.mrb[0].mxu0
      %v4965 = vadd.f32 0.0, %v4964
      %v4966 = vpop.f32.mrb[0].mxu0
      %v4967 = vpop.f32.mrb[0].mxu0
      %v4968 = vadd.f32 0.0, %v4967
      %v4969 = vpop.f32.mrb[0].mxu0
      %4970 = vmatprep.mubr.bf16.mxu0 0
      %4971 = vmatmul.mubr.bf16.gmra.mrb[0].mxu0 %v4870
      %v4972 = vpop.f32.mrb[0].mxu0
      %v4973 = vadd.f32 0.0, %v4972
      %v4974 = vpop.f32.mrb[0].mxu0
      %v4975 = vpop.f32.mrb[0].mxu0
      %v4976 = vadd.f32 0.0, %v4975
      %v4977 = vpop.f32.mrb[0].mxu0
      %4978 = vmatprep.mubr.bf16.mxu0 0
      %4979 = vmatmul.mubr.bf16.gmra.mrb[0].mxu0 %v4873
      %v4980 = vpop.f32.mrb[0].mxu0
      %v4981 = vadd.f32 0.0, %v4980
      %v4982 = vpop.f32.mrb[0].mxu0
      %v4983 = vpop.f32.mrb[0].mxu0
      %v4984 = vadd.f32 0.0, %v4983
      %v4985 = vpop.f32.mrb[0].mxu0
      %4986 = vmatprep.mubr.bf16.mxu0 0
      %4987 = vmatmul.mubr.bf16.gmra.mrb[0].mxu0 %v4876
      %v4988 = vpop.f32.mrb[0].mxu0
      %v4989 = vadd.f32 0.0, %v4988
      %v4990 = vpop.f32.mrb[0].mxu0
      %v4991 = vpop.f32.mrb[0].mxu0
      %v4992 = vadd.f32 0.0, %v4991
      %v4993 = vpop.f32.mrb[0].mxu0
      %4994 = vmatprep.mubr.bf16.mxu0 0
      %4995 = vmatmul.mubr.bf16.gmra.mrb[0].mxu0 %v4879
      %v4996 = vpop.f32.mrb[0].mxu0
      %v4997 = vadd.f32 0.0, %v4996
      %v4998 = vpop.f32.mrb[0].mxu0
      %v4999 = vpop.f32.mrb[0].mxu0
      %v5000 = vadd.f32 0.0, %v4999
      %v5001 = vpop.f32.mrb[0].mxu0
      %5002 = vmatprep.mubr.bf16.mxu0 0
      %5003 = vmatmul.mubr.bf16.gmra.mrb[0].mxu0 %v4882
      %v5004 = vpop.f32.mrb[0].mxu0
      %v5005 = vadd.f32 0.0, %v5004
      %v5006 = vpop.f32.mrb[0].mxu0
      %v5007 = vpop.f32.mrb[0].mxu0
      %v5008 = vadd.f32 0.0, %v5007
      %v5009 = vpop.f32.mrb[0].mxu0
      %5010 = vmatprep.mubr.bf16.mxu0 0
      %5011 = vmatmul.mubr.bf16.gmra.mrb[0].mxu0 %v4885
      %v5012 = vpop.f32.mrb[0].mxu0
      %v5013 = vadd.f32 0.0, %v5012
      %v5014 = vpop.f32.mrb[0].mxu0
      %v5015 = vpop.f32.mrb[0].mxu0
      %v5016 = vadd.f32 0.0, %v5015
      %v5017 = vpop.f32.mrb[0].mxu0
      %5018 = vdwg.mxu0
      %v5019 = vadd.f32 %v4741, %v4925
      %v5020 = vadd.f32 %v4742, %v4928
      %v5021 = vadd.f32 %v4743, %v4933
      %v5022 = vadd.f32 %v4744, %v4936
      %v5023 = vadd.f32 %v4745, %v4941
      %v5024 = vadd.f32 %v4746, %v4944
      %v5025 = vadd.f32 %v4747, %v4949
      %v5026 = vadd.f32 %v4748, %v4952
      %v5027 = vadd.f32 %v4749, %v4957
      %v5028 = vadd.f32 %v4750, %v4960
      %v5029 = vadd.f32 %v4751, %v4965
      %v5030 = vadd.f32 %v4752, %v4968
      %v5031 = vadd.f32 %v4753, %v4973
      %v5032 = vadd.f32 %v4754, %v4976
      %v5033 = vadd.f32 %v4755, %v4981
      %v5034 = vadd.f32 %v4756, %v4984
      %v5035 = vadd.f32 %v4757, %v4989
      %v5036 = vadd.f32 %v4758, %v4992
      %v5037 = vadd.f32 %v4759, %v4997
      %v5038 = vadd.f32 %v4760, %v5000
      %v5039 = vadd.f32 %v4761, %v5005
      %v5040 = vadd.f32 %v4762, %v5008
      %v5041 = vadd.f32 %v4763, %v5013
      %v5042 = vadd.f32 %v4764, %v5016
      %v5043 = vld [vmem:[#allocation3 + $0xc] sm:$0xf]
      %v5044 = vld [vmem:[#allocation3 + $0x10] sm:$0xf]
      %v5045 = vld [vmem:[#allocation3 + $0x14] sm:$0xf]
      %v5046 = vld [vmem:[#allocation3 + $0x18] sm:$0xf]
      %v5047 = vld [vmem:[#allocation3 + $0x1c] sm:$0xf]
      %v5048 = vld [vmem:[#allocation3 + $0x20] sm:$0xf]
      %v5049 = vld [vmem:[#allocation3 + $0x24] sm:$0xf]
      %v5050 = vld [vmem:[#allocation3 + $0x28] sm:$0xf]
      %v5051 = vld [vmem:[#allocation3 + $0x2c] sm:$0xf]
      %v5052 = vld [vmem:[#allocation3 + $0x30] sm:$0xf]
      %v5053 = vld [vmem:[#allocation3 + $0x34] sm:$0xf]
      %v5054 = vld [vmem:[#allocation3 + $0x38] sm:$0xf]
      %v5055 = vld [vmem:[#allocation3 + $0x3c] sm:$0xf]
      %v5056 = vld [vmem:[#allocation3 + $0x40] sm:$0xf]
      %v5057 = vld [vmem:[#allocation3 + $0x44] sm:$0xf]
      %v5058 = vld [vmem:[#allocation3 + $0x48] sm:$0xf]
      %v5059 = vld [vmem:[#allocation3 + $0x4c] sm:$0xf]
      %v5060 = vld [vmem:[#allocation3 + $0x50] sm:$0xf]
      %v5061 = vld [vmem:[#allocation3 + $0x54] sm:$0xf]
      %v5062 = vld [vmem:[#allocation3 + $0x58] sm:$0xf]
      %v5063 = vld [vmem:[#allocation3 + $0x5c] sm:$0xf]
      %v5064 = vld [vmem:[#allocation3 + $0x60] sm:$0xf]
      %v5065 = vld [vmem:[#allocation3 + $0x64] sm:$0xf]
      %v5066 = vld [vmem:[#allocation3 + $0x68] sm:$0xf]
      %v5067 = vld [vmem:[#allocation3 + $0x6c] sm:$0x1]
      %s5068 = scalar_lea.vmem %s5, 8
      %v5069 = vld [vmem:[%s5068] sm:$0x3]
      %v5095 = vunpack.c.l.b16 %v5043
      %v5096 = vunpack.c.l.b16 %v5044
      %v5097 = vunpack.c.l.b16 %v5045
      %v5098 = vunpack.c.l.b16 %v5046
      %v5099 = vunpack.c.l.b16 %v5047
      %v5100 = vunpack.c.l.b16 %v5048
      %v5101 = vunpack.c.l.b16 %v5049
      %v5102 = vunpack.c.l.b16 %v5050
      %v5103 = vunpack.c.l.b16 %v5051
      %v5104 = vunpack.c.l.b16 %v5052
      %v5105 = vunpack.c.l.b16 %v5053
      %v5106 = vunpack.c.l.b16 %v5054
      %v5107 = vunpack.c.l.b16 %v5055
      %v5108 = vunpack.c.l.b16 %v5056
      %v5109 = vunpack.c.l.b16 %v5057
      %v5110 = vunpack.c.l.b16 %v5058
      %v5111 = vunpack.c.l.b16 %v5059
      %v5112 = vunpack.c.l.b16 %v5060
      %v5113 = vunpack.c.l.b16 %v5061
      %v5114 = vunpack.c.l.b16 %v5062
      %v5115 = vunpack.c.l.b16 %v5063
      %v5116 = vunpack.c.l.b16 %v5064
      %v5117 = vunpack.c.l.b16 %v5065
      %v5118 = vunpack.c.l.b16 %v5066
      %v5119 = vunpack.c.l.b16 %v5067
      %v5120 = vpack.c.b16 %v5096, %v5095
      %v5121 = vpack.c.b16 %v5098, %v5097
      %v5122 = vpack.c.b16 %v5100, %v5099
      %v5123 = vpack.c.b16 %v5102, %v5101
      %v5124 = vpack.c.b16 %v5104, %v5103
      %v5125 = vpack.c.b16 %v5106, %v5105
      %v5126 = vpack.c.b16 %v5108, %v5107
      %v5127 = vpack.c.b16 %v5110, %v5109
      %v5128 = vpack.c.b16 %v5112, %v5111
      %v5129 = vpack.c.b16 %v5114, %v5113
      %v5130 = vpack.c.b16 %v5116, %v5115
      %v5131 = vpack.c.b16 %v5118, %v5117
      %v5132 = vpack.c.b16 %v5119, %v5119
      %v5134 = vshrl.u32 %v5120, 16
      %v5136 = vshll.u32 %v5120, 16
      %v5138 = vrot.slane %v5136, 1
      %v5139 = vor.u32 %v5134, %v5138
      %v5141 = vshll.u32 %v5121, 16
      %v5143 = vrot.slane %v5141, 1
      %v5144 = vsel %vm632, %v5139, %v5143
      %v5145 = vshrl.u32 %v5121, 16
      %v5147 = vor.u32 %v5145, %v5143
      %v5149 = vshll.u32 %v5122, 16
      %v5151 = vrot.slane %v5149, 1
      %v5152 = vsel %vm632, %v5147, %v5151
      %v5153 = vshrl.u32 %v5122, 16
      %v5155 = vor.u32 %v5153, %v5151
      %v5157 = vshll.u32 %v5123, 16
      %v5159 = vrot.slane %v5157, 1
      %v5160 = vsel %vm632, %v5155, %v5159
      %v5161 = vshrl.u32 %v5123, 16
      %v5163 = vor.u32 %v5161, %v5159
      %v5165 = vshll.u32 %v5124, 16
      %v5167 = vrot.slane %v5165, 1
      %v5168 = vsel %vm632, %v5163, %v5167
      %v5169 = vshrl.u32 %v5124, 16
      %v5171 = vor.u32 %v5169, %v5167
      %v5173 = vshll.u32 %v5125, 16
      %v5175 = vrot.slane %v5173, 1
      %v5176 = vsel %vm632, %v5171, %v5175
      %v5177 = vshrl.u32 %v5125, 16
      %v5179 = vor.u32 %v5177, %v5175
      %v5181 = vshll.u32 %v5126, 16
      %v5183 = vrot.slane %v5181, 1
      %v5184 = vsel %vm632, %v5179, %v5183
      %v5185 = vshrl.u32 %v5126, 16
      %v5187 = vor.u32 %v5185, %v5183
      %v5189 = vshll.u32 %v5127, 16
      %v5191 = vrot.slane %v5189, 1
      %v5192 = vsel %vm632, %v5187, %v5191
      %v5193 = vshrl.u32 %v5127, 16
      %v5195 = vor.u32 %v5193, %v5191
      %v5197 = vshll.u32 %v5128, 16
      %v5199 = vrot.slane %v5197, 1
      %v5200 = vsel %vm632, %v5195, %v5199
      %v5201 = vshrl.u32 %v5128, 16
      %v5203 = vor.u32 %v5201, %v5199
      %v5205 = vshll.u32 %v5129, 16
      %v5207 = vrot.slane %v5205, 1
      %v5208 = vsel %vm632, %v5203, %v5207
      %v5209 = vshrl.u32 %v5129, 16
      %v5211 = vor.u32 %v5209, %v5207
      %v5213 = vshll.u32 %v5130, 16
      %v5215 = vrot.slane %v5213, 1
      %v5216 = vsel %vm632, %v5211, %v5215
      %v5217 = vshrl.u32 %v5130, 16
      %v5219 = vor.u32 %v5217, %v5215
      %v5221 = vshll.u32 %v5131, 16
      %v5223 = vrot.slane %v5221, 1
      %v5224 = vsel %vm632, %v5219, %v5223
      %v5225 = vshrl.u32 %v5131, 16
      %v5227 = vor.u32 %v5225, %v5223
      %v5229 = vshll.u32 %v5132, 16
      %v5231 = vrot.slane %v5229, 1
      %v5232 = vsel %vm632, %v5227, %v5231
      %v5234 = vsel %vm4216, %v5144, 0
      %v5237 = vsel %vm4216, %v5152, 0
      %v5240 = vsel %vm4216, %v5160, 0
      %v5243 = vsel %vm4216, %v5168, 0
      %v5246 = vsel %vm4216, %v5176, 0
      %v5249 = vsel %vm4216, %v5184, 0
      %v5252 = vsel %vm4216, %v5192, 0
      %v5255 = vsel %vm4216, %v5200, 0
      %v5258 = vsel %vm4216, %v5208, 0
      %v5261 = vsel %vm4216, %v5216, 0
      %v5264 = vsel %vm4216, %v5224, 0
      %v5267 = vsel %vm4216, %v5232, 0
      %v5270 = vsel %vm4253, %v5069, 0
      %5272 = vmatprep.subr.bf16.mxu0 0
      %5273 = vmatpush1.bf16.msra.mxu0 %v5270
      %5274 = vmatprep.subr.bf16.mxu0 0
      %5275 = vmatpush1.bf16.msra.mxu0 0
      %5276 = vmatprep.subr.bf16.mxu0 0
      %5277 = vmatpush1.bf16.msra.mxu0 0
      %5278 = vmatprep.subr.bf16.mxu0 0
      %5279 = vmatpush1.bf16.msra.mxu0 0
      %5280 = vmatprep.subr.bf16.mxu0 0
      %5281 = vmatpush1.bf16.msra.mxu0 0
      %5282 = vmatprep.subr.bf16.mxu0 0
      %5283 = vmatpush1.bf16.msra.mxu0 0
      %5284 = vmatprep.subr.bf16.mxu0 0
      %5285 = vmatpush1.bf16.msra.mxu0 0
      %5286 = vmatprep.subr.bf16.mxu0 0
      %5287 = vmatpush1.bf16.msra.mxu0 0
      %5288 = vmatprep.subr.bf16.mxu0 0
      %5289 = vmatpush1.bf16.msra.mxu0 0
      %5290 = vmatprep.subr.bf16.mxu0 0
      %5291 = vmatpush1.bf16.msra.mxu0 0
      %5292 = vmatprep.subr.bf16.mxu0 0
      %5293 = vmatpush1.bf16.msra.mxu0 0
      %5294 = vmatprep.subr.bf16.mxu0 0
      %5295 = vmatpush1.bf16.msra.mxu0 0
      %5296 = vmatprep.subr.bf16.mxu0 0
      %5297 = vmatpush1.bf16.msra.mxu0 0
      %5298 = vmatprep.subr.bf16.mxu0 0
      %5299 = vmatpush1.bf16.msra.mxu0 0
      %5300 = vmatprep.subr.bf16.mxu0 0
      %5301 = vmatpush1.bf16.msra.mxu0 0
      %5302 = vmatprep.subr.bf16.mxu0 0
      %5303 = vmatpush1.bf16.msra.mxu0 0
      %5304 = vmatprep.mubr.bf16.mxu0 0
      %5305 = vmatmul.mubr.bf16.gmra.mrb[0].mxu0 %v5234
      %v5306 = vpop.f32.mrb[0].mxu0
      %v5307 = vadd.f32 0.0, %v5306
      %v5308 = vpop.f32.mrb[0].mxu0
      %v5309 = vpop.f32.mrb[0].mxu0
      %v5310 = vadd.f32 0.0, %v5309
      %v5311 = vpop.f32.mrb[0].mxu0
      %5312 = vmatprep.mubr.bf16.mxu0 0
      %5313 = vmatmul.mubr.bf16.gmra.mrb[0].mxu0 %v5237
      %v5314 = vpop.f32.mrb[0].mxu0
      %v5315 = vadd.f32 0.0, %v5314
      %v5316 = vpop.f32.mrb[0].mxu0
      %v5317 = vpop.f32.mrb[0].mxu0
      %v5318 = vadd.f32 0.0, %v5317
      %v5319 = vpop.f32.mrb[0].mxu0
      %5320 = vmatprep.mubr.bf16.mxu0 0
      %5321 = vmatmul.mubr.bf16.gmra.mrb[0].mxu0 %v5240
      %v5322 = vpop.f32.mrb[0].mxu0
      %v5323 = vadd.f32 0.0, %v5322
      %v5324 = vpop.f32.mrb[0].mxu0
      %v5325 = vpop.f32.mrb[0].mxu0
      %v5326 = vadd.f32 0.0, %v5325
      %v5327 = vpop.f32.mrb[0].mxu0
      %5328 = vmatprep.mubr.bf16.mxu0 0
      %5329 = vmatmul.mubr.bf16.gmra.mrb[0].mxu0 %v5243
      %v5330 = vpop.f32.mrb[0].mxu0
      %v5331 = vadd.f32 0.0, %v5330
      %v5332 = vpop.f32.mrb[0].mxu0
      %v5333 = vpop.f32.mrb[0].mxu0
      %v5334 = vadd.f32 0.0, %v5333
      %v5335 = vpop.f32.mrb[0].mxu0
      %5336 = vmatprep.mubr.bf16.mxu0 0
      %5337 = vmatmul.mubr.bf16.gmra.mrb[0].mxu0 %v5246
      %v5338 = vpop.f32.mrb[0].mxu0
      %v5339 = vadd.f32 0.0, %v5338
      %v5340 = vpop.f32.mrb[0].mxu0
      %v5341 = vpop.f32.mrb[0].mxu0
      %v5342 = vadd.f32 0.0, %v5341
      %v5343 = vpop.f32.mrb[0].mxu0
      %5344 = vmatprep.mubr.bf16.mxu0 0
      %5345 = vmatmul.mubr.bf16.gmra.mrb[0].mxu0 %v5249
      %v5346 = vpop.f32.mrb[0].mxu0
      %v5347 = vadd.f32 0.0, %v5346
      %v5348 = vpop.f32.mrb[0].mxu0
      %v5349 = vpop.f32.mrb[0].mxu0
      %v5350 = vadd.f32 0.0, %v5349
      %v5351 = vpop.f32.mrb[0].mxu0
      %5352 = vmatprep.mubr.bf16.mxu0 0
      %5353 = vmatmul.mubr.bf16.gmra.mrb[0].mxu0 %v5252
      %v5354 = vpop.f32.mrb[0].mxu0
      %v5355 = vadd.f32 0.0, %v5354
      %v5356 = vpop.f32.mrb[0].mxu0
      %v5357 = vpop.f32.mrb[0].mxu0
      %v5358 = vadd.f32 0.0, %v5357
      %v5359 = vpop.f32.mrb[0].mxu0
      %5360 = vmatprep.mubr.bf16.mxu0 0
      %5361 = vmatmul.mubr.bf16.gmra.mrb[0].mxu0 %v5255
      %v5362 = vpop.f32.mrb[0].mxu0
      %v5363 = vadd.f32 0.0, %v5362
      %v5364 = vpop.f32.mrb[0].mxu0
      %v5365 = vpop.f32.mrb[0].mxu0
      %v5366 = vadd.f32 0.0, %v5365
      %v5367 = vpop.f32.mrb[0].mxu0
      %5368 = vmatprep.mubr.bf16.mxu0 0
      %5369 = vmatmul.mubr.bf16.gmra.mrb[0].mxu0 %v5258
      %v5370 = vpop.f32.mrb[0].mxu0
      %v5371 = vadd.f32 0.0, %v5370
      %v5372 = vpop.f32.mrb[0].mxu0
      %v5373 = vpop.f32.mrb[0].mxu0
      %v5374 = vadd.f32 0.0, %v5373
      %v5375 = vpop.f32.mrb[0].mxu0
      %5376 = vmatprep.mubr.bf16.mxu0 0
      %5377 = vmatmul.mubr.bf16.gmra.mrb[0].mxu0 %v5261
      %v5378 = vpop.f32.mrb[0].mxu0
      %v5379 = vadd.f32 0.0, %v5378
      %v5380 = vpop.f32.mrb[0].mxu0
      %v5381 = vpop.f32.mrb[0].mxu0
      %v5382 = vadd.f32 0.0, %v5381
      %v5383 = vpop.f32.mrb[0].mxu0
      %5384 = vmatprep.mubr.bf16.mxu0 0
      %5385 = vmatmul.mubr.bf16.gmra.mrb[0].mxu0 %v5264
      %v5386 = vpop.f32.mrb[0].mxu0
      %v5387 = vadd.f32 0.0, %v5386
      %v5388 = vpop.f32.mrb[0].mxu0
      %v5389 = vpop.f32.mrb[0].mxu0
      %v5390 = vadd.f32 0.0, %v5389
      %v5391 = vpop.f32.mrb[0].mxu0
      %5392 = vmatprep.mubr.bf16.mxu0 0
      %5393 = vmatmul.mubr.bf16.gmra.mrb[0].mxu0 %v5267
      %v5394 = vpop.f32.mrb[0].mxu0
      %v5395 = vadd.f32 0.0, %v5394
      %v5396 = vpop.f32.mrb[0].mxu0
      %v5397 = vpop.f32.mrb[0].mxu0
      %v5398 = vadd.f32 0.0, %v5397
      %v5399 = vpop.f32.mrb[0].mxu0
      %5400 = vdwg.mxu0
      %v5401 = vadd.f32 %v5019, %v5307
      %v5402 = vadd.f32 %v5020, %v5310
      %v5403 = vadd.f32 %v5021, %v5315
      %v5404 = vadd.f32 %v5022, %v5318
      %v5405 = vadd.f32 %v5023, %v5323
      %v5406 = vadd.f32 %v5024, %v5326
      %v5407 = vadd.f32 %v5025, %v5331
      %v5408 = vadd.f32 %v5026, %v5334
      %v5409 = vadd.f32 %v5027, %v5339
      %v5410 = vadd.f32 %v5028, %v5342
      %v5411 = vadd.f32 %v5029, %v5347
      %v5412 = vadd.f32 %v5030, %v5350
      %v5413 = vadd.f32 %v5031, %v5355
      %v5414 = vadd.f32 %v5032, %v5358
      %v5415 = vadd.f32 %v5033, %v5363
      %v5416 = vadd.f32 %v5034, %v5366
      %v5417 = vadd.f32 %v5035, %v5371
      %v5418 = vadd.f32 %v5036, %v5374
      %v5419 = vadd.f32 %v5037, %v5379
      %v5420 = vadd.f32 %v5038, %v5382
      %v5421 = vadd.f32 %v5039, %v5387
      %v5422 = vadd.f32 %v5040, %v5390
      %v5423 = vadd.f32 %v5041, %v5395
      %v5424 = vadd.f32 %v5042, %v5398
      %v5425 = vld [vmem:[#allocation3 + $0xc] sm:$0xe]
      %s5426 = scalar_lea.vmem %s5, 10
      %v5427 = vld [vmem:[%s5426] sm:$0x3]
      %v5429 = vunpack.c.l.b16 %v5425
      %v5430 = vpack.c.b16 %v5096, %v5429
      %v5431 = vrot.slane %v5430, 1
      %v5432 = vrot.slane %v5121, 1
      %v5433 = vsel %vm1152, %v5431, %v5432
      %v5434 = vrot.slane %v5122, 1
      %v5435 = vsel %vm1152, %v5432, %v5434
      %v5436 = vrot.slane %v5123, 1
      %v5437 = vsel %vm1152, %v5434, %v5436
      %v5438 = vrot.slane %v5124, 1
      %v5439 = vsel %vm1152, %v5436, %v5438
      %v5440 = vrot.slane %v5125, 1
      %v5441 = vsel %vm1152, %v5438, %v5440
      %v5442 = vrot.slane %v5126, 1
      %v5443 = vsel %vm1152, %v5440, %v5442
      %v5444 = vrot.slane %v5127, 1
      %v5445 = vsel %vm1152, %v5442, %v5444
      %v5446 = vrot.slane %v5128, 1
      %v5447 = vsel %vm1152, %v5444, %v5446
      %v5448 = vrot.slane %v5129, 1
      %v5449 = vsel %vm1152, %v5446, %v5448
      %v5450 = vrot.slane %v5130, 1
      %v5451 = vsel %vm1152, %v5448, %v5450
      %v5452 = vrot.slane %v5131, 1
      %v5453 = vsel %vm1152, %v5450, %v5452
      %v5454 = vrot.slane %v5132, 1
      %v5455 = vsel %vm1152, %v5452, %v5454
      %v5457 = vsel %vm4216, %v5433, 0
      %v5460 = vsel %vm4216, %v5435, 0
      %v5463 = vsel %vm4216, %v5437, 0
      %v5466 = vsel %vm4216, %v5439, 0
      %v5469 = vsel %vm4216, %v5441, 0
      %v5472 = vsel %vm4216, %v5443, 0
      %v5475 = vsel %vm4216, %v5445, 0
      %v5478 = vsel %vm4216, %v5447, 0
      %v5481 = vsel %vm4216, %v5449, 0
      %v5484 = vsel %vm4216, %v5451, 0
      %v5487 = vsel %vm4216, %v5453, 0
      %v5490 = vsel %vm4216, %v5455, 0
      %v5493 = vsel %vm4253, %v5427, 0
      %5495 = vmatprep.subr.bf16.mxu0 0
      %5496 = vmatpush1.bf16.msra.mxu0 %v5493
      %5497 = vmatprep.subr.bf16.mxu0 0
      %5498 = vmatpush1.bf16.msra.mxu0 0
      %5499 = vmatprep.subr.bf16.mxu0 0
      %5500 = vmatpush1.bf16.msra.mxu0 0
      %5501 = vmatprep.subr.bf16.mxu0 0
      %5502 = vmatpush1.bf16.msra.mxu0 0
      %5503 = vmatprep.subr.bf16.mxu0 0
      %5504 = vmatpush1.bf16.msra.mxu0 0
      %5505 = vmatprep.subr.bf16.mxu0 0
      %5506 = vmatpush1.bf16.msra.mxu0 0
      %5507 = vmatprep.subr.bf16.mxu0 0
      %5508 = vmatpush1.bf16.msra.mxu0 0
      %5509 = vmatprep.subr.bf16.mxu0 0
      %5510 = vmatpush1.bf16.msra.mxu0 0
      %5511 = vmatprep.subr.bf16.mxu0 0
      %5512 = vmatpush1.bf16.msra.mxu0 0
      %5513 = vmatprep.subr.bf16.mxu0 0
      %5514 = vmatpush1.bf16.msra.mxu0 0
      %5515 = vmatprep.subr.bf16.mxu0 0
      %5516 = vmatpush1.bf16.msra.mxu0 0
      %5517 = vmatprep.subr.bf16.mxu0 0
      %5518 = vmatpush1.bf16.msra.mxu0 0
      %5519 = vmatprep.subr.bf16.mxu0 0
      %5520 = vmatpush1.bf16.msra.mxu0 0
      %5521 = vmatprep.subr.bf16.mxu0 0
      %5522 = vmatpush1.bf16.msra.mxu0 0
      %5523 = vmatprep.subr.bf16.mxu0 0
      %5524 = vmatpush1.bf16.msra.mxu0 0
      %5525 = vmatprep.subr.bf16.mxu0 0
      %5526 = vmatpush1.bf16.msra.mxu0 0
      %5527 = vmatprep.mubr.bf16.mxu0 0
      %5528 = vmatmul.mubr.bf16.gmra.mrb[0].mxu0 %v5457
      %v5529 = vpop.f32.mrb[0].mxu0
      %v5530 = vadd.f32 0.0, %v5529
      %v5531 = vpop.f32.mrb[0].mxu0
      %v5532 = vpop.f32.mrb[0].mxu0
      %v5533 = vadd.f32 0.0, %v5532
      %v5534 = vpop.f32.mrb[0].mxu0
      %5535 = vmatprep.mubr.bf16.mxu0 0
      %5536 = vmatmul.mubr.bf16.gmra.mrb[0].mxu0 %v5460
      %v5537 = vpop.f32.mrb[0].mxu0
      %v5538 = vadd.f32 0.0, %v5537
      %v5539 = vpop.f32.mrb[0].mxu0
      %v5540 = vpop.f32.mrb[0].mxu0
      %v5541 = vadd.f32 0.0, %v5540
      %v5542 = vpop.f32.mrb[0].mxu0
      %5543 = vmatprep.mubr.bf16.mxu0 0
      %5544 = vmatmul.mubr.bf16.gmra.mrb[0].mxu0 %v5463
      %v5545 = vpop.f32.mrb[0].mxu0
      %v5546 = vadd.f32 0.0, %v5545
      %v5547 = vpop.f32.mrb[0].mxu0
      %v5548 = vpop.f32.mrb[0].mxu0
      %v5549 = vadd.f32 0.0, %v5548
      %v5550 = vpop.f32.mrb[0].mxu0
      %5551 = vmatprep.mubr.bf16.mxu0 0
      %5552 = vmatmul.mubr.bf16.gmra.mrb[0].mxu0 %v5466
      %v5553 = vpop.f32.mrb[0].mxu0
      %v5554 = vadd.f32 0.0, %v5553
      %v5555 = vpop.f32.mrb[0].mxu0
      %v5556 = vpop.f32.mrb[0].mxu0
      %v5557 = vadd.f32 0.0, %v5556
      %v5558 = vpop.f32.mrb[0].mxu0
      %5559 = vmatprep.mubr.bf16.mxu0 0
      %5560 = vmatmul.mubr.bf16.gmra.mrb[0].mxu0 %v5469
      %v5561 = vpop.f32.mrb[0].mxu0
      %v5562 = vadd.f32 0.0, %v5561
      %v5563 = vpop.f32.mrb[0].mxu0
      %v5564 = vpop.f32.mrb[0].mxu0
      %v5565 = vadd.f32 0.0, %v5564
      %v5566 = vpop.f32.mrb[0].mxu0
      %5567 = vmatprep.mubr.bf16.mxu0 0
      %5568 = vmatmul.mubr.bf16.gmra.mrb[0].mxu0 %v5472
      %v5569 = vpop.f32.mrb[0].mxu0
      %v5570 = vadd.f32 0.0, %v5569
      %v5571 = vpop.f32.mrb[0].mxu0
      %v5572 = vpop.f32.mrb[0].mxu0
      %v5573 = vadd.f32 0.0, %v5572
      %v5574 = vpop.f32.mrb[0].mxu0
      %5575 = vmatprep.mubr.bf16.mxu0 0
      %5576 = vmatmul.mubr.bf16.gmra.mrb[0].mxu0 %v5475
      %v5577 = vpop.f32.mrb[0].mxu0
      %v5578 = vadd.f32 0.0, %v5577
      %v5579 = vpop.f32.mrb[0].mxu0
      %v5580 = vpop.f32.mrb[0].mxu0
      %v5581 = vadd.f32 0.0, %v5580
      %v5582 = vpop.f32.mrb[0].mxu0
      %5583 = vmatprep.mubr.bf16.mxu0 0
      %5584 = vmatmul.mubr.bf16.gmra.mrb[0].mxu0 %v5478
      %v5585 = vpop.f32.mrb[0].mxu0
      %v5586 = vadd.f32 0.0, %v5585
      %v5587 = vpop.f32.mrb[0].mxu0
      %v5588 = vpop.f32.mrb[0].mxu0
      %v5589 = vadd.f32 0.0, %v5588
      %v5590 = vpop.f32.mrb[0].mxu0
      %5591 = vmatprep.mubr.bf16.mxu0 0
      %5592 = vmatmul.mubr.bf16.gmra.mrb[0].mxu0 %v5481
      %v5593 = vpop.f32.mrb[0].mxu0
      %v5594 = vadd.f32 0.0, %v5593
      %v5595 = vpop.f32.mrb[0].mxu0
      %v5596 = vpop.f32.mrb[0].mxu0
      %v5597 = vadd.f32 0.0, %v5596
      %v5598 = vpop.f32.mrb[0].mxu0
      %5599 = vmatprep.mubr.bf16.mxu0 0
      %5600 = vmatmul.mubr.bf16.gmra.mrb[0].mxu0 %v5484
      %v5601 = vpop.f32.mrb[0].mxu0
      %v5602 = vadd.f32 0.0, %v5601
      %v5603 = vpop.f32.mrb[0].mxu0
      %v5604 = vpop.f32.mrb[0].mxu0
      %v5605 = vadd.f32 0.0, %v5604
      %v5606 = vpop.f32.mrb[0].mxu0
      %5607 = vmatprep.mubr.bf16.mxu0 0
      %5608 = vmatmul.mubr.bf16.gmra.mrb[0].mxu0 %v5487
      %v5609 = vpop.f32.mrb[0].mxu0
      %v5610 = vadd.f32 0.0, %v5609
      %v5611 = vpop.f32.mrb[0].mxu0
      %v5612 = vpop.f32.mrb[0].mxu0
      %v5613 = vadd.f32 0.0, %v5612
      %v5614 = vpop.f32.mrb[0].mxu0
      %5615 = vmatprep.mubr.bf16.mxu0 0
      %5616 = vmatmul.mubr.bf16.gmra.mrb[0].mxu0 %v5490
      %v5617 = vpop.f32.mrb[0].mxu0
      %v5618 = vadd.f32 0.0, %v5617
      %v5619 = vpop.f32.mrb[0].mxu0
      %v5620 = vpop.f32.mrb[0].mxu0
      %v5621 = vadd.f32 0.0, %v5620
      %v5622 = vpop.f32.mrb[0].mxu0
      %5623 = vdwg.mxu0
      %v5624 = vadd.f32 %v5401, %v5530
      %v5625 = vadd.f32 %v5402, %v5533
      %v5626 = vadd.f32 %v5403, %v5538
      %v5627 = vadd.f32 %v5404, %v5541
      %v5628 = vadd.f32 %v5405, %v5546
      %v5629 = vadd.f32 %v5406, %v5549
      %v5630 = vadd.f32 %v5407, %v5554
      %v5631 = vadd.f32 %v5408, %v5557
      %v5632 = vadd.f32 %v5409, %v5562
      %v5633 = vadd.f32 %v5410, %v5565
      %v5634 = vadd.f32 %v5411, %v5570
      %v5635 = vadd.f32 %v5412, %v5573
      %v5636 = vadd.f32 %v5413, %v5578
      %v5637 = vadd.f32 %v5414, %v5581
      %v5638 = vadd.f32 %v5415, %v5586
      %v5639 = vadd.f32 %v5416, %v5589
      %v5640 = vadd.f32 %v5417, %v5594
      %v5641 = vadd.f32 %v5418, %v5597
      %v5642 = vadd.f32 %v5419, %v5602
      %v5643 = vadd.f32 %v5420, %v5605
      %v5644 = vadd.f32 %v5421, %v5610
      %v5645 = vadd.f32 %v5422, %v5613
      %v5646 = vadd.f32 %v5423, %v5618
      %v5647 = vadd.f32 %v5424, %v5621
      %v5648 = vld [vmem:[#allocation3 + $0x18] sm:$0xf]
      %v5649 = vld [vmem:[#allocation3 + $0x1c] sm:$0xf]
      %v5650 = vld [vmem:[#allocation3 + $0x20] sm:$0xf]
      %v5651 = vld [vmem:[#allocation3 + $0x24] sm:$0xf]
      %v5652 = vld [vmem:[#allocation3 + $0x28] sm:$0xf]
      %v5653 = vld [vmem:[#allocation3 + $0x2c] sm:$0xf]
      %v5654 = vld [vmem:[#allocation3 + $0x30] sm:$0xf]
      %v5655 = vld [vmem:[#allocation3 + $0x34] sm:$0xf]
      %v5656 = vld [vmem:[#allocation3 + $0x38] sm:$0xf]
      %v5657 = vld [vmem:[#allocation3 + $0x3c] sm:$0xf]
      %v5658 = vld [vmem:[#allocation3 + $0x40] sm:$0xf]
      %v5659 = vld [vmem:[#allocation3 + $0x44] sm:$0xf]
      %v5660 = vld [vmem:[#allocation3 + $0x48] sm:$0xf]
      %v5661 = vld [vmem:[#allocation3 + $0x4c] sm:$0xf]
      %v5662 = vld [vmem:[#allocation3 + $0x50] sm:$0xf]
      %v5663 = vld [vmem:[#allocation3 + $0x54] sm:$0xf]
      %v5664 = vld [vmem:[#allocation3 + $0x58] sm:$0xf]
      %v5665 = vld [vmem:[#allocation3 + $0x5c] sm:$0xf]
      %v5666 = vld [vmem:[#allocation3 + $0x60] sm:$0xf]
      %v5667 = vld [vmem:[#allocation3 + $0x64] sm:$0xf]
      %v5668 = vld [vmem:[#allocation3 + $0x68] sm:$0xf]
      %v5669 = vld [vmem:[#allocation3 + $0x6c] sm:$0xf]
      %v5670 = vld [vmem:[#allocation3 + $0x70] sm:$0xf]
      %v5671 = vld [vmem:[#allocation3 + $0x74] sm:$0xf]
      %s5672 = scalar_lea.vmem %s5, 12
      %v5673 = vld [vmem:[%s5672] sm:$0x3]
      %v5698 = vunpack.c.l.b16 %v5648
      %v5699 = vunpack.c.l.b16 %v5649
      %v5700 = vunpack.c.l.b16 %v5650
      %v5701 = vunpack.c.l.b16 %v5651
      %v5702 = vunpack.c.l.b16 %v5652
      %v5703 = vunpack.c.l.b16 %v5653
      %v5704 = vunpack.c.l.b16 %v5654
      %v5705 = vunpack.c.l.b16 %v5655
      %v5706 = vunpack.c.l.b16 %v5656
      %v5707 = vunpack.c.l.b16 %v5657
      %v5708 = vunpack.c.l.b16 %v5658
      %v5709 = vunpack.c.l.b16 %v5659
      %v5710 = vunpack.c.l.b16 %v5660
      %v5711 = vunpack.c.l.b16 %v5661
      %v5712 = vunpack.c.l.b16 %v5662
      %v5713 = vunpack.c.l.b16 %v5663
      %v5714 = vunpack.c.l.b16 %v5664
      %v5715 = vunpack.c.l.b16 %v5665
      %v5716 = vunpack.c.l.b16 %v5666
      %v5717 = vunpack.c.l.b16 %v5667
      %v5718 = vunpack.c.l.b16 %v5668
      %v5719 = vunpack.c.l.b16 %v5669
      %v5720 = vunpack.c.l.b16 %v5670
      %v5721 = vunpack.c.l.b16 %v5671
      %v5722 = vpack.c.b16 %v5699, %v5698
      %v5723 = vpack.c.b16 %v5701, %v5700
      %v5724 = vpack.c.b16 %v5703, %v5702
      %v5725 = vpack.c.b16 %v5705, %v5704
      %v5726 = vpack.c.b16 %v5707, %v5706
      %v5727 = vpack.c.b16 %v5709, %v5708
      %v5728 = vpack.c.b16 %v5711, %v5710
      %v5729 = vpack.c.b16 %v5713, %v5712
      %v5730 = vpack.c.b16 %v5715, %v5714
      %v5731 = vpack.c.b16 %v5717, %v5716
      %v5732 = vpack.c.b16 %v5719, %v5718
      %v5733 = vpack.c.b16 %v5721, %v5720
      %v5735 = vsel %vm4216, %v5722, 0
      %v5738 = vsel %vm4216, %v5723, 0
      %v5741 = vsel %vm4216, %v5724, 0
      %v5744 = vsel %vm4216, %v5725, 0
      %v5747 = vsel %vm4216, %v5726, 0
      %v5750 = vsel %vm4216, %v5727, 0
      %v5753 = vsel %vm4216, %v5728, 0
      %v5756 = vsel %vm4216, %v5729, 0
      %v5759 = vsel %vm4216, %v5730, 0
      %v5762 = vsel %vm4216, %v5731, 0
      %v5765 = vsel %vm4216, %v5732, 0
      %v5768 = vsel %vm4216, %v5733, 0
      %v5771 = vsel %vm4253, %v5673, 0
      %5773 = vmatprep.subr.bf16.mxu0 0
      %5774 = vmatpush1.bf16.msra.mxu0 %v5771
      %5775 = vmatprep.subr.bf16.mxu0 0
      %5776 = vmatpush1.bf16.msra.mxu0 0
      %5777 = vmatprep.subr.bf16.mxu0 0
      %5778 = vmatpush1.bf16.msra.mxu0 0
      %5779 = vmatprep.subr.bf16.mxu0 0
      %5780 = vmatpush1.bf16.msra.mxu0 0
      %5781 = vmatprep.subr.bf16.mxu0 0
      %5782 = vmatpush1.bf16.msra.mxu0 0
      %5783 = vmatprep.subr.bf16.mxu0 0
      %5784 = vmatpush1.bf16.msra.mxu0 0
      %5785 = vmatprep.subr.bf16.mxu0 0
      %5786 = vmatpush1.bf16.msra.mxu0 0
      %5787 = vmatprep.subr.bf16.mxu0 0
      %5788 = vmatpush1.bf16.msra.mxu0 0
      %5789 = vmatprep.subr.bf16.mxu0 0
      %5790 = vmatpush1.bf16.msra.mxu0 0
      %5791 = vmatprep.subr.bf16.mxu0 0
      %5792 = vmatpush1.bf16.msra.mxu0 0
      %5793 = vmatprep.subr.bf16.mxu0 0
      %5794 = vmatpush1.bf16.msra.mxu0 0
      %5795 = vmatprep.subr.bf16.mxu0 0
      %5796 = vmatpush1.bf16.msra.mxu0 0
      %5797 = vmatprep.subr.bf16.mxu0 0
      %5798 = vmatpush1.bf16.msra.mxu0 0
      %5799 = vmatprep.subr.bf16.mxu0 0
      %5800 = vmatpush1.bf16.msra.mxu0 0
      %5801 = vmatprep.subr.bf16.mxu0 0
      %5802 = vmatpush1.bf16.msra.mxu0 0
      %5803 = vmatprep.subr.bf16.mxu0 0
      %5804 = vmatpush1.bf16.msra.mxu0 0
      %5805 = vmatprep.mubr.bf16.mxu0 0
      %5806 = vmatmul.mubr.bf16.gmra.mrb[0].mxu0 %v5735
      %v5807 = vpop.f32.mrb[0].mxu0
      %v5808 = vadd.f32 0.0, %v5807
      %v5809 = vpop.f32.mrb[0].mxu0
      %v5810 = vpop.f32.mrb[0].mxu0
      %v5811 = vadd.f32 0.0, %v5810
      %v5812 = vpop.f32.mrb[0].mxu0
      %5813 = vmatprep.mubr.bf16.mxu0 0
      %5814 = vmatmul.mubr.bf16.gmra.mrb[0].mxu0 %v5738
      %v5815 = vpop.f32.mrb[0].mxu0
      %v5816 = vadd.f32 0.0, %v5815
      %v5817 = vpop.f32.mrb[0].mxu0
      %v5818 = vpop.f32.mrb[0].mxu0
      %v5819 = vadd.f32 0.0, %v5818
      %v5820 = vpop.f32.mrb[0].mxu0
      %5821 = vmatprep.mubr.bf16.mxu0 0
      %5822 = vmatmul.mubr.bf16.gmra.mrb[0].mxu0 %v5741
      %v5823 = vpop.f32.mrb[0].mxu0
      %v5824 = vadd.f32 0.0, %v5823
      %v5825 = vpop.f32.mrb[0].mxu0
      %v5826 = vpop.f32.mrb[0].mxu0
      %v5827 = vadd.f32 0.0, %v5826
      %v5828 = vpop.f32.mrb[0].mxu0
      %5829 = vmatprep.mubr.bf16.mxu0 0
      %5830 = vmatmul.mubr.bf16.gmra.mrb[0].mxu0 %v5744
      %v5831 = vpop.f32.mrb[0].mxu0
      %v5832 = vadd.f32 0.0, %v5831
      %v5833 = vpop.f32.mrb[0].mxu0
      %v5834 = vpop.f32.mrb[0].mxu0
      %v5835 = vadd.f32 0.0, %v5834
      %v5836 = vpop.f32.mrb[0].mxu0
      %5837 = vmatprep.mubr.bf16.mxu0 0
      %5838 = vmatmul.mubr.bf16.gmra.mrb[0].mxu0 %v5747
      %v5839 = vpop.f32.mrb[0].mxu0
      %v5840 = vadd.f32 0.0, %v5839
      %v5841 = vpop.f32.mrb[0].mxu0
      %v5842 = vpop.f32.mrb[0].mxu0
      %v5843 = vadd.f32 0.0, %v5842
      %v5844 = vpop.f32.mrb[0].mxu0
      %5845 = vmatprep.mubr.bf16.mxu0 0
      %5846 = vmatmul.mubr.bf16.gmra.mrb[0].mxu0 %v5750
      %v5847 = vpop.f32.mrb[0].mxu0
      %v5848 = vadd.f32 0.0, %v5847
      %v5849 = vpop.f32.mrb[0].mxu0
      %v5850 = vpop.f32.mrb[0].mxu0
      %v5851 = vadd.f32 0.0, %v5850
      %v5852 = vpop.f32.mrb[0].mxu0
      %5853 = vmatprep.mubr.bf16.mxu0 0
      %5854 = vmatmul.mubr.bf16.gmra.mrb[0].mxu0 %v5753
      %v5855 = vpop.f32.mrb[0].mxu0
      %v5856 = vadd.f32 0.0, %v5855
      %v5857 = vpop.f32.mrb[0].mxu0
      %v5858 = vpop.f32.mrb[0].mxu0
      %v5859 = vadd.f32 0.0, %v5858
      %v5860 = vpop.f32.mrb[0].mxu0
      %5861 = vmatprep.mubr.bf16.mxu0 0
      %5862 = vmatmul.mubr.bf16.gmra.mrb[0].mxu0 %v5756
      %v5863 = vpop.f32.mrb[0].mxu0
      %v5864 = vadd.f32 0.0, %v5863
      %v5865 = vpop.f32.mrb[0].mxu0
      %v5866 = vpop.f32.mrb[0].mxu0
      %v5867 = vadd.f32 0.0, %v5866
      %v5868 = vpop.f32.mrb[0].mxu0
      %5869 = vmatprep.mubr.bf16.mxu0 0
      %5870 = vmatmul.mubr.bf16.gmra.mrb[0].mxu0 %v5759
      %v5871 = vpop.f32.mrb[0].mxu0
      %v5872 = vadd.f32 0.0, %v5871
      %v5873 = vpop.f32.mrb[0].mxu0
      %v5874 = vpop.f32.mrb[0].mxu0
      %v5875 = vadd.f32 0.0, %v5874
      %v5876 = vpop.f32.mrb[0].mxu0
      %5877 = vmatprep.mubr.bf16.mxu0 0
      %5878 = vmatmul.mubr.bf16.gmra.mrb[0].mxu0 %v5762
      %v5879 = vpop.f32.mrb[0].mxu0
      %v5880 = vadd.f32 0.0, %v5879
      %v5881 = vpop.f32.mrb[0].mxu0
      %v5882 = vpop.f32.mrb[0].mxu0
      %v5883 = vadd.f32 0.0, %v5882
      %v5884 = vpop.f32.mrb[0].mxu0
      %5885 = vmatprep.mubr.bf16.mxu0 0
      %5886 = vmatmul.mubr.bf16.gmra.mrb[0].mxu0 %v5765
      %v5887 = vpop.f32.mrb[0].mxu0
      %v5888 = vadd.f32 0.0, %v5887
      %v5889 = vpop.f32.mrb[0].mxu0
      %v5890 = vpop.f32.mrb[0].mxu0
      %v5891 = vadd.f32 0.0, %v5890
      %v5892 = vpop.f32.mrb[0].mxu0
      %5893 = vmatprep.mubr.bf16.mxu0 0
      %5894 = vmatmul.mubr.bf16.gmra.mrb[0].mxu0 %v5768
      %v5895 = vpop.f32.mrb[0].mxu0
      %v5896 = vadd.f32 0.0, %v5895
      %v5897 = vpop.f32.mrb[0].mxu0
      %v5898 = vpop.f32.mrb[0].mxu0
      %v5899 = vadd.f32 0.0, %v5898
      %v5900 = vpop.f32.mrb[0].mxu0
      %5901 = vdwg.mxu0
      %v5902 = vadd.f32 %v5624, %v5808
      %v5903 = vadd.f32 %v5625, %v5811
      %v5904 = vadd.f32 %v5626, %v5816
      %v5905 = vadd.f32 %v5627, %v5819
      %v5906 = vadd.f32 %v5628, %v5824
      %v5907 = vadd.f32 %v5629, %v5827
      %v5908 = vadd.f32 %v5630, %v5832
      %v5909 = vadd.f32 %v5631, %v5835
      %v5910 = vadd.f32 %v5632, %v5840
      %v5911 = vadd.f32 %v5633, %v5843
      %v5912 = vadd.f32 %v5634, %v5848
      %v5913 = vadd.f32 %v5635, %v5851
      %v5914 = vadd.f32 %v5636, %v5856
      %v5915 = vadd.f32 %v5637, %v5859
      %v5916 = vadd.f32 %v5638, %v5864
      %v5917 = vadd.f32 %v5639, %v5867
      %v5918 = vadd.f32 %v5640, %v5872
      %v5919 = vadd.f32 %v5641, %v5875
      %v5920 = vadd.f32 %v5642, %v5880
      %v5921 = vadd.f32 %v5643, %v5883
      %v5922 = vadd.f32 %v5644, %v5888
      %v5923 = vadd.f32 %v5645, %v5891
      %v5924 = vadd.f32 %v5646, %v5896
      %v5925 = vadd.f32 %v5647, %v5899
      %v5926 = vld [vmem:[#allocation3 + $0x18] sm:$0xf]
      %v5927 = vld [vmem:[#allocation3 + $0x1c] sm:$0xf]
      %v5928 = vld [vmem:[#allocation3 + $0x20] sm:$0xf]
      %v5929 = vld [vmem:[#allocation3 + $0x24] sm:$0xf]
      %v5930 = vld [vmem:[#allocation3 + $0x28] sm:$0xf]
      %v5931 = vld [vmem:[#allocation3 + $0x2c] sm:$0xf]
      %v5932 = vld [vmem:[#allocation3 + $0x30] sm:$0xf]
      %v5933 = vld [vmem:[#allocation3 + $0x34] sm:$0xf]
      %v5934 = vld [vmem:[#allocation3 + $0x38] sm:$0xf]
      %v5935 = vld [vmem:[#allocation3 + $0x3c] sm:$0xf]
      %v5936 = vld [vmem:[#allocation3 + $0x40] sm:$0xf]
      %v5937 = vld [vmem:[#allocation3 + $0x44] sm:$0xf]
      %v5938 = vld [vmem:[#allocation3 + $0x48] sm:$0xf]
      %v5939 = vld [vmem:[#allocation3 + $0x4c] sm:$0xf]
      %v5940 = vld [vmem:[#allocation3 + $0x50] sm:$0xf]
      %v5941 = vld [vmem:[#allocation3 + $0x54] sm:$0xf]
      %v5942 = vld [vmem:[#allocation3 + $0x58] sm:$0xf]
      %v5943 = vld [vmem:[#allocation3 + $0x5c] sm:$0xf]
      %v5944 = vld [vmem:[#allocation3 + $0x60] sm:$0xf]
      %v5945 = vld [vmem:[#allocation3 + $0x64] sm:$0xf]
      %v5946 = vld [vmem:[#allocation3 + $0x68] sm:$0xf]
      %v5947 = vld [vmem:[#allocation3 + $0x6c] sm:$0xf]
      %v5948 = vld [vmem:[#allocation3 + $0x70] sm:$0xf]
      %v5949 = vld [vmem:[#allocation3 + $0x74] sm:$0xf]
      %v5950 = vld [vmem:[#allocation3 + $0x78] sm:$0x1]
      %s5951 = scalar_lea.vmem %s5, 14
      %v5952 = vld [vmem:[%s5951] sm:$0x3]
      %v5978 = vunpack.c.l.b16 %v5926
      %v5979 = vunpack.c.l.b16 %v5927
      %v5980 = vunpack.c.l.b16 %v5928
      %v5981 = vunpack.c.l.b16 %v5929
      %v5982 = vunpack.c.l.b16 %v5930
      %v5983 = vunpack.c.l.b16 %v5931
      %v5984 = vunpack.c.l.b16 %v5932
      %v5985 = vunpack.c.l.b16 %v5933
      %v5986 = vunpack.c.l.b16 %v5934
      %v5987 = vunpack.c.l.b16 %v5935
      %v5988 = vunpack.c.l.b16 %v5936
      %v5989 = vunpack.c.l.b16 %v5937
      %v5990 = vunpack.c.l.b16 %v5938
      %v5991 = vunpack.c.l.b16 %v5939
      %v5992 = vunpack.c.l.b16 %v5940
      %v5993 = vunpack.c.l.b16 %v5941
      %v5994 = vunpack.c.l.b16 %v5942
      %v5995 = vunpack.c.l.b16 %v5943
      %v5996 = vunpack.c.l.b16 %v5944
      %v5997 = vunpack.c.l.b16 %v5945
      %v5998 = vunpack.c.l.b16 %v5946
      %v5999 = vunpack.c.l.b16 %v5947
      %v6000 = vunpack.c.l.b16 %v5948
      %v6001 = vunpack.c.l.b16 %v5949
      %v6002 = vunpack.c.l.b16 %v5950
      %v6003 = vpack.c.b16 %v5979, %v5978
      %v6004 = vpack.c.b16 %v5981, %v5980
      %v6005 = vpack.c.b16 %v5983, %v5982
      %v6006 = vpack.c.b16 %v5985, %v5984
      %v6007 = vpack.c.b16 %v5987, %v5986
      %v6008 = vpack.c.b16 %v5989, %v5988
      %v6009 = vpack.c.b16 %v5991, %v5990
      %v6010 = vpack.c.b16 %v5993, %v5992
      %v6011 = vpack.c.b16 %v5995, %v5994
      %v6012 = vpack.c.b16 %v5997, %v5996
      %v6013 = vpack.c.b16 %v5999, %v5998
      %v6014 = vpack.c.b16 %v6001, %v6000
      %v6015 = vpack.c.b16 %v6002, %v6002
      %v6017 = vshrl.u32 %v6003, 16
      %v6019 = vshll.u32 %v6003, 16
      %v6021 = vrot.slane %v6019, 1
      %v6022 = vor.u32 %v6017, %v6021
      %v6024 = vshll.u32 %v6004, 16
      %v6026 = vrot.slane %v6024, 1
      %v6027 = vsel %vm632, %v6022, %v6026
      %v6028 = vshrl.u32 %v6004, 16
      %v6030 = vor.u32 %v6028, %v6026
      %v6032 = vshll.u32 %v6005, 16
      %v6034 = vrot.slane %v6032, 1
      %v6035 = vsel %vm632, %v6030, %v6034
      %v6036 = vshrl.u32 %v6005, 16
      %v6038 = vor.u32 %v6036, %v6034
      %v6040 = vshll.u32 %v6006, 16
      %v6042 = vrot.slane %v6040, 1
      %v6043 = vsel %vm632, %v6038, %v6042
      %v6044 = vshrl.u32 %v6006, 16
      %v6046 = vor.u32 %v6044, %v6042
      %v6048 = vshll.u32 %v6007, 16
      %v6050 = vrot.slane %v6048, 1
      %v6051 = vsel %vm632, %v6046, %v6050
      %v6052 = vshrl.u32 %v6007, 16
      %v6054 = vor.u32 %v6052, %v6050
      %v6056 = vshll.u32 %v6008, 16
      %v6058 = vrot.slane %v6056, 1
      %v6059 = vsel %vm632, %v6054, %v6058
      %v6060 = vshrl.u32 %v6008, 16
      %v6062 = vor.u32 %v6060, %v6058
      %v6064 = vshll.u32 %v6009, 16
      %v6066 = vrot.slane %v6064, 1
      %v6067 = vsel %vm632, %v6062, %v6066
      %v6068 = vshrl.u32 %v6009, 16
      %v6070 = vor.u32 %v6068, %v6066
      %v6072 = vshll.u32 %v6010, 16
      %v6074 = vrot.slane %v6072, 1
      %v6075 = vsel %vm632, %v6070, %v6074
      %v6076 = vshrl.u32 %v6010, 16
      %v6078 = vor.u32 %v6076, %v6074
      %v6080 = vshll.u32 %v6011, 16
      %v6082 = vrot.slane %v6080, 1
      %v6083 = vsel %vm632, %v6078, %v6082
      %v6084 = vshrl.u32 %v6011, 16
      %v6086 = vor.u32 %v6084, %v6082
      %v6088 = vshll.u32 %v6012, 16
      %v6090 = vrot.slane %v6088, 1
      %v6091 = vsel %vm632, %v6086, %v6090
      %v6092 = vshrl.u32 %v6012, 16
      %v6094 = vor.u32 %v6092, %v6090
      %v6096 = vshll.u32 %v6013, 16
      %v6098 = vrot.slane %v6096, 1
      %v6099 = vsel %vm632, %v6094, %v6098
      %v6100 = vshrl.u32 %v6013, 16
      %v6102 = vor.u32 %v6100, %v6098
      %v6104 = vshll.u32 %v6014, 16
      %v6106 = vrot.slane %v6104, 1
      %v6107 = vsel %vm632, %v6102, %v6106
      %v6108 = vshrl.u32 %v6014, 16
      %v6110 = vor.u32 %v6108, %v6106
      %v6112 = vshll.u32 %v6015, 16
      %v6114 = vrot.slane %v6112, 1
      %v6115 = vsel %vm632, %v6110, %v6114
      %v6117 = vsel %vm4216, %v6027, 0
      %v6120 = vsel %vm4216, %v6035, 0
      %v6123 = vsel %vm4216, %v6043, 0
      %v6126 = vsel %vm4216, %v6051, 0
      %v6129 = vsel %vm4216, %v6059, 0
      %v6132 = vsel %vm4216, %v6067, 0
      %v6135 = vsel %vm4216, %v6075, 0
      %v6138 = vsel %vm4216, %v6083, 0
      %v6141 = vsel %vm4216, %v6091, 0
      %v6144 = vsel %vm4216, %v6099, 0
      %v6147 = vsel %vm4216, %v6107, 0
      %v6150 = vsel %vm4216, %v6115, 0
      %v6153 = vsel %vm4253, %v5952, 0
      %6155 = vmatprep.subr.bf16.mxu0 0
      %6156 = vmatpush1.bf16.msra.mxu0 %v6153
      %6157 = vmatprep.subr.bf16.mxu0 0
      %6158 = vmatpush1.bf16.msra.mxu0 0
      %6159 = vmatprep.subr.bf16.mxu0 0
      %6160 = vmatpush1.bf16.msra.mxu0 0
      %6161 = vmatprep.subr.bf16.mxu0 0
      %6162 = vmatpush1.bf16.msra.mxu0 0
      %6163 = vmatprep.subr.bf16.mxu0 0
      %6164 = vmatpush1.bf16.msra.mxu0 0
      %6165 = vmatprep.subr.bf16.mxu0 0
      %6166 = vmatpush1.bf16.msra.mxu0 0
      %6167 = vmatprep.subr.bf16.mxu0 0
      %6168 = vmatpush1.bf16.msra.mxu0 0
      %6169 = vmatprep.subr.bf16.mxu0 0
      %6170 = vmatpush1.bf16.msra.mxu0 0
      %6171 = vmatprep.subr.bf16.mxu0 0
      %6172 = vmatpush1.bf16.msra.mxu0 0
      %6173 = vmatprep.subr.bf16.mxu0 0
      %6174 = vmatpush1.bf16.msra.mxu0 0
      %6175 = vmatprep.subr.bf16.mxu0 0
      %6176 = vmatpush1.bf16.msra.mxu0 0
      %6177 = vmatprep.subr.bf16.mxu0 0
      %6178 = vmatpush1.bf16.msra.mxu0 0
      %6179 = vmatprep.subr.bf16.mxu0 0
      %6180 = vmatpush1.bf16.msra.mxu0 0
      %6181 = vmatprep.subr.bf16.mxu0 0
      %6182 = vmatpush1.bf16.msra.mxu0 0
      %6183 = vmatprep.subr.bf16.mxu0 0
      %6184 = vmatpush1.bf16.msra.mxu0 0
      %6185 = vmatprep.subr.bf16.mxu0 0
      %6186 = vmatpush1.bf16.msra.mxu0 0
      %6187 = vmatprep.mubr.bf16.mxu0 0
      %6188 = vmatmul.mubr.bf16.gmra.mrb[0].mxu0 %v6117
      %v6189 = vpop.f32.mrb[0].mxu0
      %v6190 = vadd.f32 0.0, %v6189
      %v6191 = vpop.f32.mrb[0].mxu0
      %v6192 = vpop.f32.mrb[0].mxu0
      %v6193 = vadd.f32 0.0, %v6192
      %v6194 = vpop.f32.mrb[0].mxu0
      %6195 = vmatprep.mubr.bf16.mxu0 0
      %6196 = vmatmul.mubr.bf16.gmra.mrb[0].mxu0 %v6120
      %v6197 = vpop.f32.mrb[0].mxu0
      %v6198 = vadd.f32 0.0, %v6197
      %v6199 = vpop.f32.mrb[0].mxu0
      %v6200 = vpop.f32.mrb[0].mxu0
      %v6201 = vadd.f32 0.0, %v6200
      %v6202 = vpop.f32.mrb[0].mxu0
      %6203 = vmatprep.mubr.bf16.mxu0 0
      %6204 = vmatmul.mubr.bf16.gmra.mrb[0].mxu0 %v6123
      %v6205 = vpop.f32.mrb[0].mxu0
      %v6206 = vadd.f32 0.0, %v6205
      %v6207 = vpop.f32.mrb[0].mxu0
      %v6208 = vpop.f32.mrb[0].mxu0
      %v6209 = vadd.f32 0.0, %v6208
      %v6210 = vpop.f32.mrb[0].mxu0
      %6211 = vmatprep.mubr.bf16.mxu0 0
      %6212 = vmatmul.mubr.bf16.gmra.mrb[0].mxu0 %v6126
      %v6213 = vpop.f32.mrb[0].mxu0
      %v6214 = vadd.f32 0.0, %v6213
      %v6215 = vpop.f32.mrb[0].mxu0
      %v6216 = vpop.f32.mrb[0].mxu0
      %v6217 = vadd.f32 0.0, %v6216
      %v6218 = vpop.f32.mrb[0].mxu0
      %6219 = vmatprep.mubr.bf16.mxu0 0
      %6220 = vmatmul.mubr.bf16.gmra.mrb[0].mxu0 %v6129
      %v6221 = vpop.f32.mrb[0].mxu0
      %v6222 = vadd.f32 0.0, %v6221
      %v6223 = vpop.f32.mrb[0].mxu0
      %v6224 = vpop.f32.mrb[0].mxu0
      %v6225 = vadd.f32 0.0, %v6224
      %v6226 = vpop.f32.mrb[0].mxu0
      %6227 = vmatprep.mubr.bf16.mxu0 0
      %6228 = vmatmul.mubr.bf16.gmra.mrb[0].mxu0 %v6132
      %v6229 = vpop.f32.mrb[0].mxu0
      %v6230 = vadd.f32 0.0, %v6229
      %v6231 = vpop.f32.mrb[0].mxu0
      %v6232 = vpop.f32.mrb[0].mxu0
      %v6233 = vadd.f32 0.0, %v6232
      %v6234 = vpop.f32.mrb[0].mxu0
      %6235 = vmatprep.mubr.bf16.mxu0 0
      %6236 = vmatmul.mubr.bf16.gmra.mrb[0].mxu0 %v6135
      %v6237 = vpop.f32.mrb[0].mxu0
      %v6238 = vadd.f32 0.0, %v6237
      %v6239 = vpop.f32.mrb[0].mxu0
      %v6240 = vpop.f32.mrb[0].mxu0
      %v6241 = vadd.f32 0.0, %v6240
      %v6242 = vpop.f32.mrb[0].mxu0
      %6243 = vmatprep.mubr.bf16.mxu0 0
      %6244 = vmatmul.mubr.bf16.gmra.mrb[0].mxu0 %v6138
      %v6245 = vpop.f32.mrb[0].mxu0
      %v6246 = vadd.f32 0.0, %v6245
      %v6247 = vpop.f32.mrb[0].mxu0
      %v6248 = vpop.f32.mrb[0].mxu0
      %v6249 = vadd.f32 0.0, %v6248
      %v6250 = vpop.f32.mrb[0].mxu0
      %6251 = vmatprep.mubr.bf16.mxu0 0
      %6252 = vmatmul.mubr.bf16.gmra.mrb[0].mxu0 %v6141
      %v6253 = vpop.f32.mrb[0].mxu0
      %v6254 = vadd.f32 0.0, %v6253
      %v6255 = vpop.f32.mrb[0].mxu0
      %v6256 = vpop.f32.mrb[0].mxu0
      %v6257 = vadd.f32 0.0, %v6256
      %v6258 = vpop.f32.mrb[0].mxu0
      %6259 = vmatprep.mubr.bf16.mxu0 0
      %6260 = vmatmul.mubr.bf16.gmra.mrb[0].mxu0 %v6144
      %v6261 = vpop.f32.mrb[0].mxu0
      %v6262 = vadd.f32 0.0, %v6261
      %v6263 = vpop.f32.mrb[0].mxu0
      %v6264 = vpop.f32.mrb[0].mxu0
      %v6265 = vadd.f32 0.0, %v6264
      %v6266 = vpop.f32.mrb[0].mxu0
      %6267 = vmatprep.mubr.bf16.mxu0 0
      %6268 = vmatmul.mubr.bf16.gmra.mrb[0].mxu0 %v6147
      %v6269 = vpop.f32.mrb[0].mxu0
      %v6270 = vadd.f32 0.0, %v6269
      %v6271 = vpop.f32.mrb[0].mxu0
      %v6272 = vpop.f32.mrb[0].mxu0
      %v6273 = vadd.f32 0.0, %v6272
      %v6274 = vpop.f32.mrb[0].mxu0
      %6275 = vmatprep.mubr.bf16.mxu0 0
      %6276 = vmatmul.mubr.bf16.gmra.mrb[0].mxu0 %v6150
      %v6277 = vpop.f32.mrb[0].mxu0
      %v6278 = vadd.f32 0.0, %v6277
      %v6279 = vpop.f32.mrb[0].mxu0
      %v6280 = vpop.f32.mrb[0].mxu0
      %v6281 = vadd.f32 0.0, %v6280
      %v6282 = vpop.f32.mrb[0].mxu0
      %6283 = vdwg.mxu0
      %v6284 = vadd.f32 %v5902, %v6190
      %v6285 = vadd.f32 %v5903, %v6193
      %v6286 = vadd.f32 %v5904, %v6198
      %v6287 = vadd.f32 %v5905, %v6201
      %v6288 = vadd.f32 %v5906, %v6206
      %v6289 = vadd.f32 %v5907, %v6209
      %v6290 = vadd.f32 %v5908, %v6214
      %v6291 = vadd.f32 %v5909, %v6217
      %v6292 = vadd.f32 %v5910, %v6222
      %v6293 = vadd.f32 %v5911, %v6225
      %v6294 = vadd.f32 %v5912, %v6230
      %v6295 = vadd.f32 %v5913, %v6233
      %v6296 = vadd.f32 %v5914, %v6238
      %v6297 = vadd.f32 %v5915, %v6241
      %v6298 = vadd.f32 %v5916, %v6246
      %v6299 = vadd.f32 %v5917, %v6249
      %v6300 = vadd.f32 %v5918, %v6254
      %v6301 = vadd.f32 %v5919, %v6257
      %v6302 = vadd.f32 %v5920, %v6262
      %v6303 = vadd.f32 %v5921, %v6265
      %v6304 = vadd.f32 %v5922, %v6270
      %v6305 = vadd.f32 %v5923, %v6273
      %v6306 = vadd.f32 %v5924, %v6278
      %v6307 = vadd.f32 %v5925, %v6281
      %v6308 = vld [vmem:[#allocation3 + $0x18] sm:$0xe]
      %s6309 = scalar_lea.vmem %s5, 16
      %v6310 = vld [vmem:[%s6309] sm:$0x3]
      %v6312 = vunpack.c.l.b16 %v6308
      %v6313 = vpack.c.b16 %v5979, %v6312
      %v6314 = vrot.slane %v6313, 1
      %v6315 = vrot.slane %v6004, 1
      %v6316 = vsel %vm1152, %v6314, %v6315
      %v6317 = vrot.slane %v6005, 1
      %v6318 = vsel %vm1152, %v6315, %v6317
      %v6319 = vrot.slane %v6006, 1
      %v6320 = vsel %vm1152, %v6317, %v6319
      %v6321 = vrot.slane %v6007, 1
      %v6322 = vsel %vm1152, %v6319, %v6321
      %v6323 = vrot.slane %v6008, 1
      %v6324 = vsel %vm1152, %v6321, %v6323
      %v6325 = vrot.slane %v6009, 1
      %v6326 = vsel %vm1152, %v6323, %v6325
      %v6327 = vrot.slane %v6010, 1
      %v6328 = vsel %vm1152, %v6325, %v6327
      %v6329 = vrot.slane %v6011, 1
      %v6330 = vsel %vm1152, %v6327, %v6329
      %v6331 = vrot.slane %v6012, 1
      %v6332 = vsel %vm1152, %v6329, %v6331
      %v6333 = vrot.slane %v6013, 1
      %v6334 = vsel %vm1152, %v6331, %v6333
      %v6335 = vrot.slane %v6014, 1
      %v6336 = vsel %vm1152, %v6333, %v6335
      %v6337 = vrot.slane %v6015, 1
      %v6338 = vsel %vm1152, %v6335, %v6337
      %v6340 = vsel %vm4216, %v6316, 0
      %v6343 = vsel %vm4216, %v6318, 0
      %v6346 = vsel %vm4216, %v6320, 0
      %v6349 = vsel %vm4216, %v6322, 0
      %v6352 = vsel %vm4216, %v6324, 0
      %v6355 = vsel %vm4216, %v6326, 0
      %v6358 = vsel %vm4216, %v6328, 0
      %v6361 = vsel %vm4216, %v6330, 0
      %v6364 = vsel %vm4216, %v6332, 0
      %v6367 = vsel %vm4216, %v6334, 0
      %v6370 = vsel %vm4216, %v6336, 0
      %v6373 = vsel %vm4216, %v6338, 0
      %v6376 = vsel %vm4253, %v6310, 0
      %6378 = vmatprep.subr.bf16.mxu0 0
      %6379 = vmatpush1.bf16.msra.mxu0 %v6376
      %6380 = vmatprep.subr.bf16.mxu0 0
      %6381 = vmatpush1.bf16.msra.mxu0 0
      %6382 = vmatprep.subr.bf16.mxu0 0
      %6383 = vmatpush1.bf16.msra.mxu0 0
      %6384 = vmatprep.subr.bf16.mxu0 0
      %6385 = vmatpush1.bf16.msra.mxu0 0
      %6386 = vmatprep.subr.bf16.mxu0 0
      %6387 = vmatpush1.bf16.msra.mxu0 0
      %6388 = vmatprep.subr.bf16.mxu0 0
      %6389 = vmatpush1.bf16.msra.mxu0 0
      %6390 = vmatprep.subr.bf16.mxu0 0
      %6391 = vmatpush1.bf16.msra.mxu0 0
      %6392 = vmatprep.subr.bf16.mxu0 0
      %6393 = vmatpush1.bf16.msra.mxu0 0
      %6394 = vmatprep.subr.bf16.mxu0 0
      %6395 = vmatpush1.bf16.msra.mxu0 0
      %6396 = vmatprep.subr.bf16.mxu0 0
      %6397 = vmatpush1.bf16.msra.mxu0 0
      %6398 = vmatprep.subr.bf16.mxu0 0
      %6399 = vmatpush1.bf16.msra.mxu0 0
      %6400 = vmatprep.subr.bf16.mxu0 0
      %6401 = vmatpush1.bf16.msra.mxu0 0
      %6402 = vmatprep.subr.bf16.mxu0 0
      %6403 = vmatpush1.bf16.msra.mxu0 0
      %6404 = vmatprep.subr.bf16.mxu0 0
      %6405 = vmatpush1.bf16.msra.mxu0 0
      %6406 = vmatprep.subr.bf16.mxu0 0
      %6407 = vmatpush1.bf16.msra.mxu0 0
      %6408 = vmatprep.subr.bf16.mxu0 0
      %6409 = vmatpush1.bf16.msra.mxu0 0
      %6410 = vmatprep.mubr.bf16.mxu0 0
      %6411 = vmatmul.mubr.bf16.gmra.mrb[0].mxu0 %v6340
      %v6412 = vpop.f32.mrb[0].mxu0
      %v6413 = vadd.f32 0.0, %v6412
      %v6414 = vpop.f32.mrb[0].mxu0
      %v6415 = vpop.f32.mrb[0].mxu0
      %v6416 = vadd.f32 0.0, %v6415
      %v6417 = vpop.f32.mrb[0].mxu0
      %6418 = vmatprep.mubr.bf16.mxu0 0
      %6419 = vmatmul.mubr.bf16.gmra.mrb[0].mxu0 %v6343
      %v6420 = vpop.f32.mrb[0].mxu0
      %v6421 = vadd.f32 0.0, %v6420
      %v6422 = vpop.f32.mrb[0].mxu0
      %v6423 = vpop.f32.mrb[0].mxu0
      %v6424 = vadd.f32 0.0, %v6423
      %v6425 = vpop.f32.mrb[0].mxu0
      %6426 = vmatprep.mubr.bf16.mxu0 0
      %6427 = vmatmul.mubr.bf16.gmra.mrb[0].mxu0 %v6346
      %v6428 = vpop.f32.mrb[0].mxu0
      %v6429 = vadd.f32 0.0, %v6428
      %v6430 = vpop.f32.mrb[0].mxu0
      %v6431 = vpop.f32.mrb[0].mxu0
      %v6432 = vadd.f32 0.0, %v6431
      %v6433 = vpop.f32.mrb[0].mxu0
      %6434 = vmatprep.mubr.bf16.mxu0 0
      %6435 = vmatmul.mubr.bf16.gmra.mrb[0].mxu0 %v6349
      %v6436 = vpop.f32.mrb[0].mxu0
      %v6437 = vadd.f32 0.0, %v6436
      %v6438 = vpop.f32.mrb[0].mxu0
      %v6439 = vpop.f32.mrb[0].mxu0
      %v6440 = vadd.f32 0.0, %v6439
      %v6441 = vpop.f32.mrb[0].mxu0
      %6442 = vmatprep.mubr.bf16.mxu0 0
      %6443 = vmatmul.mubr.bf16.gmra.mrb[0].mxu0 %v6352
      %v6444 = vpop.f32.mrb[0].mxu0
      %v6445 = vadd.f32 0.0, %v6444
      %v6446 = vpop.f32.mrb[0].mxu0
      %v6447 = vpop.f32.mrb[0].mxu0
      %v6448 = vadd.f32 0.0, %v6447
      %v6449 = vpop.f32.mrb[0].mxu0
      %6450 = vmatprep.mubr.bf16.mxu0 0
      %6451 = vmatmul.mubr.bf16.gmra.mrb[0].mxu0 %v6355
      %v6452 = vpop.f32.mrb[0].mxu0
      %v6453 = vadd.f32 0.0, %v6452
      %v6454 = vpop.f32.mrb[0].mxu0
      %v6455 = vpop.f32.mrb[0].mxu0
      %v6456 = vadd.f32 0.0, %v6455
      %v6457 = vpop.f32.mrb[0].mxu0
      %6458 = vmatprep.mubr.bf16.mxu0 0
      %6459 = vmatmul.mubr.bf16.gmra.mrb[0].mxu0 %v6358
      %v6460 = vpop.f32.mrb[0].mxu0
      %v6461 = vadd.f32 0.0, %v6460
      %v6462 = vpop.f32.mrb[0].mxu0
      %v6463 = vpop.f32.mrb[0].mxu0
      %v6464 = vadd.f32 0.0, %v6463
      %v6465 = vpop.f32.mrb[0].mxu0
      %6466 = vmatprep.mubr.bf16.mxu0 0
      %6467 = vmatmul.mubr.bf16.gmra.mrb[0].mxu0 %v6361
      %v6468 = vpop.f32.mrb[0].mxu0
      %v6469 = vadd.f32 0.0, %v6468
      %v6470 = vpop.f32.mrb[0].mxu0
      %v6471 = vpop.f32.mrb[0].mxu0
      %v6472 = vadd.f32 0.0, %v6471
      %v6473 = vpop.f32.mrb[0].mxu0
      %6474 = vmatprep.mubr.bf16.mxu0 0
      %6475 = vmatmul.mubr.bf16.gmra.mrb[0].mxu0 %v6364
      %v6476 = vpop.f32.mrb[0].mxu0
      %v6477 = vadd.f32 0.0, %v6476
      %v6478 = vpop.f32.mrb[0].mxu0
      %v6479 = vpop.f32.mrb[0].mxu0
      %v6480 = vadd.f32 0.0, %v6479
      %v6481 = vpop.f32.mrb[0].mxu0
      %6482 = vmatprep.mubr.bf16.mxu0 0
      %6483 = vmatmul.mubr.bf16.gmra.mrb[0].mxu0 %v6367
      %v6484 = vpop.f32.mrb[0].mxu0
      %v6485 = vadd.f32 0.0, %v6484
      %v6486 = vpop.f32.mrb[0].mxu0
      %v6487 = vpop.f32.mrb[0].mxu0
      %v6488 = vadd.f32 0.0, %v6487
      %v6489 = vpop.f32.mrb[0].mxu0
      %6490 = vmatprep.mubr.bf16.mxu0 0
      %6491 = vmatmul.mubr.bf16.gmra.mrb[0].mxu0 %v6370
      %v6492 = vpop.f32.mrb[0].mxu0
      %v6493 = vadd.f32 0.0, %v6492
      %v6494 = vpop.f32.mrb[0].mxu0
      %v6495 = vpop.f32.mrb[0].mxu0
      %v6496 = vadd.f32 0.0, %v6495
      %v6497 = vpop.f32.mrb[0].mxu0
      %6498 = vmatprep.mubr.bf16.mxu0 0
      %6499 = vmatmul.mubr.bf16.gmra.mrb[0].mxu0 %v6373
      %v6500 = vpop.f32.mrb[0].mxu0
      %v6501 = vadd.f32 0.0, %v6500
      %v6502 = vpop.f32.mrb[0].mxu0
      %v6503 = vpop.f32.mrb[0].mxu0
      %v6504 = vadd.f32 0.0, %v6503
      %v6505 = vpop.f32.mrb[0].mxu0
      %6506 = vdwg.mxu0
      %v6507 = vadd.f32 %v6284, %v6413
      %v6508 = vadd.f32 %v6285, %v6416
      %v6509 = vadd.f32 %v6286, %v6421
      %v6510 = vadd.f32 %v6287, %v6424
      %v6511 = vadd.f32 %v6288, %v6429
      %v6512 = vadd.f32 %v6289, %v6432
      %v6513 = vadd.f32 %v6290, %v6437
      %v6514 = vadd.f32 %v6291, %v6440
      %v6515 = vadd.f32 %v6292, %v6445
      %v6516 = vadd.f32 %v6293, %v6448
      %v6517 = vadd.f32 %v6294, %v6453
      %v6518 = vadd.f32 %v6295, %v6456
      %v6519 = vadd.f32 %v6296, %v6461
      %v6520 = vadd.f32 %v6297, %v6464
      %v6521 = vadd.f32 %v6298, %v6469
      %v6522 = vadd.f32 %v6299, %v6472
      %v6523 = vadd.f32 %v6300, %v6477
      %v6524 = vadd.f32 %v6301, %v6480
      %v6525 = vadd.f32 %v6302, %v6485
      %v6526 = vadd.f32 %v6303, %v6488
      %v6527 = vadd.f32 %v6304, %v6493
      %v6528 = vadd.f32 %v6305, %v6496
      %v6529 = vadd.f32 %v6306, %v6501
      %v6530 = vadd.f32 %v6307, %v6504
      %v6531 = vld [vmem:[%s6] sm:$0x1]
      %v6533 = vlaneseq
      %v6534 = vshrl.u32 %v6533, 7
      %v6535 = vsub.s32 0, %v6534
      %v6536 = vrot.slane %v6531, %v6535
      %v6538 = vmul.f32 %v6507, %v6536
      %v6539 = vmul.f32 %v6508, %v6536
      %v6540 = vmul.f32 %v6509, %v6536
      %v6541 = vmul.f32 %v6510, %v6536
      %v6542 = vmul.f32 %v6511, %v6536
      %v6543 = vmul.f32 %v6512, %v6536
      %v6544 = vmul.f32 %v6513, %v6536
      %v6545 = vmul.f32 %v6514, %v6536
      %v6546 = vmul.f32 %v6515, %v6536
      %v6547 = vmul.f32 %v6516, %v6536
      %v6548 = vmul.f32 %v6517, %v6536
      %v6549 = vmul.f32 %v6518, %v6536
      %v6550 = vmul.f32 %v6519, %v6536
      %v6551 = vmul.f32 %v6520, %v6536
      %v6552 = vmul.f32 %v6521, %v6536
      %v6553 = vmul.f32 %v6522, %v6536
      %v6554 = vmul.f32 %v6523, %v6536
      %v6555 = vmul.f32 %v6524, %v6536
      %v6556 = vmul.f32 %v6525, %v6536
      %v6557 = vmul.f32 %v6526, %v6536
      %v6558 = vmul.f32 %v6527, %v6536
      %v6559 = vmul.f32 %v6528, %v6536
      %v6560 = vmul.f32 %v6529, %v6536
      %v6561 = vmul.f32 %v6530, %v6536
      %v6562 = vld [vmem:[%s7] sm:$0x1]
      %v6564 = vlaneseq
      %v6565 = vshrl.u32 %v6564, 7
      %v6566 = vsub.s32 0, %v6565
      %v6567 = vrot.slane %v6562, %v6566
      %v6569 = vadd.f32 %v6538, %v6567
      %v6570 = vadd.f32 %v6539, %v6567
      %v6571 = vadd.f32 %v6540, %v6567
      %v6572 = vadd.f32 %v6541, %v6567
      %v6573 = vadd.f32 %v6542, %v6567
      %v6574 = vadd.f32 %v6543, %v6567
      %v6575 = vadd.f32 %v6544, %v6567
      %v6576 = vadd.f32 %v6545, %v6567
      %v6577 = vadd.f32 %v6546, %v6567
      %v6578 = vadd.f32 %v6547, %v6567
      %v6579 = vadd.f32 %v6548, %v6567
      %v6580 = vadd.f32 %v6549, %v6567
      %v6581 = vadd.f32 %v6550, %v6567
      %v6582 = vadd.f32 %v6551, %v6567
      %v6583 = vadd.f32 %v6552, %v6567
      %v6584 = vadd.f32 %v6553, %v6567
      %v6585 = vadd.f32 %v6554, %v6567
      %v6586 = vadd.f32 %v6555, %v6567
      %v6587 = vadd.f32 %v6556, %v6567
      %v6588 = vadd.f32 %v6557, %v6567
      %v6589 = vadd.f32 %v6558, %v6567
      %v6590 = vadd.f32 %v6559, %v6567
      %v6591 = vadd.f32 %v6560, %v6567
      %v6592 = vadd.f32 %v6561, %v6567
      %v6593 = vmax.f32 %v6569, 0.0
      %v6594 = vmax.f32 %v6570, 0.0
      %v6595 = vmax.f32 %v6571, 0.0
      %v6596 = vmax.f32 %v6572, 0.0
      %v6597 = vmax.f32 %v6573, 0.0
      %v6598 = vmax.f32 %v6574, 0.0
      %v6599 = vmax.f32 %v6575, 0.0
      %v6600 = vmax.f32 %v6576, 0.0
      %v6601 = vmax.f32 %v6577, 0.0
      %v6602 = vmax.f32 %v6578, 0.0
      %v6603 = vmax.f32 %v6579, 0.0
      %v6604 = vmax.f32 %v6580, 0.0
      %v6605 = vmax.f32 %v6581, 0.0
      %v6606 = vmax.f32 %v6582, 0.0
      %v6607 = vmax.f32 %v6583, 0.0
      %v6608 = vmax.f32 %v6584, 0.0
      %v6609 = vmax.f32 %v6585, 0.0
      %v6610 = vmax.f32 %v6586, 0.0
      %v6611 = vmax.f32 %v6587, 0.0
      %v6612 = vmax.f32 %v6588, 0.0
      %v6613 = vmax.f32 %v6589, 0.0
      %v6614 = vmax.f32 %v6590, 0.0
      %v6615 = vmax.f32 %v6591, 0.0
      %v6616 = vmax.f32 %v6592, 0.0
      %v6617 = vpack.c.bf16 %v6594, %v6593
      %v6618 = vpack.c.bf16 %v6596, %v6595
      %v6619 = vpack.c.bf16 %v6598, %v6597
      %v6620 = vpack.c.bf16 %v6600, %v6599
      %v6621 = vpack.c.bf16 %v6602, %v6601
      %v6622 = vpack.c.bf16 %v6604, %v6603
      %v6623 = vpack.c.bf16 %v6606, %v6605
      %v6624 = vpack.c.bf16 %v6608, %v6607
      %v6625 = vpack.c.bf16 %v6610, %v6609
      %v6626 = vpack.c.bf16 %v6612, %v6611
      %v6627 = vpack.c.bf16 %v6614, %v6613
      %v6628 = vpack.c.bf16 %v6616, %v6615
      %v6641 = vunpack.c.l.b16 %v6617
      %v6642 = vunpack.c.h.b16 %v6617
      %v6643 = vunpack.c.l.b16 %v6618
      %v6644 = vunpack.c.h.b16 %v6618
      %v6645 = vunpack.c.l.b16 %v6619
      %v6646 = vunpack.c.h.b16 %v6619
      %v6647 = vunpack.c.l.b16 %v6620
      %v6648 = vunpack.c.h.b16 %v6620
      %v6649 = vunpack.c.l.b16 %v6621
      %v6650 = vunpack.c.h.b16 %v6621
      %v6651 = vunpack.c.l.b16 %v6622
      %v6652 = vunpack.c.h.b16 %v6622
      %v6653 = vunpack.c.l.b16 %v6623
      %v6654 = vunpack.c.h.b16 %v6623
      %v6655 = vunpack.c.l.b16 %v6624
      %v6656 = vunpack.c.h.b16 %v6624
      %v6657 = vunpack.c.l.b16 %v6625
      %v6658 = vunpack.c.h.b16 %v6625
      %v6659 = vunpack.c.l.b16 %v6626
      %v6660 = vunpack.c.h.b16 %v6626
      %v6661 = vunpack.c.l.b16 %v6627
      %v6662 = vunpack.c.h.b16 %v6627
      %v6663 = vunpack.c.l.b16 %v6628
      %v6664 = vunpack.c.h.b16 %v6628
      %v6665 = vpack.c.b16 %v6641, %v6641
      %v6666 = vpack.c.b16 %v6642, %v6642
      %v6667 = vpack.c.b16 %v6643, %v6643
      %v6668 = vpack.c.b16 %v6644, %v6644
      %v6669 = vpack.c.b16 %v6645, %v6645
      %v6670 = vpack.c.b16 %v6646, %v6646
      %v6671 = vpack.c.b16 %v6647, %v6647
      %v6672 = vpack.c.b16 %v6648, %v6648
      %v6673 = vpack.c.b16 %v6649, %v6649
      %v6674 = vpack.c.b16 %v6650, %v6650
      %v6675 = vpack.c.b16 %v6651, %v6651
      %v6676 = vpack.c.b16 %v6652, %v6652
      %v6677 = vpack.c.b16 %v6653, %v6653
      %v6678 = vpack.c.b16 %v6654, %v6654
      %v6679 = vpack.c.b16 %v6655, %v6655
      %v6680 = vpack.c.b16 %v6656, %v6656
      %v6681 = vpack.c.b16 %v6657, %v6657
      %v6682 = vpack.c.b16 %v6658, %v6658
      %v6683 = vpack.c.b16 %v6659, %v6659
      %v6684 = vpack.c.b16 %v6660, %v6660
      %v6685 = vpack.c.b16 %v6661, %v6661
      %v6686 = vpack.c.b16 %v6662, %v6662
      %v6687 = vpack.c.b16 %v6663, %v6663
      %v6688 = vpack.c.b16 %v6664, %v6664
      %6713 = vst.msk [vmem:[%s444] sm:$0xf] %vm470, %v6665
      %6714 = vst.msk [vmem:[%s444 + $0x4] sm:$0xf] %vm470, %v6666
      %6715 = vst.msk [vmem:[%s444 + $0x8] sm:$0xf] %vm470, %v6667
      %6716 = vst.msk [vmem:[%s444 + $0xc] sm:$0xf] %vm470, %v6668
      %6717 = vst.msk [vmem:[%s444 + $0x10] sm:$0xf] %vm470, %v6669
      %6718 = vst.msk [vmem:[%s444 + $0x14] sm:$0xf] %vm470, %v6670
      %6719 = vst.msk [vmem:[%s444 + $0x18] sm:$0xf] %vm470, %v6671
      %6720 = vst.msk [vmem:[%s444 + $0x1c] sm:$0xf] %vm470, %v6672
      %6721 = vst.msk [vmem:[%s444 + $0x20] sm:$0xf] %vm470, %v6673
      %6722 = vst.msk [vmem:[%s444 + $0x24] sm:$0xf] %vm470, %v6674
      %6723 = vst.msk [vmem:[%s444 + $0x28] sm:$0xf] %vm470, %v6675
      %6724 = vst.msk [vmem:[%s444 + $0x2c] sm:$0xf] %vm470, %v6676
      %6725 = vst.msk [vmem:[%s444 + $0x30] sm:$0xf] %vm470, %v6677
      %6726 = vst.msk [vmem:[%s444 + $0x34] sm:$0xf] %vm470, %v6678
      %6727 = vst.msk [vmem:[%s444 + $0x38] sm:$0xf] %vm470, %v6679
      %6728 = vst.msk [vmem:[%s444 + $0x3c] sm:$0xf] %vm470, %v6680
      %6729 = vst.msk [vmem:[%s444 + $0x40] sm:$0xf] %vm470, %v6681
      %6730 = vst.msk [vmem:[%s444 + $0x44] sm:$0xf] %vm470, %v6682
      %6731 = vst.msk [vmem:[%s444 + $0x48] sm:$0xf] %vm470, %v6683
      %6732 = vst.msk [vmem:[%s444 + $0x4c] sm:$0xf] %vm470, %v6684
      %6733 = vst.msk [vmem:[%s444 + $0x50] sm:$0xf] %vm470, %v6685
      %6734 = vst.msk [vmem:[%s444 + $0x54] sm:$0xf] %vm470, %v6686
      %6735 = vst.msk [vmem:[%s444 + $0x58] sm:$0xf] %vm470, %v6687
      %6736 = vst.msk [vmem:[%s444 + $0x5c] sm:$0xf] %vm470, %v6688
      %p6737 = scmp.lt.s32.totalorder %s24, 1
      %s6738 = scalar_select %p6737, %s24, 1
      %p6739 = scmp.lt.s32.totalorder %s25, 1
      %s6740 = scalar_select %p6739, %s25, 1
      %s6741 = smul.addr %s6740, 24
      %s6742 = smul.addr %s6738, 48
      %s6743 = sadd.s32 %s6741, %s6742
      %s6744 = smul.addr %s6743, 4
      %s6745 = scalar_lea.vmem %s9, %s6744
      // Predicated region
      $region57: #{tpu_custom_call.1} parent=55 // pred_check
        %p6746 = pneg %p260
      $region58: #{tpu_custom_call.1} parent=55 // pred_check_branch
        %6748 = sbr.rel (%p6746) target = $region60
      $region59: #{tpu_custom_call.1} parent=55 // pred_region
        _
      $region60: #{tpu_custom_call.1} parent=55 // pred_fallthru
        _
    $region56: #{tpu_custom_call.1} parent=5 // pred_fallthru
      _
    %p6749 = scmp.le.s32.totalorder 2, %s15
    // Predicated region
    $region61: #{tpu_custom_call.1} parent=5 // pred_check
      %p6750 = pneg %p6749
    $region62: #{tpu_custom_call.1} parent=5 // pred_check_branch
      %6752 = sbr.rel (%p6750) target = $region64
    $region63: #{tpu_custom_call.1} parent=5 // pred_region
      %s6753 = ssub.s32 %s15, 2
      // Predicated region
      $region65: #{tpu_custom_call.1} parent=63 // pred_check
        %p6754 = pneg %p266
      $region66: #{tpu_custom_call.1} parent=63 // pred_check_branch
        %6756 = sbr.rel (%p6754) target = $region68
      $region67: #{tpu_custom_call.1} parent=63 // pred_region
        %p6757 = scmp.lt.s32.totalorder %s26, 1
        %s6758 = scalar_select %p6757, %s26, 1
        %p6759 = scmp.lt.s32.totalorder %s27, 1
        %s6760 = scalar_select %p6759, %s27, 1
        %s6761 = smul.addr %s6760, 24
        %s6762 = smul.addr %s6758, 48
        %s6763 = sadd.s32 %s6761, %s6762
        %s6764 = smul.addr %s6763, 4
        %s6765 = scalar_lea.vmem %s9, %s6764
      $region68: #{tpu_custom_call.1} parent=63 // pred_fallthru
        _
    $region64: #{tpu_custom_call.1} parent=5 // pred_fallthru
      _
  $region6: #{tpu_custom_call.1} parent=0 // loop_footer
    %s19 = sadd.s32 1, %s15
  $region7: #{tpu_custom_call.1} parent=0 // loop_footer_branch
    %14 = sbr.rel target = $region3
  $region8: #{tpu_custom_call.1} parent=0 // loop_exit
    _

</llo_original>
